<compile_context>
chip_gen: v7x
topology: tpu7x:2x2x1
jax: 0.10.0
libtpu: 0.0.40
codegen_flags: <defaults>
</compile_context>

<pallas_src>
import functools
import math

import jax
import jax.numpy as jnp
from jax import lax
from jax.experimental import pallas as pl
from jax.experimental.pallas import tpu as pltpu

BN_EPS = 1e-5


# ------------------------------ Pallas kernel ------------------------------- #

def bottleneck_kernel(x_ref, w1_ref, sh1_ref, w2_ref, sh2_ref, w3_ref, sh3_ref,
                      o_ref, pad_ref, *, B, H, W, DC, interior_off, last_relu):
    """Fused ResNeXt bottleneck for B images (one grid step).

    x_ref   : (B*H*W, 128)  f32   channels-last rows, channels zero-padded to 128
    w1_ref  : (128, DC)     bf16  conv1 1x1 weight, bn1 scale folded in
    sh1_ref : (1, DC)       f32   bn1 shift
    w2_ref  : (9*DC, DC)    bf16  block-diag grouped-conv2 im2col weight (bn2 folded)
    sh2_ref : (1, DC)       f32   bn2 shift
    w3_ref  : (DC, 128)     bf16  conv3 1x1 weight (cols padded to 128, bn3 folded)
    sh3_ref : (1, 128)      f32   bn3 shift (padded)
    o_ref   : (B*H*W, 128)  f32   output (lane-dense; sliced to cout in wrapper)
    pad_ref : (B, P, DC)    bf16  per-image ROW-padded conv1 output scratch
    """
    HW = H * W
    M = B * HW

    x2d = x_ref[...]                                           # (M, 128) f32

    # ---- conv1 (1x1) + bn1 + relu ----
    out1 = jnp.dot(x2d.astype(jnp.bfloat16), w1_ref[...],
                   preferred_element_type=jnp.float32)
    out1 = jnp.maximum(out1 + sh1_ref[...], 0.0)               # (M, DC) f32

    # ---- lay conv1 output into the row-padded per-image bf16 scratch ----
    # scratch row (interior_off + h*W + w) holds image pixel (h, w).  Only the
    # halo outside the interior is zeroed each step (interior is overwritten).
    # NOTE: the grid axis is "parallel" -> scratch is per-core, so the halo must
    # be (re)zeroed every step, not only at program_id == 0.
    tail = pad_ref.shape[1] - interior_off - HW
    pad_ref[:, 0:interior_off, :] = jnp.zeros((B, interior_off, DC), jnp.bfloat16)
    pad_ref[:, interior_off + HW:interior_off + HW + tail, :] = (
        jnp.zeros((B, tail, DC), jnp.bfloat16))
    pad_ref[:, interior_off:interior_off + HW, :] = (
        out1.astype(jnp.bfloat16).reshape(B, HW, DC))          # single aligned store

    # ---- conv2 (3x3, grouped) as ONE matmul over an (M, 9*DC) im2col ----
    # Tap (kh, kw) of output pixel m=(h, w) is scratch row m + start with
    # start = interior_off + (kh-1)*W + (kw-1).  Row padding supplies the
    # h-direction zeros; the w-direction halo (row-boundary bleed) is masked.
    w_pos = lax.broadcasted_iota(jnp.int32, (M, 1), 0) % W
    left_ok = w_pos > 0            # tap valid when kw == 0
    right_ok = w_pos < W - 1       # tap valid when kw == 2

    taps = []
    for kh in range(3):
        for kw in range(3):
            start = interior_off + (kh - 1) * W + (kw - 1)
            tap = pad_ref[:, start:start + HW, :].reshape(M, DC)   # bf16
            if kw == 0:
                tap = jnp.where(left_ok, tap, 0)
            elif kw == 2:
                tap = jnp.where(right_ok, tap, 0)
            taps.append(tap)
    im2col = jnp.concatenate(taps, axis=-1)                    # (M, 9*DC) bf16

    out2 = jnp.dot(im2col, w2_ref[...], preferred_element_type=jnp.float32)
    out2 = jnp.maximum(out2 + sh2_ref[...], 0.0)               # (M, DC) f32

    # ---- conv3 (1x1) + bn3 + identity residual (+ relu) ----
    out3 = jnp.dot(out2.astype(jnp.bfloat16), w3_ref[...],
                   preferred_element_type=jnp.float32)
    out3 = out3 + sh3_ref[...] + x2d                           # residual in f32
    if last_relu:
        out3 = jnp.maximum(out3, 0.0)
    o_ref[...] = out3                                          # lane-dense store


# ------------------------------ Pallas wrapper ------------------------------- #

def resnext_bottleneck_forward(x_nchw, params, last_relu=True,
                               images_per_step=None):
    """Pallas implementation of ResNeXtBottleneck.forward for the default config
    (stride=1, downsample=None, first_downsample=None)."""
    n, cin, h, w = x_nchw.shape
    dc = params["D"] * params["G"]
    cout = params["cout"]
    cp = params["w1p"].shape[0]            # padded channel count (128)
    hw = h * w
    # TODO(synk): downsample / first_downsample / stride>1 branches (None / 1 in
    # the default config) are not implemented; identity residual needs cin==cout.
    assert cin == cout, "identity residual requires inplanes == planes * 4"
    assert w % 8 == 0 and hw % 16 == 0, "spatial tile alignment"

    # Images per grid step: whole batch split into (at least) 2 parallel steps so
    # both v7x TensorCores get work; amortizes the ~0.35us per-step overhead.
    if images_per_step is None:
        images_per_step = max(1, n // 2)
    while n % images_per_step:
        images_per_step -= 1
    b_img = images_per_step
    steps = n // b_img

    # NCHW -> channels-last rows, channels zero-padded to lane-dense 128.
    x_rows = jnp.transpose(x_nchw, (0, 2, 3, 1)).reshape(n * hw, cin)
    x_rows = jnp.pad(x_rows, ((0, 0), (0, cp - cin)))

    interior_off = ((w // 16) + 1) * 16          # multiple of 16, strictly > w
    pad_rows = interior_off + hw + w + 16        # bottom halo + slack for reads

    kernel = functools.partial(
        bottleneck_kernel, B=b_img, H=h, W=w, DC=dc,
        interior_off=interior_off, last_relu=last_relu)

    out = pl.pallas_call(
        kernel,
        out_shape=jax.ShapeDtypeStruct((n * hw, cp), jnp.float32),
        grid=(steps,),
        in_specs=[
            pl.BlockSpec((b_img * hw, cp), lambda i: (i, 0)),   # x rows (padded)
            pl.BlockSpec((cp, dc), lambda i: (0, 0)),           # w1 (bf16)
            pl.BlockSpec((1, dc), lambda i: (0, 0)),            # shift1
            pl.BlockSpec((9 * dc, dc), lambda i: (0, 0)),       # w2 block-diag (bf16)
            pl.BlockSpec((1, dc), lambda i: (0, 0)),            # shift2
            pl.BlockSpec((dc, cp), lambda i: (0, 0)),           # w3 (bf16, padded)
            pl.BlockSpec((1, cp), lambda i: (0, 0)),            # shift3 (padded)
        ],
        out_specs=pl.BlockSpec((b_img * hw, cp), lambda i: (i, 0)),
        scratch_shapes=[pltpu.VMEM((b_img, pad_rows, dc), jnp.bfloat16)],
        compiler_params=pltpu.CompilerParams(
            dimension_semantics=("parallel",)),                 # megacore over steps
    )(x_rows, params["w1p"], params["shift1"], params["w2col"],
      params["shift2"], params["w3p"], params["shift3"])

    out = out[:, :cout].reshape(n, h, w, cout)
    return jnp.transpose(out, (0, 3, 1, 2))                     # back to NCHW


# --------------------------- parameter construction ------------------------- #

def init_params(key, inplanes, planes, cardinality, base_width, lane_pad=128):
    D = int(math.floor(planes * (base_width / 64.0)))
    G = cardinality
    dc = D * G
    cout = planes * 4
    cp = lane_pad
    assert inplanes <= cp and cout <= cp
    keys = jax.random.split(key, 6)

    def bn_params(k, c):
        k1, k2, k3, k4 = jax.random.split(k, 4)
        gamma = jax.random.uniform(k1, (c,), minval=0.5, maxval=1.5, dtype=jnp.float32)
        beta = 0.1 * jax.random.normal(k2, (c,), dtype=jnp.float32)
        mean = 0.1 * jax.random.normal(k3, (c,), dtype=jnp.float32)
        var = jax.random.uniform(k4, (c,), minval=0.5, maxval=1.5, dtype=jnp.float32)
        scale = gamma / jnp.sqrt(var + BN_EPS)
        shift = beta - mean * scale
        return (gamma, beta, mean, var), scale, shift

    # PyTorch-shaped weights (OIHW), kept in f32 for the reference path.
    w1 = 0.1 * jax.random.normal(keys[0], (dc, inplanes, 1, 1), dtype=jnp.float32)
    w2 = 0.1 * jax.random.normal(keys[1], (dc, D, 3, 3), dtype=jnp.float32)   # groups=G
    w3 = 0.1 * jax.random.normal(keys[2], (cout, dc, 1, 1), dtype=jnp.float32)
    bn1_raw, scale1, shift1 = bn_params(keys[3], dc)
    bn2_raw, scale2, shift2 = bn_params(keys[4], dc)
    bn3_raw, scale3, shift3 = bn_params(keys[5], cout)

    # conv1: (CP, DC), zero rows beyond inplanes; bn1 scale folded into columns.
    w1m = w1.reshape(dc, inplanes).T * scale1[None, :]
    w1p = jnp.zeros((cp, dc), jnp.float32).at[:inplanes].set(w1m).astype(jnp.bfloat16)

    # conv2: block-diagonal (9*DC, DC) im2col weight (rows = tap-major, then
    # channel); bn2 scale folded.  PyTorch weight is (G*D, D, 3, 3) with output
    # channel o = g*D + dout and in-group input index din.
    w2r = w2.reshape(G, D, D, 3, 3)                              # (g, dout, din, kh, kw)
    w2t = jnp.transpose(w2r, (3, 4, 0, 2, 1)).reshape(9, G, D, D)  # (t, g, din, dout)
    w2bd = jnp.einsum('tgij,gh->tgihj', w2t, jnp.eye(G, dtype=jnp.float32))
    w2col = (w2bd.reshape(9 * dc, dc) * scale2[None, :]).astype(jnp.bfloat16)

    # conv3: (DC, CP), zero cols beyond cout; bn3 scale folded into columns.
    w3m = w3.reshape(cout, dc).T * scale3[None, :]
    w3p = jnp.zeros((dc, cp), jnp.float32).at[:, :cout].set(w3m).astype(jnp.bfloat16)
    shift3p = jnp.zeros((1, cp), jnp.float32).at[0, :cout].set(shift3)

    return dict(
        w1=w1, w2=w2, w3=w3, bn1=bn1_raw, bn2=bn2_raw, bn3=bn3_raw,
        cardinality=G, D=D, G=G, cin=inplanes, cout=cout,
        w1p=w1p, w2col=w2col, w3p=w3p,
        shift1=shift1.reshape(1, dc),
        shift2=shift2.reshape(1, dc),
        shift3=shift3p,
    )


# ------------------------------ pure-JAX reference -------------------------- #

def _conv2d_nchw(x, w, stride=1, padding=0, groups=1):
    return jax.lax.conv_general_dilated(
        x, w, window_strides=(stride, stride),
        padding=[(padding, padding), (padding, padding)],
        dimension_numbers=("NCHW", "OIHW", "NCHW"),
        feature_group_count=groups)


def ref_forward(x, params, last_relu=True):
    def bn(z, raw):
        gamma, beta, mean, var = raw
        inv = gamma / jnp.sqrt(var + BN_EPS)
        return (z - mean[None, :, None, None]) * inv[None, :, None, None] \
            + beta[None, :, None, None]

    residual = x
    out = _conv2d_nchw(x, params["w1"])
    out = jax.nn.relu(bn(out, params["bn1"]))
    out = _conv2d_nchw(out, params["w2"], stride=1, padding=1,
                       groups=params["cardinality"])
    out = jax.nn.relu(bn(out, params["bn2"]))
    out = _conv2d_nchw(out, params["w3"])
    out = bn(out, params["bn3"])
    out = out + residual
    if last_relu:
        out = jax.nn.relu(out)
    return out


# ------------------------------------ main ---------------------------------- #

if __name__ == "__main__":
    key = jax.random.PRNGKey(0)
    kx, kp = jax.random.split(key)

    # Default module config: inplanes=16, planes=4, cardinality=2, base_width=64
    #   -> D=4, D*C=8, out_channels = planes*4 = 16 == inplanes,
    #   stride=1, downsample=None, first_downsample=None, last_relu=True
    N, inplanes, H, W = 8, 16, 8, 8
    planes, cardinality, base_width = 4, 2, 64

    x = jax.random.normal(kx, (N, inplanes, H, W), dtype=jnp.float32)
    params = init_params(kp, inplanes, planes, cardinality, base_width)

    out = resnext_bottleneck_forward(x, params, last_relu=True)  # grid=(2,) parallel
    out = jax.block_until_ready(out)

    ref = ref_forward(x, params, last_relu=True)
    assert out.shape == ref.shape == (N, planes * 4, H, W)
    # bf16 MXU inputs (f32 accumulation / f32 residual) vs the f32 lax.conv reference.
    max_err = float(jnp.max(jnp.abs(out - ref)))
    assert max_err < 5e-2, f"max_err={max_err}"

    # TODO(synk): training-mode BatchNorm (batch statistics) is not supported;
    # running stats are folded into the weights/shifts (eval mode).
    print("KERNEL_OK")
</pallas_src>

<mosaic_0001>
module attributes {stable_mosaic.version = 11 : i64} {
  func.func @bottleneck_kernel(%arg0: i32, %arg1: memref<256x128xf32, #tpu.memory_space<vmem>>, %arg2: memref<128x8xbf16, #tpu.memory_space<vmem>>, %arg3: memref<1x8xf32, #tpu.memory_space<vmem>>, %arg4: memref<72x8xbf16, #tpu.memory_space<vmem>>, %arg5: memref<1x8xf32, #tpu.memory_space<vmem>>, %arg6: memref<8x128xbf16, #tpu.memory_space<vmem>>, %arg7: memref<1x128xf32, #tpu.memory_space<vmem>>, %arg8: memref<256x128xf32, #tpu.memory_space<vmem>>, %arg9: memref<4x104x8xbf16, #tpu.memory_space<vmem>>) attributes {dimension_semantics = [#tpu.dimension_semantics<parallel>], iteration_bounds = array<i64: 2>, scalar_prefetch = 0 : i64, scratch_operands = 1 : i64, tpu.core_type = #tpu.core_type<tc>, window_params = [{transform_indices = @transform_0, window_bounds = array<i64: 256, 128>}, {pipeline_mode = #tpu.pipeline_mode<synchronous>, transform_indices = @transform_1, window_bounds = array<i64: 128, 8>}, {pipeline_mode = #tpu.pipeline_mode<synchronous>, transform_indices = @transform_2, window_bounds = array<i64: 1, 8>}, {pipeline_mode = #tpu.pipeline_mode<synchronous>, transform_indices = @transform_3, window_bounds = array<i64: 72, 8>}, {pipeline_mode = #tpu.pipeline_mode<synchronous>, transform_indices = @transform_4, window_bounds = array<i64: 1, 8>}, {pipeline_mode = #tpu.pipeline_mode<synchronous>, transform_indices = @transform_5, window_bounds = array<i64: 8, 128>}, {pipeline_mode = #tpu.pipeline_mode<synchronous>, transform_indices = @transform_6, window_bounds = array<i64: 1, 128>}, {transform_indices = @transform_7, window_bounds = array<i64: 256, 128>}]} {
    %c0 = arith.constant 0 : index
    %c0_0 = arith.constant 0 : index
    %0 = vector.load %arg1[%c0, %c0_0] : memref<256x128xf32, #tpu.memory_space<vmem>>, vector<256x128xf32>
    %1 = arith.truncf %0 : vector<256x128xf32> to vector<256x128xbf16>
    %c0_1 = arith.constant 0 : index
    %c0_2 = arith.constant 0 : index
    %2 = vector.load %arg2[%c0_1, %c0_2] : memref<128x8xbf16, #tpu.memory_space<vmem>>, vector<128x8xbf16>
    %cst = arith.constant dense<0.000000e+00> : vector<256x8xf32>
    %3 = tpu.matmul %1, %2, %cst {dimension_numbers = #tpu.dot_dimension_numbers<[1], [0], [0], [1], [0, 0, 1, 1], [], []>} : vector<256x128xbf16>, vector<128x8xbf16>, vector<256x8xf32> -> vector<256x8xf32>
    %c0_3 = arith.constant 0 : index
    %c0_4 = arith.constant 0 : index
    %4 = vector.load %arg3[%c0_3, %c0_4] : memref<1x8xf32, #tpu.memory_space<vmem>>, vector<1x8xf32>
    %5 = vector.broadcast %4 : vector<1x8xf32> to vector<256x8xf32>
    %6 = arith.addf %3, %5 : vector<256x8xf32>
    %cst_5 = arith.constant 0.000000e+00 : f32
    %7 = vector.broadcast %cst_5 : f32 to vector<256x8xf32>
    %8 = arith.maximumf %6, %7 : vector<256x8xf32>
    %cst_6 = arith.constant 0.000000e+00 : bf16
    %9 = vector.broadcast %cst_6 : bf16 to vector<4x16x8xbf16>
    %c0_7 = arith.constant 0 : index
    %c0_8 = arith.constant 0 : index
    %c0_9 = arith.constant 0 : index
    %10 = vector.load %arg9[%c0_7, %c0_8, %c0_9] : memref<4x104x8xbf16, #tpu.memory_space<vmem>>, vector<4x16x8xbf16>
    tpu.vector_store %arg9[%c0_7, %c0_8, %c0_9], %9 {strides = array<i32>} : memref<4x104x8xbf16, #tpu.memory_space<vmem>>, vector<4x16x8xbf16>,
    %cst_10 = arith.constant 0.000000e+00 : bf16
    %11 = vector.broadcast %cst_10 : bf16 to vector<4x24x8xbf16>
    %c0_11 = arith.constant 0 : index
    %c80 = arith.constant 80 : index
    %c0_12 = arith.constant 0 : index
    %12 = vector.load %arg9[%c0_11, %c80, %c0_12] : memref<4x104x8xbf16, #tpu.memory_space<vmem>>, vector<4x24x8xbf16>
    tpu.vector_store %arg9[%c0_11, %c80, %c0_12], %11 {strides = array<i32>} : memref<4x104x8xbf16, #tpu.memory_space<vmem>>, vector<4x24x8xbf16>,
    %13 = arith.truncf %8 : vector<256x8xf32> to vector<256x8xbf16>
    %14 = vector.shape_cast %13 : vector<256x8xbf16> to vector<4x64x8xbf16>
    %c0_13 = arith.constant 0 : index
    %c16 = arith.constant 16 : index
    %c0_14 = arith.constant 0 : index
    %15 = vector.load %arg9[%c0_13, %c16, %c0_14] : memref<4x104x8xbf16, #tpu.memory_space<vmem>>, vector<4x64x8xbf16>
    tpu.vector_store %arg9[%c0_13, %c16, %c0_14], %14 {strides = array<i32>} : memref<4x104x8xbf16, #tpu.memory_space<vmem>>, vector<4x64x8xbf16>,
    %16 = tpu.iota {dimensions = array<i32: 0>} : vector<256x1xi32>
    %c8_i32 = arith.constant 8 : i32
    %c0_i32 = arith.constant 0 : i32
    %17 = arith.cmpi eq, %c8_i32, %c0_i32 : i32
    %c1_i32 = arith.constant 1 : i32
    %18 = arith.select %17, %c1_i32, %c8_i32 : i32
    %19 = vector.broadcast %18 : i32 to vector<256x1xi32>
    %20 = arith.remsi %16, %19 : vector<256x1xi32>
    %c0_i32_15 = arith.constant 0 : i32
    %21 = vector.broadcast %c0_i32_15 : i32 to vector<256x1xi32>
    %22 = arith.cmpi ne, %20, %21 : vector<256x1xi32>
    %c0_i32_16 = arith.constant 0 : i32
    %23 = vector.broadcast %c0_i32_16 : i32 to vector<256x1xi32>
    %24 = arith.cmpi slt, %20, %23 : vector<256x1xi32>
    %c0_i32_17 = arith.constant 0 : i32
    %25 = arith.cmpi slt, %18, %c0_i32_17 : i32
    %26 = vector.broadcast %25 : i1 to vector<256x1xi1>
    %27 = vector.broadcast %26 : vector<256x1xi1> to vector<256x1xi1>
    %28 = arith.xori %24, %27 : vector<256x1xi1>
    %29 = arith.andi %28, %22 : vector<256x1xi1>
    %30 = vector.broadcast %18 : i32 to vector<256x1xi32>
    %31 = arith.addi %20, %30 : vector<256x1xi32>
    %32 = arith.select %29, %31, %20 : vector<256x1xi1>, vector<256x1xi32>
    %c0_i32_18 = arith.constant 0 : i32
    %33 = vector.broadcast %c0_i32_18 : i32 to vector<256x1xi32>
    %34 = arith.cmpi sgt, %32, %33 : vector<256x1xi32>
    %c7_i32 = arith.constant 7 : i32
    %35 = vector.broadcast %c7_i32 : i32 to vector<256x1xi32>
    %36 = arith.cmpi slt, %32, %35 : vector<256x1xi32>
    %c0_19 = arith.constant 0 : index
    %c7 = arith.constant 7 : index
    %c0_20 = arith.constant 0 : index
    %37 = vector.load %arg9[%c0_19, %c7, %c0_20] : memref<4x104x8xbf16, #tpu.memory_space<vmem>>, vector<4x64x8xbf16>
    %38 = vector.shape_cast %37 : vector<4x64x8xbf16> to vector<256x8xbf16>
    %c0_i32_21 = arith.constant 0 : i32
    %39 = arith.sitofp %c0_i32_21 : i32 to bf16
    %40 = vector.shape_cast %34 : vector<256x1xi1> to vector<256x1xi1>
    %41 = vector.broadcast %40 : vector<256x1xi1> to vector<256x8xi1>
    %42 = vector.broadcast %39 : bf16 to vector<256x8xbf16>
    %43 = arith.select %41, %38, %42 : vector<256x8xi1>, vector<256x8xbf16>
    %c0_22 = arith.constant 0 : index
    %c8 = arith.constant 8 : index
    %c0_23 = arith.constant 0 : index
    %44 = vector.load %arg9[%c0_22, %c8, %c0_23] : memref<4x104x8xbf16, #tpu.memory_space<vmem>>, vector<4x64x8xbf16>
    %45 = vector.shape_cast %44 : vector<4x64x8xbf16> to vector<256x8xbf16>
    %c0_24 = arith.constant 0 : index
    %c9 = arith.constant 9 : index
    %c0_25 = arith.constant 0 : index
    %46 = vector.load %arg9[%c0_24, %c9, %c0_25] : memref<4x104x8xbf16, #tpu.memory_space<vmem>>, vector<4x64x8xbf16>
    %47 = vector.shape_cast %46 : vector<4x64x8xbf16> to vector<256x8xbf16>
    %c0_i32_26 = arith.constant 0 : i32
    %48 = arith.sitofp %c0_i32_26 : i32 to bf16
    %49 = vector.shape_cast %36 : vector<256x1xi1> to vector<256x1xi1>
    %50 = vector.broadcast %49 : vector<256x1xi1> to vector<256x8xi1>
    %51 = vector.broadcast %48 : bf16 to vector<256x8xbf16>
    %52 = arith.select %50, %47, %51 : vector<256x8xi1>, vector<256x8xbf16>
    %c0_27 = arith.constant 0 : index
    %c15 = arith.constant 15 : index
    %c0_28 = arith.constant 0 : index
    %53 = vector.load %arg9[%c0_27, %c15, %c0_28] : memref<4x104x8xbf16, #tpu.memory_space<vmem>>, vector<4x64x8xbf16>
    %54 = vector.shape_cast %53 : vector<4x64x8xbf16> to vector<256x8xbf16>
    %c0_i32_29 = arith.constant 0 : i32
    %55 = arith.sitofp %c0_i32_29 : i32 to bf16
    %56 = vector.shape_cast %34 : vector<256x1xi1> to vector<256x1xi1>
    %57 = vector.broadcast %56 : vector<256x1xi1> to vector<256x8xi1>
    %58 = vector.broadcast %55 : bf16 to vector<256x8xbf16>
    %59 = arith.select %57, %54, %58 : vector<256x8xi1>, vector<256x8xbf16>
    %c0_30 = arith.constant 0 : index
    %c16_31 = arith.constant 16 : index
    %c0_32 = arith.constant 0 : index
    %60 = vector.load %arg9[%c0_30, %c16_31, %c0_32] : memref<4x104x8xbf16, #tpu.memory_space<vmem>>, vector<4x64x8xbf16>
    %61 = vector.shape_cast %60 : vector<4x64x8xbf16> to vector<256x8xbf16>
    %c0_33 = arith.constant 0 : index
    %c17 = arith.constant 17 : index
    %c0_34 = arith.constant 0 : index
    %62 = vector.load %arg9[%c0_33, %c17, %c0_34] : memref<4x104x8xbf16, #tpu.memory_space<vmem>>, vector<4x64x8xbf16>
    %63 = vector.shape_cast %62 : vector<4x64x8xbf16> to vector<256x8xbf16>
    %c0_i32_35 = arith.constant 0 : i32
    %64 = arith.sitofp %c0_i32_35 : i32 to bf16
    %65 = vector.shape_cast %36 : vector<256x1xi1> to vector<256x1xi1>
    %66 = vector.broadcast %65 : vector<256x1xi1> to vector<256x8xi1>
    %67 = vector.broadcast %64 : bf16 to vector<256x8xbf16>
    %68 = arith.select %66, %63, %67 : vector<256x8xi1>, vector<256x8xbf16>
    %c0_36 = arith.constant 0 : index
    %c23 = arith.constant 23 : index
    %c0_37 = arith.constant 0 : index
    %69 = vector.load %arg9[%c0_36, %c23, %c0_37] : memref<4x104x8xbf16, #tpu.memory_space<vmem>>, vector<4x64x8xbf16>
    %70 = vector.shape_cast %69 : vector<4x64x8xbf16> to vector<256x8xbf16>
    %c0_i32_38 = arith.constant 0 : i32
    %71 = arith.sitofp %c0_i32_38 : i32 to bf16
    %72 = vector.shape_cast %34 : vector<256x1xi1> to vector<256x1xi1>
    %73 = vector.broadcast %72 : vector<256x1xi1> to vector<256x8xi1>
    %74 = vector.broadcast %71 : bf16 to vector<256x8xbf16>
    %75 = arith.select %73, %70, %74 : vector<256x8xi1>, vector<256x8xbf16>
    %c0_39 = arith.constant 0 : index
    %c24 = arith.constant 24 : index
    %c0_40 = arith.constant 0 : index
    %76 = vector.load %arg9[%c0_39, %c24, %c0_40] : memref<4x104x8xbf16, #tpu.memory_space<vmem>>, vector<4x64x8xbf16>
    %77 = vector.shape_cast %76 : vector<4x64x8xbf16> to vector<256x8xbf16>
    %c0_41 = arith.constant 0 : index
    %c25 = arith.constant 25 : index
    %c0_42 = arith.constant 0 : index
    %78 = vector.load %arg9[%c0_41, %c25, %c0_42] : memref<4x104x8xbf16, #tpu.memory_space<vmem>>, vector<4x64x8xbf16>
    %79 = vector.shape_cast %78 : vector<4x64x8xbf16> to vector<256x8xbf16>
    %c0_i32_43 = arith.constant 0 : i32
    %80 = arith.sitofp %c0_i32_43 : i32 to bf16
    %81 = vector.shape_cast %36 : vector<256x1xi1> to vector<256x1xi1>
    %82 = vector.broadcast %81 : vector<256x1xi1> to vector<256x8xi1>
    %83 = vector.broadcast %80 : bf16 to vector<256x8xbf16>
    %84 = arith.select %82, %79, %83 : vector<256x8xi1>, vector<256x8xbf16>
    %85 = tpu.concatenate %43, %45, %52, %59, %61, %68, %75, %77, %84 in 1 : vector<256x8xbf16>, vector<256x8xbf16>, vector<256x8xbf16>, vector<256x8xbf16>, vector<256x8xbf16>, vector<256x8xbf16>, vector<256x8xbf16>, vector<256x8xbf16>, vector<256x8xbf16> -> vector<256x72xbf16>
    %c0_44 = arith.constant 0 : index
    %c0_45 = arith.constant 0 : index
    %86 = vector.load %arg4[%c0_44, %c0_45] : memref<72x8xbf16, #tpu.memory_space<vmem>>, vector<72x8xbf16>
    %cst_46 = arith.constant dense<0.000000e+00> : vector<256x8xf32>
    %87 = tpu.matmul %85, %86, %cst_46 {dimension_numbers = #tpu.dot_dimension_numbers<[1], [0], [0], [1], [0, 0, 1, 1], [], []>} : vector<256x72xbf16>, vector<72x8xbf16>, vector<256x8xf32> -> vector<256x8xf32>
    %c0_47 = arith.constant 0 : index
    %c0_48 = arith.constant 0 : index
    %88 = vector.load %arg5[%c0_47, %c0_48] : memref<1x8xf32, #tpu.memory_space<vmem>>, vector<1x8xf32>
    %89 = vector.broadcast %88 : vector<1x8xf32> to vector<256x8xf32>
    %90 = arith.addf %87, %89 : vector<256x8xf32>
    %cst_49 = arith.constant 0.000000e+00 : f32
    %91 = vector.broadcast %cst_49 : f32 to vector<256x8xf32>
    %92 = arith.maximumf %90, %91 : vector<256x8xf32>
    %93 = arith.truncf %92 : vector<256x8xf32> to vector<256x8xbf16>
    %c0_50 = arith.constant 0 : index
    %c0_51 = arith.constant 0 : index
    %94 = vector.load %arg6[%c0_50, %c0_51] : memref<8x128xbf16, #tpu.memory_space<vmem>>, vector<8x128xbf16>
    %cst_52 = arith.constant dense<0.000000e+00> : vector<256x128xf32>
    %95 = tpu.matmul %93, %94, %cst_52 {dimension_numbers = #tpu.dot_dimension_numbers<[1], [0], [0], [1], [0, 0, 1, 1], [], []>} : vector<256x8xbf16>, vector<8x128xbf16>, vector<256x128xf32> -> vector<256x128xf32>
    %c0_53 = arith.constant 0 : index
    %c0_54 = arith.constant 0 : index
    %96 = vector.load %arg7[%c0_53, %c0_54] : memref<1x128xf32, #tpu.memory_space<vmem>>, vector<1x128xf32>
    %97 = vector.broadcast %96 : vector<1x128xf32> to vector<256x128xf32>
    %98 = arith.addf %95, %97 : vector<256x128xf32>
    %99 = arith.addf %98, %0 : vector<256x128xf32>
    %cst_55 = arith.constant 0.000000e+00 : f32
    %100 = vector.broadcast %cst_55 : f32 to vector<256x128xf32>
    %101 = arith.maximumf %99, %100 : vector<256x128xf32>
    %c0_56 = arith.constant 0 : index
    %c0_57 = arith.constant 0 : index
    %102 = vector.load %arg8[%c0_56, %c0_57] : memref<256x128xf32, #tpu.memory_space<vmem>>, vector<256x128xf32>
    tpu.vector_store %arg8[%c0_56, %c0_57], %101 {strides = array<i32>} : memref<256x128xf32, #tpu.memory_space<vmem>>, vector<256x128xf32>,
    return
  }
  func.func @transform_0(%arg0: i32) -> (i32, i32) {
    %c0_i32 = arith.constant 0 : i32
    %c0_i32_0 = arith.constant 0 : i32
    return %arg0, %c0_i32 : i32, i32
  }
  func.func @transform_1(%arg0: i32) -> (i32, i32) {
    %c0_i32 = arith.constant 0 : i32
    %c0_i32_0 = arith.constant 0 : i32
    %c0_i32_1 = arith.constant 0 : i32
    return %c0_i32, %c0_i32_0 : i32, i32
  }
  func.func @transform_2(%arg0: i32) -> (i32, i32) {
    %c0_i32 = arith.constant 0 : i32
    %c0_i32_0 = arith.constant 0 : i32
    %c0_i32_1 = arith.constant 0 : i32
    return %c0_i32, %c0_i32_0 : i32, i32
  }
  func.func @transform_3(%arg0: i32) -> (i32, i32) {
    %c0_i32 = arith.constant 0 : i32
    %c0_i32_0 = arith.constant 0 : i32
    %c0_i32_1 = arith.constant 0 : i32
    return %c0_i32, %c0_i32_0 : i32, i32
  }
  func.func @transform_4(%arg0: i32) -> (i32, i32) {
    %c0_i32 = arith.constant 0 : i32
    %c0_i32_0 = arith.constant 0 : i32
    %c0_i32_1 = arith.constant 0 : i32
    return %c0_i32, %c0_i32_0 : i32, i32
  }
  func.func @transform_5(%arg0: i32) -> (i32, i32) {
    %c0_i32 = arith.constant 0 : i32
    %c0_i32_0 = arith.constant 0 : i32
    %c0_i32_1 = arith.constant 0 : i32
    return %c0_i32, %c0_i32_0 : i32, i32
  }
  func.func @transform_6(%arg0: i32) -> (i32, i32) {
    %c0_i32 = arith.constant 0 : i32
    %c0_i32_0 = arith.constant 0 : i32
    %c0_i32_1 = arith.constant 0 : i32
    return %c0_i32, %c0_i32_0 : i32, i32
  }
  func.func @transform_7(%arg0: i32) -> (i32, i32) {
    %c0_i32 = arith.constant 0 : i32
    %c0_i32_0 = arith.constant 0 : i32
    return %arg0, %c0_i32 : i32, i32
  }
}

</mosaic_0001>

<llo_original>
// kernel: tpu_custom_call.1
$region0: #{tpu_custom_call.1}
  #allocation0 [shape = 'u32[]', space=smem, size = 0x4, offset = 0x4, fixed_abs, tag = 'smem constant byte address 0x4 - core index']
  #allocation1 [shape = 'u32[144,128]{1,0:T(1,128)}', space=vmem, size = 0x12000, scoped, tag = 'internal scratch']
  #allocation2 [shape = 'bf16[4,104,8]{2,1,0:T(8,128)(2,1)}', space=vmem, size = 0x1a000, scoped, tag = 'scratch operand']
  %s0 = inlined_call_operand.hbm [shape: f32[512,128], index: 0, kind: input, shape index: {}]
  %s1 = inlined_call_operand.vmem [shape: bf16[128,8], index: 1, kind: input, shape index: {}]
  %s2 = inlined_call_operand.vmem [shape: f32[1,8], index: 2, kind: input, shape index: {}]
  %s3 = inlined_call_operand.vmem [shape: bf16[72,8], index: 3, kind: input, shape index: {}]
  %s4 = inlined_call_operand.vmem [shape: f32[1,8], index: 4, kind: input, shape index: {}]
  %s5 = inlined_call_operand.vmem [shape: bf16[8,128], index: 5, kind: input, shape index: {}]
  %s6 = inlined_call_operand.vmem [shape: f32[1,128], index: 6, kind: input, shape index: {}]
  %s7 = inlined_call_operand.hbm [shape: f32[512,128], index: 7, kind: output, shape index: {}]
  %s8 = sld [smem:[#allocation0]]
  $region65: #{tpu_custom_call.1} parent=0
    _
  %s10 = ssub.s32 1, %s8
  %s11 = scalar_select 0, %s10, %s8
  $region1: #{tpu_custom_call.1} parent=0
    #allocation3 [shape = 'u8[262144]{0}', space=vmem, size = 0x40000, scoped, tag = 'input window, operand 0']
    #allocation4 [shape = 's32[2]{0}', space=sflag, size = 0x8, scoped, tag = 'scoped memory for tpu_custom_call.1']
    #allocation5 [shape = 's32[2]{0}', space=sflag, size = 0x8, scoped, tag = 'scoped memory for tpu_custom_call.1']
    #allocation6 [shape = 'u8[262144]{0}', space=vmem, size = 0x40000, scoped, tag = 'output window, operand 0']
    %12 = vsyncpa [#allocation4], 0
    %s13 = scalar_lea.sflag [#allocation4], 1
    %14 = vsyncpa %s13, 0
    %15 = vsyncpa [#allocation5], 0
    %s16 = scalar_lea.sflag [#allocation5], 1
    %17 = vsyncpa %s16, 0
    loop: start=0, step=1, limit=4
    $region2: #{tpu_custom_call.1} parent=1 // loop_pre_header
      _
    $region3: #{tpu_custom_call.1} parent=1 // loop_header
      %s19 = sphi 0, %s23
      %p20 = scmp.ge.s32.totalorder %s19, 4
      %s29 = sphi 0, %s31
      %s32 = sphi 0, %s29
      %s33 = sphi 0, %s32
      %s49 = sphi 0, %s33
      %s53 = sphi 0, %s53
      %s55 = sphi 0, %s53
      %s56 = sphi 0, %s55
      %s70 = sphi 0, %s56
      %s74 = sphi 0, %s74
      %s76 = sphi 0, %s74
      %s77 = sphi 0, %s76
      %s91 = sphi 0, %s77
      %s95 = sphi 0, %s95
      %s97 = sphi 0, %s95
      %s98 = sphi 0, %s97
      %s112 = sphi 0, %s98
      %s116 = sphi 0, %s116
      %s118 = sphi 0, %s116
      %s119 = sphi 0, %s118
      %s133 = sphi 0, %s119
      %s137 = sphi 0, %s137
      %s139 = sphi 0, %s137
      %s140 = sphi 0, %s139
      %s154 = sphi 0, %s140
      %s158 = sphi 0, %s158
      %s160 = sphi 0, %s158
      %s161 = sphi 0, %s160
      %s175 = sphi 0, %s161
      %s181 = sphi 0, %s183
      %s184 = sphi 0, %s181
      %s185 = sphi 0, %s184
      %s201 = sphi 0, %s185
    $region4: #{tpu_custom_call.1} parent=1 // loop_header_branch
      %22 = sbr.rel (%p20) target = $region8
    $region5: #{tpu_custom_call.1} parent=1 // loop_body
      %s24 = ssub.s32 %s19, 1
      %s25 = ssub.s32 %s19, 2
      %s26 = sadd.s32 %s19, 1
      %s27 = ssub.s32 %s19, %s26
      %p28 = scmp.eq.s32.totalorder %s27, 0
      %s30 = sadd.s32 %s29, 1
      %s31 = scalar_select %p28, %s29, %s30
      %p34 = pneg %p28
      %p35 = scmp.eq.s32.totalorder %s19, 1
      %p36 = por %p34, %p35
      %p37 = scmp.ne.s32.totalorder %s29, %s32
      %p38 = scmp.eq.s32.totalorder %s19, 0
      %p39 = por %p37, %p38
      %p40 = scmp.ne.s32.totalorder %s29, %s32
      %p41 = scmp.eq.s32.totalorder %s24, 1
      %p42 = por %p40, %p41
      %p43 = scmp.ne.s32.totalorder %s32, %s33
      %p44 = scmp.eq.s32.totalorder %s24, 0
      %p45 = por %p43, %p44
      %p46 = scmp.ne.s32.totalorder %s32, %s33
      %p47 = scmp.eq.s32.totalorder %s25, 1
      %p48 = por %p46, %p47
      %p50 = scmp.ne.s32.totalorder %s33, %s49
      %p51 = scmp.eq.s32.totalorder %s25, 0
      %p52 = por %p50, %p51
      %s54 = sadd.s32 %s53, 1
      %p57 = scmp.eq.s32.totalorder %s19, 1
      %p58 = scmp.ne.s32.totalorder %s53, %s55
      %p59 = scmp.eq.s32.totalorder %s19, 0
      %p60 = por %p58, %p59
      %p61 = scmp.ne.s32.totalorder %s53, %s55
      %p62 = scmp.eq.s32.totalorder %s24, 1
      %p63 = por %p61, %p62
      %p64 = scmp.ne.s32.totalorder %s55, %s56
      %p65 = scmp.eq.s32.totalorder %s24, 0
      %p66 = por %p64, %p65
      %p67 = scmp.ne.s32.totalorder %s55, %s56
      %p68 = scmp.eq.s32.totalorder %s25, 1
      %p69 = por %p67, %p68
      %p71 = scmp.ne.s32.totalorder %s56, %s70
      %p72 = scmp.eq.s32.totalorder %s25, 0
      %p73 = por %p71, %p72
      %s75 = sadd.s32 %s74, 1
      %p78 = scmp.eq.s32.totalorder %s19, 1
      %p79 = scmp.ne.s32.totalorder %s74, %s76
      %p80 = scmp.eq.s32.totalorder %s19, 0
      %p81 = por %p79, %p80
      %p82 = scmp.ne.s32.totalorder %s74, %s76
      %p83 = scmp.eq.s32.totalorder %s24, 1
      %p84 = por %p82, %p83
      %p85 = scmp.ne.s32.totalorder %s76, %s77
      %p86 = scmp.eq.s32.totalorder %s24, 0
      %p87 = por %p85, %p86
      %p88 = scmp.ne.s32.totalorder %s76, %s77
      %p89 = scmp.eq.s32.totalorder %s25, 1
      %p90 = por %p88, %p89
      %p92 = scmp.ne.s32.totalorder %s77, %s91
      %p93 = scmp.eq.s32.totalorder %s25, 0
      %p94 = por %p92, %p93
      %s96 = sadd.s32 %s95, 1
      %p99 = scmp.eq.s32.totalorder %s19, 1
      %p100 = scmp.ne.s32.totalorder %s95, %s97
      %p101 = scmp.eq.s32.totalorder %s19, 0
      %p102 = por %p100, %p101
      %p103 = scmp.ne.s32.totalorder %s95, %s97
      %p104 = scmp.eq.s32.totalorder %s24, 1
      %p105 = por %p103, %p104
      %p106 = scmp.ne.s32.totalorder %s97, %s98
      %p107 = scmp.eq.s32.totalorder %s24, 0
      %p108 = por %p106, %p107
      %p109 = scmp.ne.s32.totalorder %s97, %s98
      %p110 = scmp.eq.s32.totalorder %s25, 1
      %p111 = por %p109, %p110
      %p113 = scmp.ne.s32.totalorder %s98, %s112
      %p114 = scmp.eq.s32.totalorder %s25, 0
      %p115 = por %p113, %p114
      %s117 = sadd.s32 %s116, 1
      %p120 = scmp.eq.s32.totalorder %s19, 1
      %p121 = scmp.ne.s32.totalorder %s116, %s118
      %p122 = scmp.eq.s32.totalorder %s19, 0
      %p123 = por %p121, %p122
      %p124 = scmp.ne.s32.totalorder %s116, %s118
      %p125 = scmp.eq.s32.totalorder %s24, 1
      %p126 = por %p124, %p125
      %p127 = scmp.ne.s32.totalorder %s118, %s119
      %p128 = scmp.eq.s32.totalorder %s24, 0
      %p129 = por %p127, %p128
      %p130 = scmp.ne.s32.totalorder %s118, %s119
      %p131 = scmp.eq.s32.totalorder %s25, 1
      %p132 = por %p130, %p131
      %p134 = scmp.ne.s32.totalorder %s119, %s133
      %p135 = scmp.eq.s32.totalorder %s25, 0
      %p136 = por %p134, %p135
      %s138 = sadd.s32 %s137, 1
      %p141 = scmp.eq.s32.totalorder %s19, 1
      %p142 = scmp.ne.s32.totalorder %s137, %s139
      %p143 = scmp.eq.s32.totalorder %s19, 0
      %p144 = por %p142, %p143
      %p145 = scmp.ne.s32.totalorder %s137, %s139
      %p146 = scmp.eq.s32.totalorder %s24, 1
      %p147 = por %p145, %p146
      %p148 = scmp.ne.s32.totalorder %s139, %s140
      %p149 = scmp.eq.s32.totalorder %s24, 0
      %p150 = por %p148, %p149
      %p151 = scmp.ne.s32.totalorder %s139, %s140
      %p152 = scmp.eq.s32.totalorder %s25, 1
      %p153 = por %p151, %p152
      %p155 = scmp.ne.s32.totalorder %s140, %s154
      %p156 = scmp.eq.s32.totalorder %s25, 0
      %p157 = por %p155, %p156
      %s159 = sadd.s32 %s158, 1
      %p162 = scmp.eq.s32.totalorder %s19, 1
      %p163 = scmp.ne.s32.totalorder %s158, %s160
      %p164 = scmp.eq.s32.totalorder %s19, 0
      %p165 = por %p163, %p164
      %p166 = scmp.ne.s32.totalorder %s158, %s160
      %p167 = scmp.eq.s32.totalorder %s24, 1
      %p168 = por %p166, %p167
      %p169 = scmp.ne.s32.totalorder %s160, %s161
      %p170 = scmp.eq.s32.totalorder %s24, 0
      %p171 = por %p169, %p170
      %p172 = scmp.ne.s32.totalorder %s160, %s161
      %p173 = scmp.eq.s32.totalorder %s25, 1
      %p174 = por %p172, %p173
      %p176 = scmp.ne.s32.totalorder %s161, %s175
      %p177 = scmp.eq.s32.totalorder %s25, 0
      %p178 = por %p176, %p177
      %s179 = ssub.s32 %s19, %s26
      %p180 = scmp.eq.s32.totalorder %s179, 0
      %s182 = sadd.s32 %s181, 1
      %s183 = scalar_select %p180, %s181, %s182
      %p186 = pneg %p180
      %p187 = scmp.eq.s32.totalorder %s19, 1
      %p188 = por %p186, %p187
      %p189 = scmp.ne.s32.totalorder %s181, %s184
      %p190 = scmp.eq.s32.totalorder %s19, 0
      %p191 = por %p189, %p190
      %p192 = scmp.ne.s32.totalorder %s181, %s184
      %p193 = scmp.eq.s32.totalorder %s24, 1
      %p194 = por %p192, %p193
      %p195 = scmp.ne.s32.totalorder %s184, %s185
      %p196 = scmp.eq.s32.totalorder %s24, 0
      %p197 = por %p195, %p196
      %p198 = scmp.ne.s32.totalorder %s184, %s185
      %p199 = scmp.eq.s32.totalorder %s25, 1
      %p200 = por %p198, %p199
      %p202 = scmp.ne.s32.totalorder %s185, %s201
      %p203 = scmp.eq.s32.totalorder %s25, 0
      %p204 = por %p202, %p203
      %p205 = scmp.le.s32.totalorder 1, %s19
      %p206 = scmp.lt.s32.totalorder %s19, 3
      %p207 = pnand %p205, %p206
      %p208 = pneg %p207
      // Predicated region
      $region9: #{tpu_custom_call.1} parent=5 // pred_check
        _
      $region10: #{tpu_custom_call.1} parent=5 // pred_check_branch
        %210 = sbr.rel (%p207) target = $region12
      $region11: #{tpu_custom_call.1} parent=5 // pred_region
        %s211 = ssub.s32 %s19, 1
        // Predicated region
        $region13: #{tpu_custom_call.1} parent=11 // pred_check
          %p212 = pneg %p66
        $region14: #{tpu_custom_call.1} parent=11 // pred_check_branch
          %214 = sbr.rel (%p212) target = $region16
        $region15: #{tpu_custom_call.1} parent=11 // pred_region
          _
        $region16: #{tpu_custom_call.1} parent=11 // pred_fallthru
          _
        // Predicated region
        $region17: #{tpu_custom_call.1} parent=11 // pred_check
          %p215 = pneg %p87
        $region18: #{tpu_custom_call.1} parent=11 // pred_check_branch
          %217 = sbr.rel (%p215) target = $region20
        $region19: #{tpu_custom_call.1} parent=11 // pred_region
          _
        $region20: #{tpu_custom_call.1} parent=11 // pred_fallthru
          _
        // Predicated region
        $region21: #{tpu_custom_call.1} parent=11 // pred_check
          %p218 = pneg %p108
        $region22: #{tpu_custom_call.1} parent=11 // pred_check_branch
          %220 = sbr.rel (%p218) target = $region24
        $region23: #{tpu_custom_call.1} parent=11 // pred_region
          _
        $region24: #{tpu_custom_call.1} parent=11 // pred_fallthru
          _
        // Predicated region
        $region25: #{tpu_custom_call.1} parent=11 // pred_check
          %p221 = pneg %p129
        $region26: #{tpu_custom_call.1} parent=11 // pred_check_branch
          %223 = sbr.rel (%p221) target = $region28
        $region27: #{tpu_custom_call.1} parent=11 // pred_region
          _
        $region28: #{tpu_custom_call.1} parent=11 // pred_fallthru
          _
        // Predicated region
        $region29: #{tpu_custom_call.1} parent=11 // pred_check
          %p224 = pneg %p150
        $region30: #{tpu_custom_call.1} parent=11 // pred_check_branch
          %226 = sbr.rel (%p224) target = $region32
        $region31: #{tpu_custom_call.1} parent=11 // pred_region
          _
        $region32: #{tpu_custom_call.1} parent=11 // pred_fallthru
          _
        // Predicated region
        $region33: #{tpu_custom_call.1} parent=11 // pred_check
          %p227 = pneg %p171
        $region34: #{tpu_custom_call.1} parent=11 // pred_check_branch
          %229 = sbr.rel (%p227) target = $region36
        $region35: #{tpu_custom_call.1} parent=11 // pred_region
          _
        $region36: #{tpu_custom_call.1} parent=11 // pred_fallthru
          _
      $region12: #{tpu_custom_call.1} parent=5 // pred_fallthru
        _
      %p230 = scmp.lt.s32.totalorder %s19, 2
      // Predicated region
      $region37: #{tpu_custom_call.1} parent=5 // pred_check
        %p231 = pneg %p230
      $region38: #{tpu_custom_call.1} parent=5 // pred_check_branch
        %233 = sbr.rel (%p231) target = $region40
      $region39: #{tpu_custom_call.1} parent=5 // pred_region
        // Predicated region
        $region41: #{tpu_custom_call.1} parent=39 // pred_check
          %p234 = pneg %p39
        $region42: #{tpu_custom_call.1} parent=39 // pred_check_branch
          %236 = sbr.rel (%p234) target = $region44
        $region43: #{tpu_custom_call.1} parent=39 // pred_region
          %s237 = sand.u32 %s29, 1
          %s238 = scalar_lea.sflag [#allocation4], %s237
          %s239 = sand.u32 %s29, 1
          %s240 = smul.addr %s239, 256
          %s241 = scalar_lea.vmem [#allocation3], %s240
          %s242 = smul.u32 32, %s19
          %s244 = ssub.s32 4096, 4096
          %245 = vsyncadd %s238, %s244
          %s246 = smul.addr %s242, 128
          %s247 = scalar_lea.hbm %s0, %s246
          %s248 = sshll.u32 %s241, 4
          %s249 = int_to_ptr.vmem [resolvable:$true] %s248
          %254 = dma.hbm_to_vmem [thread:$0]  %s247, 4096, %s249, %s238, 128, 128, 8
        $region44: #{tpu_custom_call.1} parent=39 // pred_fallthru
          _
      $region40: #{tpu_custom_call.1} parent=5 // pred_fallthru
        _
      %p255 = scmp.le.s32.totalorder 1, %s19
      %p256 = scmp.lt.s32.totalorder %s19, 3
      %p257 = pnand %p255, %p256
      %p258 = pneg %p257
      // Predicated region
      $region45: #{tpu_custom_call.1} parent=5 // pred_check
        _
      $region46: #{tpu_custom_call.1} parent=5 // pred_check_branch
        %260 = sbr.rel (%p257) target = $region48
      $region47: #{tpu_custom_call.1} parent=5 // pred_region
        %s261 = ssub.s32 %s19, 1
        %s262 = sand.u32 %s32, 1
        %s263 = scalar_lea.sflag [#allocation4], %s262
        %s264 = sand.u32 %s32, 1
        %s265 = smul.addr %s264, 256
        %s266 = scalar_lea.vmem [#allocation3], %s265
        // Predicated region
        $region49: #{tpu_custom_call.1} parent=47 // pred_check
          %p267 = pneg %p45
        $region50: #{tpu_custom_call.1} parent=47 // pred_check_branch
          %269 = sbr.rel (%p267) target = $region52
        $region51: #{tpu_custom_call.1} parent=47 // pred_region
          %270 = dma.done %s263, 4096
        $region52: #{tpu_custom_call.1} parent=47 // pred_fallthru
          _
        %s271 = sand.u32 %s32, 1
        %s272 = scalar_lea.sflag [#allocation4], %s271
        %s273 = sand.u32 %s32, 1
        %s274 = smul.addr %s273, 256
        %s275 = scalar_lea.vmem [#allocation3], %s274
        %p276 = pneg %p45
        %p277 = pneg %p42
        %p278 = pneg %p66
        %p279 = pneg %p63
        %p280 = pneg %p87
        %p281 = pneg %p84
        %p282 = pneg %p108
        %p283 = pneg %p105
        %p284 = pneg %p129
        %p285 = pneg %p126
        %p286 = pneg %p150
        %p287 = pneg %p147
        %p288 = pneg %p171
        %p289 = pneg %p168
        %p290 = pneg %p197
        %p291 = pneg %p194
        %s292 = sand.u32 %s184, 1
        %s293 = scalar_lea.sflag [#allocation5], %s292
        %s294 = sand.u32 %s184, 1
        %s295 = smul.addr %s294, 256
        %s296 = scalar_lea.vmem [#allocation6], %s295
        %s297 = smul.u32 32, %s24
        %s298 = smul.u32 32, %s24
        %v300 = vld [vmem:[%s266] sm:$0xff]
        %v301 = vld [vmem:[%s266 + $0x8] sm:$0xff]
        %v302 = vld [vmem:[%s266 + $0x10] sm:$0xff]
        %v303 = vld [vmem:[%s266 + $0x18] sm:$0xff]
        %v304 = vld [vmem:[%s266 + $0x20] sm:$0xff]
        %v305 = vld [vmem:[%s266 + $0x28] sm:$0xff]
        %v306 = vld [vmem:[%s266 + $0x30] sm:$0xff]
        %v307 = vld [vmem:[%s266 + $0x38] sm:$0xff]
        %v308 = vld [vmem:[%s266 + $0x40] sm:$0xff]
        %v309 = vld [vmem:[%s266 + $0x48] sm:$0xff]
        %v310 = vld [vmem:[%s266 + $0x50] sm:$0xff]
        %v311 = vld [vmem:[%s266 + $0x58] sm:$0xff]
        %v312 = vld [vmem:[%s266 + $0x60] sm:$0xff]
        %v313 = vld [vmem:[%s266 + $0x68] sm:$0xff]
        %v314 = vld [vmem:[%s266 + $0x70] sm:$0xff]
        %v315 = vld [vmem:[%s266 + $0x78] sm:$0xff]
        %v316 = vld [vmem:[%s266 + $0x80] sm:$0xff]
        %v317 = vld [vmem:[%s266 + $0x88] sm:$0xff]
        %v318 = vld [vmem:[%s266 + $0x90] sm:$0xff]
        %v319 = vld [vmem:[%s266 + $0x98] sm:$0xff]
        %v320 = vld [vmem:[%s266 + $0xa0] sm:$0xff]
        %v321 = vld [vmem:[%s266 + $0xa8] sm:$0xff]
        %v322 = vld [vmem:[%s266 + $0xb0] sm:$0xff]
        %v323 = vld [vmem:[%s266 + $0xb8] sm:$0xff]
        %v324 = vld [vmem:[%s266 + $0xc0] sm:$0xff]
        %v325 = vld [vmem:[%s266 + $0xc8] sm:$0xff]
        %v326 = vld [vmem:[%s266 + $0xd0] sm:$0xff]
        %v327 = vld [vmem:[%s266 + $0xd8] sm:$0xff]
        %v328 = vld [vmem:[%s266 + $0xe0] sm:$0xff]
        %v329 = vld [vmem:[%s266 + $0xe8] sm:$0xff]
        %v330 = vld [vmem:[%s266 + $0xf0] sm:$0xff]
        %v331 = vld [vmem:[%s266 + $0xf8] sm:$0xff]
        %v332 = vpack.c.bf16 %v301, %v300
        %v333 = vpack.c.bf16 %v303, %v302
        %v334 = vpack.c.bf16 %v305, %v304
        %v335 = vpack.c.bf16 %v307, %v306
        %v336 = vpack.c.bf16 %v309, %v308
        %v337 = vpack.c.bf16 %v311, %v310
        %v338 = vpack.c.bf16 %v313, %v312
        %v339 = vpack.c.bf16 %v315, %v314
        %v340 = vpack.c.bf16 %v317, %v316
        %v341 = vpack.c.bf16 %v319, %v318
        %v342 = vpack.c.bf16 %v321, %v320
        %v343 = vpack.c.bf16 %v323, %v322
        %v344 = vpack.c.bf16 %v325, %v324
        %v345 = vpack.c.bf16 %v327, %v326
        %v346 = vpack.c.bf16 %v329, %v328
        %v347 = vpack.c.bf16 %v331, %v330
        %v348 = vld [vmem:[%s1] sm:$0xf]
        %v349 = vld [vmem:[%s1 + $0x4] sm:$0xf]
        %v350 = vld [vmem:[%s1 + $0x8] sm:$0xf]
        %v351 = vld [vmem:[%s1 + $0xc] sm:$0xf]
        %v352 = vld [vmem:[%s1 + $0x10] sm:$0xf]
        %v353 = vld [vmem:[%s1 + $0x14] sm:$0xf]
        %v354 = vld [vmem:[%s1 + $0x18] sm:$0xf]
        %v355 = vld [vmem:[%s1 + $0x1c] sm:$0xf]
        %v356 = vld [vmem:[%s1 + $0x20] sm:$0xf]
        %v357 = vld [vmem:[%s1 + $0x24] sm:$0xf]
        %v358 = vld [vmem:[%s1 + $0x28] sm:$0xf]
        %v359 = vld [vmem:[%s1 + $0x2c] sm:$0xf]
        %v360 = vld [vmem:[%s1 + $0x30] sm:$0xf]
        %v361 = vld [vmem:[%s1 + $0x34] sm:$0xf]
        %v362 = vld [vmem:[%s1 + $0x38] sm:$0xf]
        %v363 = vld [vmem:[%s1 + $0x3c] sm:$0xf]
        %v364 = vld [vmem:[%s2] sm:$0x1]
        %v366 = vlaneseq
        %v367 = vshrl.u32 %v366, 7
        %v368 = vsub.s32 0, %v367
        %v369 = vrot.slane %v364, %v368
        %v387 = vunpack.c.l.b16 %v348
        %v388 = vunpack.c.l.b16 %v349
        %v389 = vunpack.c.l.b16 %v350
        %v390 = vunpack.c.l.b16 %v351
        %v391 = vunpack.c.l.b16 %v352
        %v392 = vunpack.c.l.b16 %v353
        %v393 = vunpack.c.l.b16 %v354
        %v394 = vunpack.c.l.b16 %v355
        %v395 = vunpack.c.l.b16 %v356
        %v396 = vunpack.c.l.b16 %v357
        %v397 = vunpack.c.l.b16 %v358
        %v398 = vunpack.c.l.b16 %v359
        %v399 = vunpack.c.l.b16 %v360
        %v400 = vunpack.c.l.b16 %v361
        %v401 = vunpack.c.l.b16 %v362
        %v402 = vunpack.c.l.b16 %v363
        %v403 = vpack.c.b16 %v388, %v387
        %v404 = vpack.c.b16 %v390, %v389
        %v405 = vpack.c.b16 %v392, %v391
        %v406 = vpack.c.b16 %v394, %v393
        %v407 = vpack.c.b16 %v396, %v395
        %v408 = vpack.c.b16 %v398, %v397
        %v409 = vpack.c.b16 %v400, %v399
        %v410 = vpack.c.b16 %v402, %v401
        %419 = vmatprep.subr.bf16.mxu0 0
        %420 = vmatpush1.bf16.msra.mxu0 %v403
        %421 = vmatprep.subr.bf16.mxu0 0
        %422 = vmatpush1.bf16.msra.mxu0 %v404
        %423 = vmatprep.subr.bf16.mxu0 0
        %424 = vmatpush1.bf16.msra.mxu0 %v405
        %425 = vmatprep.subr.bf16.mxu0 0
        %426 = vmatpush1.bf16.msra.mxu0 %v406
        %427 = vmatprep.subr.bf16.mxu0 0
        %428 = vmatpush1.bf16.msra.mxu0 %v407
        %429 = vmatprep.subr.bf16.mxu0 0
        %430 = vmatpush1.bf16.msra.mxu0 %v408
        %431 = vmatprep.subr.bf16.mxu0 0
        %432 = vmatpush1.bf16.msra.mxu0 %v409
        %433 = vmatprep.subr.bf16.mxu0 0
        %434 = vmatpush1.bf16.msra.mxu0 %v410
        %435 = vmatprep.subr.bf16.mxu0 0
        %436 = vmatpush1.bf16.msra.mxu0 0
        %437 = vmatprep.subr.bf16.mxu0 0
        %438 = vmatpush1.bf16.msra.mxu0 0
        %439 = vmatprep.subr.bf16.mxu0 0
        %440 = vmatpush1.bf16.msra.mxu0 0
        %441 = vmatprep.subr.bf16.mxu0 0
        %442 = vmatpush1.bf16.msra.mxu0 0
        %443 = vmatprep.subr.bf16.mxu0 0
        %444 = vmatpush1.bf16.msra.mxu0 0
        %445 = vmatprep.subr.bf16.mxu0 0
        %446 = vmatpush1.bf16.msra.mxu0 0
        %447 = vmatprep.subr.bf16.mxu0 0
        %448 = vmatpush1.bf16.msra.mxu0 0
        %449 = vmatprep.subr.bf16.mxu0 0
        %450 = vmatpush1.bf16.msra.mxu0 0
        %451 = vmatprep.mubr.bf16.mxu0 0
        %452 = vmatmul.mubr.bf16.gmra.mrb[0].mxu0 %v332
        %v453 = vpop.f32.mrb[0].mxu0
        %v454 = vadd.f32 %v369, %v453
        %v455 = vpop.f32.mrb[0].mxu0
        %v456 = vpop.f32.mrb[0].mxu0
        %v457 = vadd.f32 %v369, %v456
        %v458 = vpop.f32.mrb[0].mxu0
        %459 = vmatprep.mubr.bf16.mxu0 0
        %460 = vmatmul.mubr.bf16.gmra.mrb[0].mxu0 %v333
        %v461 = vpop.f32.mrb[0].mxu0
        %v462 = vadd.f32 %v369, %v461
        %v463 = vpop.f32.mrb[0].mxu0
        %v464 = vpop.f32.mrb[0].mxu0
        %v465 = vadd.f32 %v369, %v464
        %v466 = vpop.f32.mrb[0].mxu0
        %467 = vmatprep.mubr.bf16.mxu0 0
        %468 = vmatmul.mubr.bf16.gmra.mrb[0].mxu0 %v334
        %v469 = vpop.f32.mrb[0].mxu0
        %v470 = vadd.f32 %v369, %v469
        %v471 = vpop.f32.mrb[0].mxu0
        %v472 = vpop.f32.mrb[0].mxu0
        %v473 = vadd.f32 %v369, %v472
        %v474 = vpop.f32.mrb[0].mxu0
        %475 = vmatprep.mubr.bf16.mxu0 0
        %476 = vmatmul.mubr.bf16.gmra.mrb[0].mxu0 %v335
        %v477 = vpop.f32.mrb[0].mxu0
        %v478 = vadd.f32 %v369, %v477
        %v479 = vpop.f32.mrb[0].mxu0
        %v480 = vpop.f32.mrb[0].mxu0
        %v481 = vadd.f32 %v369, %v480
        %v482 = vpop.f32.mrb[0].mxu0
        %483 = vmatprep.mubr.bf16.mxu0 0
        %484 = vmatmul.mubr.bf16.gmra.mrb[0].mxu0 %v336
        %v485 = vpop.f32.mrb[0].mxu0
        %v486 = vadd.f32 %v369, %v485
        %v487 = vpop.f32.mrb[0].mxu0
        %v488 = vpop.f32.mrb[0].mxu0
        %v489 = vadd.f32 %v369, %v488
        %v490 = vpop.f32.mrb[0].mxu0
        %491 = vmatprep.mubr.bf16.mxu0 0
        %492 = vmatmul.mubr.bf16.gmra.mrb[0].mxu0 %v337
        %v493 = vpop.f32.mrb[0].mxu0
        %v494 = vadd.f32 %v369, %v493
        %v495 = vpop.f32.mrb[0].mxu0
        %v496 = vpop.f32.mrb[0].mxu0
        %v497 = vadd.f32 %v369, %v496
        %v498 = vpop.f32.mrb[0].mxu0
        %499 = vmatprep.mubr.bf16.mxu0 0
        %500 = vmatmul.mubr.bf16.gmra.mrb[0].mxu0 %v338
        %v501 = vpop.f32.mrb[0].mxu0
        %v502 = vadd.f32 %v369, %v501
        %v503 = vpop.f32.mrb[0].mxu0
        %v504 = vpop.f32.mrb[0].mxu0
        %v505 = vadd.f32 %v369, %v504
        %v506 = vpop.f32.mrb[0].mxu0
        %507 = vmatprep.mubr.bf16.mxu0 0
        %508 = vmatmul.mubr.bf16.gmra.mrb[0].mxu0 %v339
        %v509 = vpop.f32.mrb[0].mxu0
        %v510 = vadd.f32 %v369, %v509
        %v511 = vpop.f32.mrb[0].mxu0
        %v512 = vpop.f32.mrb[0].mxu0
        %v513 = vadd.f32 %v369, %v512
        %v514 = vpop.f32.mrb[0].mxu0
        %515 = vmatprep.mubr.bf16.mxu0 0
        %516 = vmatmul.mubr.bf16.gmra.mrb[0].mxu0 %v340
        %v517 = vpop.f32.mrb[0].mxu0
        %v518 = vadd.f32 %v369, %v517
        %v519 = vpop.f32.mrb[0].mxu0
        %v520 = vpop.f32.mrb[0].mxu0
        %v521 = vadd.f32 %v369, %v520
        %v522 = vpop.f32.mrb[0].mxu0
        %523 = vmatprep.mubr.bf16.mxu0 0
        %524 = vmatmul.mubr.bf16.gmra.mrb[0].mxu0 %v341
        %v525 = vpop.f32.mrb[0].mxu0
        %v526 = vadd.f32 %v369, %v525
        %v527 = vpop.f32.mrb[0].mxu0
        %v528 = vpop.f32.mrb[0].mxu0
        %v529 = vadd.f32 %v369, %v528
        %v530 = vpop.f32.mrb[0].mxu0
        %531 = vmatprep.mubr.bf16.mxu0 0
        %532 = vmatmul.mubr.bf16.gmra.mrb[0].mxu0 %v342
        %v533 = vpop.f32.mrb[0].mxu0
        %v534 = vadd.f32 %v369, %v533
        %v535 = vpop.f32.mrb[0].mxu0
        %v536 = vpop.f32.mrb[0].mxu0
        %v537 = vadd.f32 %v369, %v536
        %v538 = vpop.f32.mrb[0].mxu0
        %539 = vmatprep.mubr.bf16.mxu0 0
        %540 = vmatmul.mubr.bf16.gmra.mrb[0].mxu0 %v343
        %v541 = vpop.f32.mrb[0].mxu0
        %v542 = vadd.f32 %v369, %v541
        %v543 = vpop.f32.mrb[0].mxu0
        %v544 = vpop.f32.mrb[0].mxu0
        %v545 = vadd.f32 %v369, %v544
        %v546 = vpop.f32.mrb[0].mxu0
        %547 = vmatprep.mubr.bf16.mxu0 0
        %548 = vmatmul.mubr.bf16.gmra.mrb[0].mxu0 %v344
        %v549 = vpop.f32.mrb[0].mxu0
        %v550 = vadd.f32 %v369, %v549
        %v551 = vpop.f32.mrb[0].mxu0
        %v552 = vpop.f32.mrb[0].mxu0
        %v553 = vadd.f32 %v369, %v552
        %v554 = vpop.f32.mrb[0].mxu0
        %555 = vmatprep.mubr.bf16.mxu0 0
        %556 = vmatmul.mubr.bf16.gmra.mrb[0].mxu0 %v345
        %v557 = vpop.f32.mrb[0].mxu0
        %v558 = vadd.f32 %v369, %v557
        %v559 = vpop.f32.mrb[0].mxu0
        %v560 = vpop.f32.mrb[0].mxu0
        %v561 = vadd.f32 %v369, %v560
        %v562 = vpop.f32.mrb[0].mxu0
        %563 = vmatprep.mubr.bf16.mxu0 0
        %564 = vmatmul.mubr.bf16.gmra.mrb[0].mxu0 %v346
        %v565 = vpop.f32.mrb[0].mxu0
        %v566 = vadd.f32 %v369, %v565
        %v567 = vpop.f32.mrb[0].mxu0
        %v568 = vpop.f32.mrb[0].mxu0
        %v569 = vadd.f32 %v369, %v568
        %v570 = vpop.f32.mrb[0].mxu0
        %571 = vmatprep.mubr.bf16.mxu0 0
        %572 = vmatmul.mubr.bf16.gmra.mrb[0].mxu0 %v347
        %v573 = vpop.f32.mrb[0].mxu0
        %v574 = vadd.f32 %v369, %v573
        %v575 = vpop.f32.mrb[0].mxu0
        %v576 = vpop.f32.mrb[0].mxu0
        %v577 = vadd.f32 %v369, %v576
        %v578 = vpop.f32.mrb[0].mxu0
        %579 = vdwg.mxu0
        %v580 = vmax.f32 %v454, 0.0
        %v581 = vmax.f32 %v457, 0.0
        %v582 = vmax.f32 %v462, 0.0
        %v583 = vmax.f32 %v465, 0.0
        %v584 = vmax.f32 %v470, 0.0
        %v585 = vmax.f32 %v473, 0.0
        %v586 = vmax.f32 %v478, 0.0
        %v587 = vmax.f32 %v481, 0.0
        %v588 = vmax.f32 %v486, 0.0
        %v589 = vmax.f32 %v489, 0.0
        %v590 = vmax.f32 %v494, 0.0
        %v591 = vmax.f32 %v497, 0.0
        %v592 = vmax.f32 %v502, 0.0
        %v593 = vmax.f32 %v505, 0.0
        %v594 = vmax.f32 %v510, 0.0
        %v595 = vmax.f32 %v513, 0.0
        %v596 = vmax.f32 %v518, 0.0
        %v597 = vmax.f32 %v521, 0.0
        %v598 = vmax.f32 %v526, 0.0
        %v599 = vmax.f32 %v529, 0.0
        %v600 = vmax.f32 %v534, 0.0
        %v601 = vmax.f32 %v537, 0.0
        %v602 = vmax.f32 %v542, 0.0
        %v603 = vmax.f32 %v545, 0.0
        %v604 = vmax.f32 %v550, 0.0
        %v605 = vmax.f32 %v553, 0.0
        %v606 = vmax.f32 %v558, 0.0
        %v607 = vmax.f32 %v561, 0.0
        %v608 = vmax.f32 %v566, 0.0
        %v609 = vmax.f32 %v569, 0.0
        %v610 = vmax.f32 %v574, 0.0
        %v611 = vmax.f32 %v577, 0.0
        %vm612 = vcmask 60416
        %613 = vst.msk [vmem:[#allocation2] sm:$0xf] %vm612, 0
        %614 = vst.msk [vmem:[#allocation2 + $0x4] sm:$0xf] %vm612, 0
        %615 = vst.msk [vmem:[#allocation2 + $0x34] sm:$0xf] %vm612, 0
        %616 = vst.msk [vmem:[#allocation2 + $0x38] sm:$0xf] %vm612, 0
        %617 = vst.msk [vmem:[#allocation2 + $0x68] sm:$0xf] %vm612, 0
        %618 = vst.msk [vmem:[#allocation2 + $0x6c] sm:$0xf] %vm612, 0
        %619 = vst.msk [vmem:[#allocation2 + $0x9c] sm:$0xf] %vm612, 0
        %620 = vst.msk [vmem:[#allocation2 + $0xa0] sm:$0xf] %vm612, 0
        %621 = vst.msk [vmem:[#allocation2 + $0x28] sm:$0xf] %vm612, 0
        %622 = vst.msk [vmem:[#allocation2 + $0x2c] sm:$0xf] %vm612, 0
        %623 = vst.msk [vmem:[#allocation2 + $0x30] sm:$0xf] %vm612, 0
        %624 = vst.msk [vmem:[#allocation2 + $0x5c] sm:$0xf] %vm612, 0
        %625 = vst.msk [vmem:[#allocation2 + $0x60] sm:$0xf] %vm612, 0
        %626 = vst.msk [vmem:[#allocation2 + $0x64] sm:$0xf] %vm612, 0
        %627 = vst.msk [vmem:[#allocation2 + $0x90] sm:$0xf] %vm612, 0
        %628 = vst.msk [vmem:[#allocation2 + $0x94] sm:$0xf] %vm612, 0
        %629 = vst.msk [vmem:[#allocation2 + $0x98] sm:$0xf] %vm612, 0
        %630 = vst.msk [vmem:[#allocation2 + $0xc4] sm:$0xf] %vm612, 0
        %631 = vst.msk [vmem:[#allocation2 + $0xc8] sm:$0xf] %vm612, 0
        %632 = vst.msk [vmem:[#allocation2 + $0xcc] sm:$0xf] %vm612, 0
        %v633 = vpack.c.bf16 %v581, %v580
        %v634 = vpack.c.bf16 %v583, %v582
        %v635 = vpack.c.bf16 %v585, %v584
        %v636 = vpack.c.bf16 %v587, %v586
        %v637 = vpack.c.bf16 %v589, %v588
        %v638 = vpack.c.bf16 %v591, %v590
        %v639 = vpack.c.bf16 %v593, %v592
        %v640 = vpack.c.bf16 %v595, %v594
        %v641 = vpack.c.bf16 %v597, %v596
        %v642 = vpack.c.bf16 %v599, %v598
        %v643 = vpack.c.bf16 %v601, %v600
        %v644 = vpack.c.bf16 %v603, %v602
        %v645 = vpack.c.bf16 %v605, %v604
        %v646 = vpack.c.bf16 %v607, %v606
        %v647 = vpack.c.bf16 %v609, %v608
        %v648 = vpack.c.bf16 %v611, %v610
        %v665 = vunpack.c.l.b16 %v633
        %v666 = vunpack.c.h.b16 %v633
        %v667 = vunpack.c.l.b16 %v634
        %v668 = vunpack.c.h.b16 %v634
        %v669 = vunpack.c.l.b16 %v635
        %v670 = vunpack.c.h.b16 %v635
        %v671 = vunpack.c.l.b16 %v636
        %v672 = vunpack.c.h.b16 %v636
        %v673 = vunpack.c.l.b16 %v637
        %v674 = vunpack.c.h.b16 %v637
        %v675 = vunpack.c.l.b16 %v638
        %v676 = vunpack.c.h.b16 %v638
        %v677 = vunpack.c.l.b16 %v639
        %v678 = vunpack.c.h.b16 %v639
        %v679 = vunpack.c.l.b16 %v640
        %v680 = vunpack.c.h.b16 %v640
        %v681 = vunpack.c.l.b16 %v641
        %v682 = vunpack.c.h.b16 %v641
        %v683 = vunpack.c.l.b16 %v642
        %v684 = vunpack.c.h.b16 %v642
        %v685 = vunpack.c.l.b16 %v643
        %v686 = vunpack.c.h.b16 %v643
        %v687 = vunpack.c.l.b16 %v644
        %v688 = vunpack.c.h.b16 %v644
        %v689 = vunpack.c.l.b16 %v645
        %v690 = vunpack.c.h.b16 %v645
        %v691 = vunpack.c.l.b16 %v646
        %v692 = vunpack.c.h.b16 %v646
        %v693 = vunpack.c.l.b16 %v647
        %v694 = vunpack.c.h.b16 %v647
        %v695 = vunpack.c.l.b16 %v648
        %v696 = vunpack.c.h.b16 %v648
        %v697 = vpack.c.b16 %v665, %v665
        %v698 = vpack.c.b16 %v666, %v666
        %v699 = vpack.c.b16 %v667, %v667
        %v700 = vpack.c.b16 %v668, %v668
        %v701 = vpack.c.b16 %v669, %v669
        %v702 = vpack.c.b16 %v670, %v670
        %v703 = vpack.c.b16 %v671, %v671
        %v704 = vpack.c.b16 %v672, %v672
        %v705 = vpack.c.b16 %v673, %v673
        %v706 = vpack.c.b16 %v674, %v674
        %v707 = vpack.c.b16 %v675, %v675
        %v708 = vpack.c.b16 %v676, %v676
        %v709 = vpack.c.b16 %v677, %v677
        %v710 = vpack.c.b16 %v678, %v678
        %v711 = vpack.c.b16 %v679, %v679
        %v712 = vpack.c.b16 %v680, %v680
        %v713 = vpack.c.b16 %v681, %v681
        %v714 = vpack.c.b16 %v682, %v682
        %v715 = vpack.c.b16 %v683, %v683
        %v716 = vpack.c.b16 %v684, %v684
        %v717 = vpack.c.b16 %v685, %v685
        %v718 = vpack.c.b16 %v686, %v686
        %v719 = vpack.c.b16 %v687, %v687
        %v720 = vpack.c.b16 %v688, %v688
        %v721 = vpack.c.b16 %v689, %v689
        %v722 = vpack.c.b16 %v690, %v690
        %v723 = vpack.c.b16 %v691, %v691
        %v724 = vpack.c.b16 %v692, %v692
        %v725 = vpack.c.b16 %v693, %v693
        %v726 = vpack.c.b16 %v694, %v694
        %v727 = vpack.c.b16 %v695, %v695
        %v728 = vpack.c.b16 %v696, %v696
        %761 = vst.msk [vmem:[#allocation2 + $0x8] sm:$0xf] %vm612, %v697
        %762 = vst.msk [vmem:[#allocation2 + $0xc] sm:$0xf] %vm612, %v698
        %763 = vst.msk [vmem:[#allocation2 + $0x10] sm:$0xf] %vm612, %v699
        %764 = vst.msk [vmem:[#allocation2 + $0x14] sm:$0xf] %vm612, %v700
        %765 = vst.msk [vmem:[#allocation2 + $0x18] sm:$0xf] %vm612, %v701
        %766 = vst.msk [vmem:[#allocation2 + $0x1c] sm:$0xf] %vm612, %v702
        %767 = vst.msk [vmem:[#allocation2 + $0x20] sm:$0xf] %vm612, %v703
        %768 = vst.msk [vmem:[#allocation2 + $0x24] sm:$0xf] %vm612, %v704
        %769 = vst.msk [vmem:[#allocation2 + $0x3c] sm:$0xf] %vm612, %v705
        %770 = vst.msk [vmem:[#allocation2 + $0x40] sm:$0xf] %vm612, %v706
        %771 = vst.msk [vmem:[#allocation2 + $0x44] sm:$0xf] %vm612, %v707
        %772 = vst.msk [vmem:[#allocation2 + $0x48] sm:$0xf] %vm612, %v708
        %773 = vst.msk [vmem:[#allocation2 + $0x4c] sm:$0xf] %vm612, %v709
        %774 = vst.msk [vmem:[#allocation2 + $0x50] sm:$0xf] %vm612, %v710
        %775 = vst.msk [vmem:[#allocation2 + $0x54] sm:$0xf] %vm612, %v711
        %776 = vst.msk [vmem:[#allocation2 + $0x58] sm:$0xf] %vm612, %v712
        %777 = vst.msk [vmem:[#allocation2 + $0x70] sm:$0xf] %vm612, %v713
        %778 = vst.msk [vmem:[#allocation2 + $0x74] sm:$0xf] %vm612, %v714
        %779 = vst.msk [vmem:[#allocation2 + $0x78] sm:$0xf] %vm612, %v715
        %780 = vst.msk [vmem:[#allocation2 + $0x7c] sm:$0xf] %vm612, %v716
        %781 = vst.msk [vmem:[#allocation2 + $0x80] sm:$0xf] %vm612, %v717
        %782 = vst.msk [vmem:[#allocation2 + $0x84] sm:$0xf] %vm612, %v718
        %783 = vst.msk [vmem:[#allocation2 + $0x88] sm:$0xf] %vm612, %v719
        %784 = vst.msk [vmem:[#allocation2 + $0x8c] sm:$0xf] %vm612, %v720
        %785 = vst.msk [vmem:[#allocation2 + $0xa4] sm:$0xf] %vm612, %v721
        %786 = vst.msk [vmem:[#allocation2 + $0xa8] sm:$0xf] %vm612, %v722
        %787 = vst.msk [vmem:[#allocation2 + $0xac] sm:$0xf] %vm612, %v723
        %788 = vst.msk [vmem:[#allocation2 + $0xb0] sm:$0xf] %vm612, %v724
        %789 = vst.msk [vmem:[#allocation2 + $0xb4] sm:$0xf] %vm612, %v725
        %790 = vst.msk [vmem:[#allocation2 + $0xb8] sm:$0xf] %vm612, %v726
        %791 = vst.msk [vmem:[#allocation2 + $0xbc] sm:$0xf] %vm612, %v727
        %792 = vst.msk [vmem:[#allocation2 + $0xc0] sm:$0xf] %vm612, %v728
        %v793 = vlaneseq
        %v794 = vshrl.u32 %v793, 7
        %v795 = vadd.s32 %v794, 8
        %v796 = vadd.s32 %v794, 16
        %v797 = vadd.s32 %v794, 24
        %v798 = vadd.s32 %v794, 32
        %v799 = vadd.s32 %v794, 40
        %v800 = vadd.s32 %v794, 48
        %v801 = vadd.s32 %v794, 56
        %v802 = vadd.s32 %v794, 64
        %v803 = vadd.s32 %v794, 72
        %v804 = vadd.s32 %v794, 80
        %v805 = vadd.s32 %v794, 88
        %v806 = vadd.s32 %v794, 96
        %v807 = vadd.s32 %v794, 104
        %v808 = vadd.s32 %v794, 112
        %v809 = vadd.s32 %v794, 120
        %v810 = vadd.s32 %v794, 128
        %v811 = vadd.s32 %v794, 136
        %v812 = vadd.s32 %v794, 144
        %v813 = vadd.s32 %v794, 152
        %v814 = vadd.s32 %v794, 160
        %v815 = vadd.s32 %v794, 168
        %v816 = vadd.s32 %v794, 176
        %v817 = vadd.s32 %v794, 184
        %v818 = vadd.s32 %v794, 192
        %v819 = vadd.s32 %v794, 200
        %v820 = vadd.s32 %v794, 208
        %v821 = vadd.s32 %v794, 216
        %v822 = vadd.s32 %v794, 224
        %v823 = vadd.s32 %v794, 232
        %v824 = vadd.s32 %v794, 240
        %v825 = vadd.s32 %v794, 248
        %vm826 = vcmp.lt.s32.totalorder %v794, 0
        %v827 = vsub.s32 0, %v794
        %v828 = vsel %vm826, %v827, %v794
        %v829 = vshrl.u32 %v828, 3
        %v830 = vand.u32 %v828, 7
        %v831 = vsub.s32 0, %v830
        %v832 = vsel %vm826, %v831, %v830
        %vm833 = vcmp.lt.s32.totalorder %v795, 0
        %v834 = vsub.s32 0, %v795
        %v835 = vsel %vm833, %v834, %v795
        %v836 = vshrl.u32 %v835, 3
        %v837 = vand.u32 %v835, 7
        %v838 = vsub.s32 0, %v837
        %v839 = vsel %vm833, %v838, %v837
        %vm840 = vcmp.lt.s32.totalorder %v796, 0
        %v841 = vsub.s32 0, %v796
        %v842 = vsel %vm840, %v841, %v796
        %v843 = vshrl.u32 %v842, 3
        %v844 = vand.u32 %v842, 7
        %v845 = vsub.s32 0, %v844
        %v846 = vsel %vm840, %v845, %v844
        %vm847 = vcmp.lt.s32.totalorder %v797, 0
        %v848 = vsub.s32 0, %v797
        %v849 = vsel %vm847, %v848, %v797
        %v850 = vshrl.u32 %v849, 3
        %v851 = vand.u32 %v849, 7
        %v852 = vsub.s32 0, %v851
        %v853 = vsel %vm847, %v852, %v851
        %vm854 = vcmp.lt.s32.totalorder %v798, 0
        %v855 = vsub.s32 0, %v798
        %v856 = vsel %vm854, %v855, %v798
        %v857 = vshrl.u32 %v856, 3
        %v858 = vand.u32 %v856, 7
        %v859 = vsub.s32 0, %v858
        %v860 = vsel %vm854, %v859, %v858
        %vm861 = vcmp.lt.s32.totalorder %v799, 0
        %v862 = vsub.s32 0, %v799
        %v863 = vsel %vm861, %v862, %v799
        %v864 = vshrl.u32 %v863, 3
        %v865 = vand.u32 %v863, 7
        %v866 = vsub.s32 0, %v865
        %v867 = vsel %vm861, %v866, %v865
        %vm868 = vcmp.lt.s32.totalorder %v800, 0
        %v869 = vsub.s32 0, %v800
        %v870 = vsel %vm868, %v869, %v800
        %v871 = vshrl.u32 %v870, 3
        %v872 = vand.u32 %v870, 7
        %v873 = vsub.s32 0, %v872
        %v874 = vsel %vm868, %v873, %v872
        %vm875 = vcmp.lt.s32.totalorder %v801, 0
        %v876 = vsub.s32 0, %v801
        %v877 = vsel %vm875, %v876, %v801
        %v878 = vshrl.u32 %v877, 3
        %v879 = vand.u32 %v877, 7
        %v880 = vsub.s32 0, %v879
        %v881 = vsel %vm875, %v880, %v879
        %vm882 = vcmp.lt.s32.totalorder %v802, 0
        %v883 = vsub.s32 0, %v802
        %v884 = vsel %vm882, %v883, %v802
        %v885 = vshrl.u32 %v884, 3
        %v886 = vand.u32 %v884, 7
        %v887 = vsub.s32 0, %v886
        %v888 = vsel %vm882, %v887, %v886
        %vm889 = vcmp.lt.s32.totalorder %v803, 0
        %v890 = vsub.s32 0, %v803
        %v891 = vsel %vm889, %v890, %v803
        %v892 = vshrl.u32 %v891, 3
        %v893 = vand.u32 %v891, 7
        %v894 = vsub.s32 0, %v893
        %v895 = vsel %vm889, %v894, %v893
        %vm896 = vcmp.lt.s32.totalorder %v804, 0
        %v897 = vsub.s32 0, %v804
        %v898 = vsel %vm896, %v897, %v804
        %v899 = vshrl.u32 %v898, 3
        %v900 = vand.u32 %v898, 7
        %v901 = vsub.s32 0, %v900
        %v902 = vsel %vm896, %v901, %v900
        %vm903 = vcmp.lt.s32.totalorder %v805, 0
        %v904 = vsub.s32 0, %v805
        %v905 = vsel %vm903, %v904, %v805
        %v906 = vshrl.u32 %v905, 3
        %v907 = vand.u32 %v905, 7
        %v908 = vsub.s32 0, %v907
        %v909 = vsel %vm903, %v908, %v907
        %vm910 = vcmp.lt.s32.totalorder %v806, 0
        %v911 = vsub.s32 0, %v806
        %v912 = vsel %vm910, %v911, %v806
        %v913 = vshrl.u32 %v912, 3
        %v914 = vand.u32 %v912, 7
        %v915 = vsub.s32 0, %v914
        %v916 = vsel %vm910, %v915, %v914
        %vm917 = vcmp.lt.s32.totalorder %v807, 0
        %v918 = vsub.s32 0, %v807
        %v919 = vsel %vm917, %v918, %v807
        %v920 = vshrl.u32 %v919, 3
        %v921 = vand.u32 %v919, 7
        %v922 = vsub.s32 0, %v921
        %v923 = vsel %vm917, %v922, %v921
        %vm924 = vcmp.lt.s32.totalorder %v808, 0
        %v925 = vsub.s32 0, %v808
        %v926 = vsel %vm924, %v925, %v808
        %v927 = vshrl.u32 %v926, 3
        %v928 = vand.u32 %v926, 7
        %v929 = vsub.s32 0, %v928
        %v930 = vsel %vm924, %v929, %v928
        %vm931 = vcmp.lt.s32.totalorder %v809, 0
        %v932 = vsub.s32 0, %v809
        %v933 = vsel %vm931, %v932, %v809
        %v934 = vshrl.u32 %v933, 3
        %v935 = vand.u32 %v933, 7
        %v936 = vsub.s32 0, %v935
        %v937 = vsel %vm931, %v936, %v935
        %vm938 = vcmp.lt.s32.totalorder %v810, 0
        %v939 = vsub.s32 0, %v810
        %v940 = vsel %vm938, %v939, %v810
        %v941 = vshrl.u32 %v940, 3
        %v942 = vand.u32 %v940, 7
        %v943 = vsub.s32 0, %v942
        %v944 = vsel %vm938, %v943, %v942
        %vm945 = vcmp.lt.s32.totalorder %v811, 0
        %v946 = vsub.s32 0, %v811
        %v947 = vsel %vm945, %v946, %v811
        %v948 = vshrl.u32 %v947, 3
        %v949 = vand.u32 %v947, 7
        %v950 = vsub.s32 0, %v949
        %v951 = vsel %vm945, %v950, %v949
        %vm952 = vcmp.lt.s32.totalorder %v812, 0
        %v953 = vsub.s32 0, %v812
        %v954 = vsel %vm952, %v953, %v812
        %v955 = vshrl.u32 %v954, 3
        %v956 = vand.u32 %v954, 7
        %v957 = vsub.s32 0, %v956
        %v958 = vsel %vm952, %v957, %v956
        %vm959 = vcmp.lt.s32.totalorder %v813, 0
        %v960 = vsub.s32 0, %v813
        %v961 = vsel %vm959, %v960, %v813
        %v962 = vshrl.u32 %v961, 3
        %v963 = vand.u32 %v961, 7
        %v964 = vsub.s32 0, %v963
        %v965 = vsel %vm959, %v964, %v963
        %vm966 = vcmp.lt.s32.totalorder %v814, 0
        %v967 = vsub.s32 0, %v814
        %v968 = vsel %vm966, %v967, %v814
        %v969 = vshrl.u32 %v968, 3
        %v970 = vand.u32 %v968, 7
        %v971 = vsub.s32 0, %v970
        %v972 = vsel %vm966, %v971, %v970
        %vm973 = vcmp.lt.s32.totalorder %v815, 0
        %v974 = vsub.s32 0, %v815
        %v975 = vsel %vm973, %v974, %v815
        %v976 = vshrl.u32 %v975, 3
        %v977 = vand.u32 %v975, 7
        %v978 = vsub.s32 0, %v977
        %v979 = vsel %vm973, %v978, %v977
        %vm980 = vcmp.lt.s32.totalorder %v816, 0
        %v981 = vsub.s32 0, %v816
        %v982 = vsel %vm980, %v981, %v816
        %v983 = vshrl.u32 %v982, 3
        %v984 = vand.u32 %v982, 7
        %v985 = vsub.s32 0, %v984
        %v986 = vsel %vm980, %v985, %v984
        %vm987 = vcmp.lt.s32.totalorder %v817, 0
        %v988 = vsub.s32 0, %v817
        %v989 = vsel %vm987, %v988, %v817
        %v990 = vshrl.u32 %v989, 3
        %v991 = vand.u32 %v989, 7
        %v992 = vsub.s32 0, %v991
        %v993 = vsel %vm987, %v992, %v991
        %vm994 = vcmp.lt.s32.totalorder %v818, 0
        %v995 = vsub.s32 0, %v818
        %v996 = vsel %vm994, %v995, %v818
        %v997 = vshrl.u32 %v996, 3
        %v998 = vand.u32 %v996, 7
        %v999 = vsub.s32 0, %v998
        %v1000 = vsel %vm994, %v999, %v998
        %vm1001 = vcmp.lt.s32.totalorder %v819, 0
        %v1002 = vsub.s32 0, %v819
        %v1003 = vsel %vm1001, %v1002, %v819
        %v1004 = vshrl.u32 %v1003, 3
        %v1005 = vand.u32 %v1003, 7
        %v1006 = vsub.s32 0, %v1005
        %v1007 = vsel %vm1001, %v1006, %v1005
        %vm1008 = vcmp.lt.s32.totalorder %v820, 0
        %v1009 = vsub.s32 0, %v820
        %v1010 = vsel %vm1008, %v1009, %v820
        %v1011 = vshrl.u32 %v1010, 3
        %v1012 = vand.u32 %v1010, 7
        %v1013 = vsub.s32 0, %v1012
        %v1014 = vsel %vm1008, %v1013, %v1012
        %vm1015 = vcmp.lt.s32.totalorder %v821, 0
        %v1016 = vsub.s32 0, %v821
        %v1017 = vsel %vm1015, %v1016, %v821
        %v1018 = vshrl.u32 %v1017, 3
        %v1019 = vand.u32 %v1017, 7
        %v1020 = vsub.s32 0, %v1019
        %v1021 = vsel %vm1015, %v1020, %v1019
        %vm1022 = vcmp.lt.s32.totalorder %v822, 0
        %v1023 = vsub.s32 0, %v822
        %v1024 = vsel %vm1022, %v1023, %v822
        %v1025 = vshrl.u32 %v1024, 3
        %v1026 = vand.u32 %v1024, 7
        %v1027 = vsub.s32 0, %v1026
        %v1028 = vsel %vm1022, %v1027, %v1026
        %vm1029 = vcmp.lt.s32.totalorder %v823, 0
        %v1030 = vsub.s32 0, %v823
        %v1031 = vsel %vm1029, %v1030, %v823
        %v1032 = vshrl.u32 %v1031, 3
        %v1033 = vand.u32 %v1031, 7
        %v1034 = vsub.s32 0, %v1033
        %v1035 = vsel %vm1029, %v1034, %v1033
        %vm1036 = vcmp.lt.s32.totalorder %v824, 0
        %v1037 = vsub.s32 0, %v824
        %v1038 = vsel %vm1036, %v1037, %v824
        %v1039 = vshrl.u32 %v1038, 3
        %v1040 = vand.u32 %v1038, 7
        %v1041 = vsub.s32 0, %v1040
        %v1042 = vsel %vm1036, %v1041, %v1040
        %vm1043 = vcmp.lt.s32.totalorder %v825, 0
        %v1044 = vsub.s32 0, %v825
        %v1045 = vsel %vm1043, %v1044, %v825
        %v1046 = vshrl.u32 %v1045, 3
        %v1047 = vand.u32 %v1045, 7
        %v1048 = vsub.s32 0, %v1047
        %v1049 = vsel %vm1043, %v1048, %v1047
        %vm1050 = vcmp.ne.s32.totalorder %v832, 0
        %vm1051 = vcmp.ne.s32.totalorder %v839, 0
        %vm1052 = vcmp.ne.s32.totalorder %v846, 0
        %vm1053 = vcmp.ne.s32.totalorder %v853, 0
        %vm1054 = vcmp.ne.s32.totalorder %v860, 0
        %vm1055 = vcmp.ne.s32.totalorder %v867, 0
        %vm1056 = vcmp.ne.s32.totalorder %v874, 0
        %vm1057 = vcmp.ne.s32.totalorder %v881, 0
        %vm1058 = vcmp.ne.s32.totalorder %v888, 0
        %vm1059 = vcmp.ne.s32.totalorder %v895, 0
        %vm1060 = vcmp.ne.s32.totalorder %v902, 0
        %vm1061 = vcmp.ne.s32.totalorder %v909, 0
        %vm1062 = vcmp.ne.s32.totalorder %v916, 0
        %vm1063 = vcmp.ne.s32.totalorder %v923, 0
        %vm1064 = vcmp.ne.s32.totalorder %v930, 0
        %vm1065 = vcmp.ne.s32.totalorder %v937, 0
        %vm1066 = vcmp.ne.s32.totalorder %v944, 0
        %vm1067 = vcmp.ne.s32.totalorder %v951, 0
        %vm1068 = vcmp.ne.s32.totalorder %v958, 0
        %vm1069 = vcmp.ne.s32.totalorder %v965, 0
        %vm1070 = vcmp.ne.s32.totalorder %v972, 0
        %vm1071 = vcmp.ne.s32.totalorder %v979, 0
        %vm1072 = vcmp.ne.s32.totalorder %v986, 0
        %vm1073 = vcmp.ne.s32.totalorder %v993, 0
        %vm1074 = vcmp.ne.s32.totalorder %v1000, 0
        %vm1075 = vcmp.ne.s32.totalorder %v1007, 0
        %vm1076 = vcmp.ne.s32.totalorder %v1014, 0
        %vm1077 = vcmp.ne.s32.totalorder %v1021, 0
        %vm1078 = vcmp.ne.s32.totalorder %v1028, 0
        %vm1079 = vcmp.ne.s32.totalorder %v1035, 0
        %vm1080 = vcmp.ne.s32.totalorder %v1042, 0
        %vm1081 = vcmp.ne.s32.totalorder %v1049, 0
        %vm1082 = vcmp.lt.s32.totalorder %v832, 0
        %vm1083 = vcmp.lt.s32.totalorder %v839, 0
        %vm1084 = vcmp.lt.s32.totalorder %v846, 0
        %vm1085 = vcmp.lt.s32.totalorder %v853, 0
        %vm1086 = vcmp.lt.s32.totalorder %v860, 0
        %vm1087 = vcmp.lt.s32.totalorder %v867, 0
        %vm1088 = vcmp.lt.s32.totalorder %v874, 0
        %vm1089 = vcmp.lt.s32.totalorder %v881, 0
        %vm1090 = vcmp.lt.s32.totalorder %v888, 0
        %vm1091 = vcmp.lt.s32.totalorder %v895, 0
        %vm1092 = vcmp.lt.s32.totalorder %v902, 0
        %vm1093 = vcmp.lt.s32.totalorder %v909, 0
        %vm1094 = vcmp.lt.s32.totalorder %v916, 0
        %vm1095 = vcmp.lt.s32.totalorder %v923, 0
        %vm1096 = vcmp.lt.s32.totalorder %v930, 0
        %vm1097 = vcmp.lt.s32.totalorder %v937, 0
        %vm1098 = vcmp.lt.s32.totalorder %v944, 0
        %vm1099 = vcmp.lt.s32.totalorder %v951, 0
        %vm1100 = vcmp.lt.s32.totalorder %v958, 0
        %vm1101 = vcmp.lt.s32.totalorder %v965, 0
        %vm1102 = vcmp.lt.s32.totalorder %v972, 0
        %vm1103 = vcmp.lt.s32.totalorder %v979, 0
        %vm1104 = vcmp.lt.s32.totalorder %v986, 0
        %vm1105 = vcmp.lt.s32.totalorder %v993, 0
        %vm1106 = vcmp.lt.s32.totalorder %v1000, 0
        %vm1107 = vcmp.lt.s32.totalorder %v1007, 0
        %vm1108 = vcmp.lt.s32.totalorder %v1014, 0
        %vm1109 = vcmp.lt.s32.totalorder %v1021, 0
        %vm1110 = vcmp.lt.s32.totalorder %v1028, 0
        %vm1111 = vcmp.lt.s32.totalorder %v1035, 0
        %vm1112 = vcmp.lt.s32.totalorder %v1042, 0
        %vm1113 = vcmp.lt.s32.totalorder %v1049, 0
        %vm1114 = vmand %vm1082, %vm1050
        %vm1115 = vmand %vm1083, %vm1051
        %vm1116 = vmand %vm1084, %vm1052
        %vm1117 = vmand %vm1085, %vm1053
        %vm1118 = vmand %vm1086, %vm1054
        %vm1119 = vmand %vm1087, %vm1055
        %vm1120 = vmand %vm1088, %vm1056
        %vm1121 = vmand %vm1089, %vm1057
        %vm1122 = vmand %vm1090, %vm1058
        %vm1123 = vmand %vm1091, %vm1059
        %vm1124 = vmand %vm1092, %vm1060
        %vm1125 = vmand %vm1093, %vm1061
        %vm1126 = vmand %vm1094, %vm1062
        %vm1127 = vmand %vm1095, %vm1063
        %vm1128 = vmand %vm1096, %vm1064
        %vm1129 = vmand %vm1097, %vm1065
        %vm1130 = vmand %vm1098, %vm1066
        %vm1131 = vmand %vm1099, %vm1067
        %vm1132 = vmand %vm1100, %vm1068
        %vm1133 = vmand %vm1101, %vm1069
        %vm1134 = vmand %vm1102, %vm1070
        %vm1135 = vmand %vm1103, %vm1071
        %vm1136 = vmand %vm1104, %vm1072
        %vm1137 = vmand %vm1105, %vm1073
        %vm1138 = vmand %vm1106, %vm1074
        %vm1139 = vmand %vm1107, %vm1075
        %vm1140 = vmand %vm1108, %vm1076
        %vm1141 = vmand %vm1109, %vm1077
        %vm1142 = vmand %vm1110, %vm1078
        %vm1143 = vmand %vm1111, %vm1079
        %vm1144 = vmand %vm1112, %vm1080
        %vm1145 = vmand %vm1113, %vm1081
        %v1146 = vadd.s32 %v832, 8
        %v1147 = vadd.s32 %v839, 8
        %v1148 = vadd.s32 %v846, 8
        %v1149 = vadd.s32 %v853, 8
        %v1150 = vadd.s32 %v860, 8
        %v1151 = vadd.s32 %v867, 8
        %v1152 = vadd.s32 %v874, 8
        %v1153 = vadd.s32 %v881, 8
        %v1154 = vadd.s32 %v888, 8
        %v1155 = vadd.s32 %v895, 8
        %v1156 = vadd.s32 %v902, 8
        %v1157 = vadd.s32 %v909, 8
        %v1158 = vadd.s32 %v916, 8
        %v1159 = vadd.s32 %v923, 8
        %v1160 = vadd.s32 %v930, 8
        %v1161 = vadd.s32 %v937, 8
        %v1162 = vadd.s32 %v944, 8
        %v1163 = vadd.s32 %v951, 8
        %v1164 = vadd.s32 %v958, 8
        %v1165 = vadd.s32 %v965, 8
        %v1166 = vadd.s32 %v972, 8
        %v1167 = vadd.s32 %v979, 8
        %v1168 = vadd.s32 %v986, 8
        %v1169 = vadd.s32 %v993, 8
        %v1170 = vadd.s32 %v1000, 8
        %v1171 = vadd.s32 %v1007, 8
        %v1172 = vadd.s32 %v1014, 8
        %v1173 = vadd.s32 %v1021, 8
        %v1174 = vadd.s32 %v1028, 8
        %v1175 = vadd.s32 %v1035, 8
        %v1176 = vadd.s32 %v1042, 8
        %v1177 = vadd.s32 %v1049, 8
        %v1178 = vsel %vm1114, %v1146, %v832
        %v1179 = vsel %vm1115, %v1147, %v839
        %v1180 = vsel %vm1116, %v1148, %v846
        %v1181 = vsel %vm1117, %v1149, %v853
        %v1182 = vsel %vm1118, %v1150, %v860
        %v1183 = vsel %vm1119, %v1151, %v867
        %v1184 = vsel %vm1120, %v1152, %v874
        %v1185 = vsel %vm1121, %v1153, %v881
        %v1186 = vsel %vm1122, %v1154, %v888
        %v1187 = vsel %vm1123, %v1155, %v895
        %v1188 = vsel %vm1124, %v1156, %v902
        %v1189 = vsel %vm1125, %v1157, %v909
        %v1190 = vsel %vm1126, %v1158, %v916
        %v1191 = vsel %vm1127, %v1159, %v923
        %v1192 = vsel %vm1128, %v1160, %v930
        %v1193 = vsel %vm1129, %v1161, %v937
        %v1194 = vsel %vm1130, %v1162, %v944
        %v1195 = vsel %vm1131, %v1163, %v951
        %v1196 = vsel %vm1132, %v1164, %v958
        %v1197 = vsel %vm1133, %v1165, %v965
        %v1198 = vsel %vm1134, %v1166, %v972
        %v1199 = vsel %vm1135, %v1167, %v979
        %v1200 = vsel %vm1136, %v1168, %v986
        %v1201 = vsel %vm1137, %v1169, %v993
        %v1202 = vsel %vm1138, %v1170, %v1000
        %v1203 = vsel %vm1139, %v1171, %v1007
        %v1204 = vsel %vm1140, %v1172, %v1014
        %v1205 = vsel %vm1141, %v1173, %v1021
        %v1206 = vsel %vm1142, %v1174, %v1028
        %v1207 = vsel %vm1143, %v1175, %v1035
        %v1208 = vsel %vm1144, %v1176, %v1042
        %v1209 = vsel %vm1145, %v1177, %v1049
        %vm1210 = vcmp.gt.s32.totalorder %v1178, 0
        %vm1211 = vcmp.gt.s32.totalorder %v1179, 0
        %vm1212 = vcmp.gt.s32.totalorder %v1180, 0
        %vm1213 = vcmp.gt.s32.totalorder %v1181, 0
        %vm1214 = vcmp.gt.s32.totalorder %v1182, 0
        %vm1215 = vcmp.gt.s32.totalorder %v1183, 0
        %vm1216 = vcmp.gt.s32.totalorder %v1184, 0
        %vm1217 = vcmp.gt.s32.totalorder %v1185, 0
        %vm1218 = vcmp.gt.s32.totalorder %v1186, 0
        %vm1219 = vcmp.gt.s32.totalorder %v1187, 0
        %vm1220 = vcmp.gt.s32.totalorder %v1188, 0
        %vm1221 = vcmp.gt.s32.totalorder %v1189, 0
        %vm1222 = vcmp.gt.s32.totalorder %v1190, 0
        %vm1223 = vcmp.gt.s32.totalorder %v1191, 0
        %vm1224 = vcmp.gt.s32.totalorder %v1192, 0
        %vm1225 = vcmp.gt.s32.totalorder %v1193, 0
        %vm1226 = vcmp.gt.s32.totalorder %v1194, 0
        %vm1227 = vcmp.gt.s32.totalorder %v1195, 0
        %vm1228 = vcmp.gt.s32.totalorder %v1196, 0
        %vm1229 = vcmp.gt.s32.totalorder %v1197, 0
        %vm1230 = vcmp.gt.s32.totalorder %v1198, 0
        %vm1231 = vcmp.gt.s32.totalorder %v1199, 0
        %vm1232 = vcmp.gt.s32.totalorder %v1200, 0
        %vm1233 = vcmp.gt.s32.totalorder %v1201, 0
        %vm1234 = vcmp.gt.s32.totalorder %v1202, 0
        %vm1235 = vcmp.gt.s32.totalorder %v1203, 0
        %vm1236 = vcmp.gt.s32.totalorder %v1204, 0
        %vm1237 = vcmp.gt.s32.totalorder %v1205, 0
        %vm1238 = vcmp.gt.s32.totalorder %v1206, 0
        %vm1239 = vcmp.gt.s32.totalorder %v1207, 0
        %vm1240 = vcmp.gt.s32.totalorder %v1208, 0
        %vm1241 = vcmp.gt.s32.totalorder %v1209, 0
        %vm1242 = vcmp.lt.s32.totalorder %v1178, 7
        %vm1243 = vcmp.lt.s32.totalorder %v1179, 7
        %vm1244 = vcmp.lt.s32.totalorder %v1180, 7
        %vm1245 = vcmp.lt.s32.totalorder %v1181, 7
        %vm1246 = vcmp.lt.s32.totalorder %v1182, 7
        %vm1247 = vcmp.lt.s32.totalorder %v1183, 7
        %vm1248 = vcmp.lt.s32.totalorder %v1184, 7
        %vm1249 = vcmp.lt.s32.totalorder %v1185, 7
        %vm1250 = vcmp.lt.s32.totalorder %v1186, 7
        %vm1251 = vcmp.lt.s32.totalorder %v1187, 7
        %vm1252 = vcmp.lt.s32.totalorder %v1188, 7
        %vm1253 = vcmp.lt.s32.totalorder %v1189, 7
        %vm1254 = vcmp.lt.s32.totalorder %v1190, 7
        %vm1255 = vcmp.lt.s32.totalorder %v1191, 7
        %vm1256 = vcmp.lt.s32.totalorder %v1192, 7
        %vm1257 = vcmp.lt.s32.totalorder %v1193, 7
        %vm1258 = vcmp.lt.s32.totalorder %v1194, 7
        %vm1259 = vcmp.lt.s32.totalorder %v1195, 7
        %vm1260 = vcmp.lt.s32.totalorder %v1196, 7
        %vm1261 = vcmp.lt.s32.totalorder %v1197, 7
        %vm1262 = vcmp.lt.s32.totalorder %v1198, 7
        %vm1263 = vcmp.lt.s32.totalorder %v1199, 7
        %vm1264 = vcmp.lt.s32.totalorder %v1200, 7
        %vm1265 = vcmp.lt.s32.totalorder %v1201, 7
        %vm1266 = vcmp.lt.s32.totalorder %v1202, 7
        %vm1267 = vcmp.lt.s32.totalorder %v1203, 7
        %vm1268 = vcmp.lt.s32.totalorder %v1204, 7
        %vm1269 = vcmp.lt.s32.totalorder %v1205, 7
        %vm1270 = vcmp.lt.s32.totalorder %v1206, 7
        %vm1271 = vcmp.lt.s32.totalorder %v1207, 7
        %vm1272 = vcmp.lt.s32.totalorder %v1208, 7
        %vm1273 = vcmp.lt.s32.totalorder %v1209, 7
        %v1274 = vld [vmem:[#allocation2] sm:$0x8]
        %v1275 = vld [vmem:[#allocation2 + $0x4] sm:$0xf]
        %v1276 = vld [vmem:[#allocation2 + $0x8] sm:$0xf]
        %v1277 = vld [vmem:[#allocation2 + $0xc] sm:$0xf]
        %v1278 = vld [vmem:[#allocation2 + $0x10] sm:$0xf]
        %v1279 = vld [vmem:[#allocation2 + $0x14] sm:$0xf]
        %v1280 = vld [vmem:[#allocation2 + $0x18] sm:$0xf]
        %v1281 = vld [vmem:[#allocation2 + $0x1c] sm:$0xf]
        %v1282 = vld [vmem:[#allocation2 + $0x20] sm:$0xf]
        %v1283 = vld [vmem:[#allocation2 + $0x34] sm:$0x8]
        %v1284 = vld [vmem:[#allocation2 + $0x38] sm:$0xf]
        %v1285 = vld [vmem:[#allocation2 + $0x3c] sm:$0xf]
        %v1286 = vld [vmem:[#allocation2 + $0x40] sm:$0xf]
        %v1287 = vld [vmem:[#allocation2 + $0x44] sm:$0xf]
        %v1288 = vld [vmem:[#allocation2 + $0x48] sm:$0xf]
        %v1289 = vld [vmem:[#allocation2 + $0x4c] sm:$0xf]
        %v1290 = vld [vmem:[#allocation2 + $0x50] sm:$0xf]
        %v1291 = vld [vmem:[#allocation2 + $0x54] sm:$0xf]
        %v1292 = vld [vmem:[#allocation2 + $0x68] sm:$0x8]
        %v1293 = vld [vmem:[#allocation2 + $0x6c] sm:$0xf]
        %v1294 = vld [vmem:[#allocation2 + $0x70] sm:$0xf]
        %v1295 = vld [vmem:[#allocation2 + $0x74] sm:$0xf]
        %v1296 = vld [vmem:[#allocation2 + $0x78] sm:$0xf]
        %v1297 = vld [vmem:[#allocation2 + $0x7c] sm:$0xf]
        %v1298 = vld [vmem:[#allocation2 + $0x80] sm:$0xf]
        %v1299 = vld [vmem:[#allocation2 + $0x84] sm:$0xf]
        %v1300 = vld [vmem:[#allocation2 + $0x88] sm:$0xf]
        %v1301 = vld [vmem:[#allocation2 + $0x9c] sm:$0x8]
        %v1302 = vld [vmem:[#allocation2 + $0xa0] sm:$0xf]
        %v1303 = vld [vmem:[#allocation2 + $0xa4] sm:$0xf]
        %v1304 = vld [vmem:[#allocation2 + $0xa8] sm:$0xf]
        %v1305 = vld [vmem:[#allocation2 + $0xac] sm:$0xf]
        %v1306 = vld [vmem:[#allocation2 + $0xb0] sm:$0xf]
        %v1307 = vld [vmem:[#allocation2 + $0xb4] sm:$0xf]
        %v1308 = vld [vmem:[#allocation2 + $0xb8] sm:$0xf]
        %v1309 = vld [vmem:[#allocation2 + $0xbc] sm:$0xf]
        %vm1310 = vsmask.f32 256
        %vm1311 = vsmask.f32 4368
        %vm1312 = vmor %vm1310, %vm1311
        %v1314 = vshrl.u32 %v1274, 16
        %v1316 = vrot.slane %v1314, 7
        %v1317 = vrot.slane %v1316, 4
        %v1319 = vshrl.u32 %v1275, 16
        %v1321 = vrot.slane %v1319, 7
        %v1322 = vshll.u32 %v1275, 16
        %v1324 = vor.u32 %v1321, %v1322
        %v1325 = vsel %vm1312, %v1317, %v1324
        %v1326 = vrot.slane %v1321, 4
        %v1328 = vshrl.u32 %v1276, 16
        %v1330 = vrot.slane %v1328, 7
        %v1331 = vshll.u32 %v1276, 16
        %v1333 = vor.u32 %v1330, %v1331
        %v1334 = vsel %vm1312, %v1326, %v1333
        %v1335 = vrot.slane %v1330, 4
        %v1337 = vshrl.u32 %v1277, 16
        %v1339 = vrot.slane %v1337, 7
        %v1340 = vshll.u32 %v1277, 16
        %v1342 = vor.u32 %v1339, %v1340
        %v1343 = vsel %vm1312, %v1335, %v1342
        %v1344 = vrot.slane %v1339, 4
        %v1346 = vshrl.u32 %v1278, 16
        %v1348 = vrot.slane %v1346, 7
        %v1349 = vshll.u32 %v1278, 16
        %v1351 = vor.u32 %v1348, %v1349
        %v1352 = vsel %vm1312, %v1344, %v1351
        %v1353 = vrot.slane %v1348, 4
        %v1355 = vshrl.u32 %v1279, 16
        %v1357 = vrot.slane %v1355, 7
        %v1358 = vshll.u32 %v1279, 16
        %v1360 = vor.u32 %v1357, %v1358
        %v1361 = vsel %vm1312, %v1353, %v1360
        %v1362 = vrot.slane %v1357, 4
        %v1364 = vshrl.u32 %v1280, 16
        %v1366 = vrot.slane %v1364, 7
        %v1367 = vshll.u32 %v1280, 16
        %v1369 = vor.u32 %v1366, %v1367
        %v1370 = vsel %vm1312, %v1362, %v1369
        %v1371 = vrot.slane %v1366, 4
        %v1373 = vshrl.u32 %v1281, 16
        %v1375 = vrot.slane %v1373, 7
        %v1376 = vshll.u32 %v1281, 16
        %v1378 = vor.u32 %v1375, %v1376
        %v1379 = vsel %vm1312, %v1371, %v1378
        %v1380 = vrot.slane %v1375, 4
        %v1382 = vshrl.u32 %v1282, 16
        %v1384 = vrot.slane %v1382, 7
        %v1385 = vshll.u32 %v1282, 16
        %v1387 = vor.u32 %v1384, %v1385
        %v1388 = vsel %vm1312, %v1380, %v1387
        %v1390 = vshrl.u32 %v1283, 16
        %v1392 = vrot.slane %v1390, 7
        %v1393 = vrot.slane %v1392, 4
        %v1395 = vshrl.u32 %v1284, 16
        %v1397 = vrot.slane %v1395, 7
        %v1398 = vshll.u32 %v1284, 16
        %v1400 = vor.u32 %v1397, %v1398
        %v1401 = vsel %vm1312, %v1393, %v1400
        %v1402 = vrot.slane %v1397, 4
        %v1404 = vshrl.u32 %v1285, 16
        %v1406 = vrot.slane %v1404, 7
        %v1407 = vshll.u32 %v1285, 16
        %v1409 = vor.u32 %v1406, %v1407
        %v1410 = vsel %vm1312, %v1402, %v1409
        %v1411 = vrot.slane %v1406, 4
        %v1413 = vshrl.u32 %v1286, 16
        %v1415 = vrot.slane %v1413, 7
        %v1416 = vshll.u32 %v1286, 16
        %v1418 = vor.u32 %v1415, %v1416
        %v1419 = vsel %vm1312, %v1411, %v1418
        %v1420 = vrot.slane %v1415, 4
        %v1422 = vshrl.u32 %v1287, 16
        %v1424 = vrot.slane %v1422, 7
        %v1425 = vshll.u32 %v1287, 16
        %v1427 = vor.u32 %v1424, %v1425
        %v1428 = vsel %vm1312, %v1420, %v1427
        %v1429 = vrot.slane %v1424, 4
        %v1431 = vshrl.u32 %v1288, 16
        %v1433 = vrot.slane %v1431, 7
        %v1434 = vshll.u32 %v1288, 16
        %v1436 = vor.u32 %v1433, %v1434
        %v1437 = vsel %vm1312, %v1429, %v1436
        %v1438 = vrot.slane %v1433, 4
        %v1440 = vshrl.u32 %v1289, 16
        %v1442 = vrot.slane %v1440, 7
        %v1443 = vshll.u32 %v1289, 16
        %v1445 = vor.u32 %v1442, %v1443
        %v1446 = vsel %vm1312, %v1438, %v1445
        %v1447 = vrot.slane %v1442, 4
        %v1449 = vshrl.u32 %v1290, 16
        %v1451 = vrot.slane %v1449, 7
        %v1452 = vshll.u32 %v1290, 16
        %v1454 = vor.u32 %v1451, %v1452
        %v1455 = vsel %vm1312, %v1447, %v1454
        %v1456 = vrot.slane %v1451, 4
        %v1458 = vshrl.u32 %v1291, 16
        %v1460 = vrot.slane %v1458, 7
        %v1461 = vshll.u32 %v1291, 16
        %v1463 = vor.u32 %v1460, %v1461
        %v1464 = vsel %vm1312, %v1456, %v1463
        %v1466 = vshrl.u32 %v1292, 16
        %v1468 = vrot.slane %v1466, 7
        %v1469 = vrot.slane %v1468, 4
        %v1471 = vshrl.u32 %v1293, 16
        %v1473 = vrot.slane %v1471, 7
        %v1474 = vshll.u32 %v1293, 16
        %v1476 = vor.u32 %v1473, %v1474
        %v1477 = vsel %vm1312, %v1469, %v1476
        %v1478 = vrot.slane %v1473, 4
        %v1480 = vshrl.u32 %v1294, 16
        %v1482 = vrot.slane %v1480, 7
        %v1483 = vshll.u32 %v1294, 16
        %v1485 = vor.u32 %v1482, %v1483
        %v1486 = vsel %vm1312, %v1478, %v1485
        %v1487 = vrot.slane %v1482, 4
        %v1489 = vshrl.u32 %v1295, 16
        %v1491 = vrot.slane %v1489, 7
        %v1492 = vshll.u32 %v1295, 16
        %v1494 = vor.u32 %v1491, %v1492
        %v1495 = vsel %vm1312, %v1487, %v1494
        %v1496 = vrot.slane %v1491, 4
        %v1498 = vshrl.u32 %v1296, 16
        %v1500 = vrot.slane %v1498, 7
        %v1501 = vshll.u32 %v1296, 16
        %v1503 = vor.u32 %v1500, %v1501
        %v1504 = vsel %vm1312, %v1496, %v1503
        %v1505 = vrot.slane %v1500, 4
        %v1507 = vshrl.u32 %v1297, 16
        %v1509 = vrot.slane %v1507, 7
        %v1510 = vshll.u32 %v1297, 16
        %v1512 = vor.u32 %v1509, %v1510
        %v1513 = vsel %vm1312, %v1505, %v1512
        %v1514 = vrot.slane %v1509, 4
        %v1516 = vshrl.u32 %v1298, 16
        %v1518 = vrot.slane %v1516, 7
        %v1519 = vshll.u32 %v1298, 16
        %v1521 = vor.u32 %v1518, %v1519
        %v1522 = vsel %vm1312, %v1514, %v1521
        %v1523 = vrot.slane %v1518, 4
        %v1525 = vshrl.u32 %v1299, 16
        %v1527 = vrot.slane %v1525, 7
        %v1528 = vshll.u32 %v1299, 16
        %v1530 = vor.u32 %v1527, %v1528
        %v1531 = vsel %vm1312, %v1523, %v1530
        %v1532 = vrot.slane %v1527, 4
        %v1534 = vshrl.u32 %v1300, 16
        %v1536 = vrot.slane %v1534, 7
        %v1537 = vshll.u32 %v1300, 16
        %v1539 = vor.u32 %v1536, %v1537
        %v1540 = vsel %vm1312, %v1532, %v1539
        %v1542 = vshrl.u32 %v1301, 16
        %v1544 = vrot.slane %v1542, 7
        %v1545 = vrot.slane %v1544, 4
        %v1547 = vshrl.u32 %v1302, 16
        %v1549 = vrot.slane %v1547, 7
        %v1550 = vshll.u32 %v1302, 16
        %v1552 = vor.u32 %v1549, %v1550
        %v1553 = vsel %vm1312, %v1545, %v1552
        %v1554 = vrot.slane %v1549, 4
        %v1556 = vshrl.u32 %v1303, 16
        %v1558 = vrot.slane %v1556, 7
        %v1559 = vshll.u32 %v1303, 16
        %v1561 = vor.u32 %v1558, %v1559
        %v1562 = vsel %vm1312, %v1554, %v1561
        %v1563 = vrot.slane %v1558, 4
        %v1565 = vshrl.u32 %v1304, 16
        %v1567 = vrot.slane %v1565, 7
        %v1568 = vshll.u32 %v1304, 16
        %v1570 = vor.u32 %v1567, %v1568
        %v1571 = vsel %vm1312, %v1563, %v1570
        %v1572 = vrot.slane %v1567, 4
        %v1574 = vshrl.u32 %v1305, 16
        %v1576 = vrot.slane %v1574, 7
        %v1577 = vshll.u32 %v1305, 16
        %v1579 = vor.u32 %v1576, %v1577
        %v1580 = vsel %vm1312, %v1572, %v1579
        %v1581 = vrot.slane %v1576, 4
        %v1583 = vshrl.u32 %v1306, 16
        %v1585 = vrot.slane %v1583, 7
        %v1586 = vshll.u32 %v1306, 16
        %v1588 = vor.u32 %v1585, %v1586
        %v1589 = vsel %vm1312, %v1581, %v1588
        %v1590 = vrot.slane %v1585, 4
        %v1592 = vshrl.u32 %v1307, 16
        %v1594 = vrot.slane %v1592, 7
        %v1595 = vshll.u32 %v1307, 16
        %v1597 = vor.u32 %v1594, %v1595
        %v1598 = vsel %vm1312, %v1590, %v1597
        %v1599 = vrot.slane %v1594, 4
        %v1601 = vshrl.u32 %v1308, 16
        %v1603 = vrot.slane %v1601, 7
        %v1604 = vshll.u32 %v1308, 16
        %v1606 = vor.u32 %v1603, %v1604
        %v1607 = vsel %vm1312, %v1599, %v1606
        %v1608 = vrot.slane %v1603, 4
        %v1610 = vshrl.u32 %v1309, 16
        %v1612 = vrot.slane %v1610, 7
        %v1613 = vshll.u32 %v1309, 16
        %v1615 = vor.u32 %v1612, %v1613
        %v1616 = vsel %vm1312, %v1608, %v1615
        %v1649 = vsel %vm1210, 1, 0
        %v1650 = vsel %vm1211, 1, 0
        %v1651 = vsel %vm1212, 1, 0
        %v1652 = vsel %vm1213, 1, 0
        %v1653 = vsel %vm1214, 1, 0
        %v1654 = vsel %vm1215, 1, 0
        %v1655 = vsel %vm1216, 1, 0
        %v1656 = vsel %vm1217, 1, 0
        %v1657 = vsel %vm1218, 1, 0
        %v1658 = vsel %vm1219, 1, 0
        %v1659 = vsel %vm1220, 1, 0
        %v1660 = vsel %vm1221, 1, 0
        %v1661 = vsel %vm1222, 1, 0
        %v1662 = vsel %vm1223, 1, 0
        %v1663 = vsel %vm1224, 1, 0
        %v1664 = vsel %vm1225, 1, 0
        %v1665 = vsel %vm1226, 1, 0
        %v1666 = vsel %vm1227, 1, 0
        %v1667 = vsel %vm1228, 1, 0
        %v1668 = vsel %vm1229, 1, 0
        %v1669 = vsel %vm1230, 1, 0
        %v1670 = vsel %vm1231, 1, 0
        %v1671 = vsel %vm1232, 1, 0
        %v1672 = vsel %vm1233, 1, 0
        %v1673 = vsel %vm1234, 1, 0
        %v1674 = vsel %vm1235, 1, 0
        %v1675 = vsel %vm1236, 1, 0
        %v1676 = vsel %vm1237, 1, 0
        %v1677 = vsel %vm1238, 1, 0
        %v1678 = vsel %vm1239, 1, 0
        %v1679 = vsel %vm1240, 1, 0
        %v1680 = vsel %vm1241, 1, 0
        %vm1681 = vcmp.eq.s32.totalorder %v1649, 1
        %vm1682 = vcmp.eq.s32.totalorder %v1650, 1
        %vm1683 = vcmp.eq.s32.totalorder %v1651, 1
        %vm1684 = vcmp.eq.s32.totalorder %v1652, 1
        %vm1685 = vcmp.eq.s32.totalorder %v1653, 1
        %vm1686 = vcmp.eq.s32.totalorder %v1654, 1
        %vm1687 = vcmp.eq.s32.totalorder %v1655, 1
        %vm1688 = vcmp.eq.s32.totalorder %v1656, 1
        %vm1689 = vcmp.eq.s32.totalorder %v1657, 1
        %vm1690 = vcmp.eq.s32.totalorder %v1658, 1
        %vm1691 = vcmp.eq.s32.totalorder %v1659, 1
        %vm1692 = vcmp.eq.s32.totalorder %v1660, 1
        %vm1693 = vcmp.eq.s32.totalorder %v1661, 1
        %vm1694 = vcmp.eq.s32.totalorder %v1662, 1
        %vm1695 = vcmp.eq.s32.totalorder %v1663, 1
        %vm1696 = vcmp.eq.s32.totalorder %v1664, 1
        %vm1697 = vcmp.eq.s32.totalorder %v1665, 1
        %vm1698 = vcmp.eq.s32.totalorder %v1666, 1
        %vm1699 = vcmp.eq.s32.totalorder %v1667, 1
        %vm1700 = vcmp.eq.s32.totalorder %v1668, 1
        %vm1701 = vcmp.eq.s32.totalorder %v1669, 1
        %vm1702 = vcmp.eq.s32.totalorder %v1670, 1
        %vm1703 = vcmp.eq.s32.totalorder %v1671, 1
        %vm1704 = vcmp.eq.s32.totalorder %v1672, 1
        %vm1705 = vcmp.eq.s32.totalorder %v1673, 1
        %vm1706 = vcmp.eq.s32.totalorder %v1674, 1
        %vm1707 = vcmp.eq.s32.totalorder %v1675, 1
        %vm1708 = vcmp.eq.s32.totalorder %v1676, 1
        %vm1709 = vcmp.eq.s32.totalorder %v1677, 1
        %vm1710 = vcmp.eq.s32.totalorder %v1678, 1
        %vm1711 = vcmp.eq.s32.totalorder %v1679, 1
        %vm1712 = vcmp.eq.s32.totalorder %v1680, 1
        %vm1713 = vmpackc.low %vm1681, %vm1681
        %vm1714 = vmpackc.low %vm1682, %vm1682
        %vm1715 = vmpackc.low %vm1683, %vm1683
        %vm1716 = vmpackc.low %vm1684, %vm1684
        %vm1717 = vmpackc.low %vm1685, %vm1685
        %vm1718 = vmpackc.low %vm1686, %vm1686
        %vm1719 = vmpackc.low %vm1687, %vm1687
        %vm1720 = vmpackc.low %vm1688, %vm1688
        %vm1721 = vmpackc.low %vm1689, %vm1689
        %vm1722 = vmpackc.low %vm1690, %vm1690
        %vm1723 = vmpackc.low %vm1691, %vm1691
        %vm1724 = vmpackc.low %vm1692, %vm1692
        %vm1725 = vmpackc.low %vm1693, %vm1693
        %vm1726 = vmpackc.low %vm1694, %vm1694
        %vm1727 = vmpackc.low %vm1695, %vm1695
        %vm1728 = vmpackc.low %vm1696, %vm1696
        %vm1729 = vmpackc.low %vm1697, %vm1697
        %vm1730 = vmpackc.low %vm1698, %vm1698
        %vm1731 = vmpackc.low %vm1699, %vm1699
        %vm1732 = vmpackc.low %vm1700, %vm1700
        %vm1733 = vmpackc.low %vm1701, %vm1701
        %vm1734 = vmpackc.low %vm1702, %vm1702
        %vm1735 = vmpackc.low %vm1703, %vm1703
        %vm1736 = vmpackc.low %vm1704, %vm1704
        %vm1737 = vmpackc.low %vm1705, %vm1705
        %vm1738 = vmpackc.low %vm1706, %vm1706
        %vm1739 = vmpackc.low %vm1707, %vm1707
        %vm1740 = vmpackc.low %vm1708, %vm1708
        %vm1741 = vmpackc.low %vm1709, %vm1709
        %vm1742 = vmpackc.low %vm1710, %vm1710
        %vm1743 = vmpackc.low %vm1711, %vm1711
        %vm1744 = vmpackc.low %vm1712, %vm1712
        %v1745 = vsel %vm1713, %v1325, 0
        %v1746 = vsel %vm1714, %v1334, 0
        %v1747 = vsel %vm1715, %v1343, 0
        %v1748 = vsel %vm1716, %v1352, 0
        %v1749 = vsel %vm1717, %v1361, 0
        %v1750 = vsel %vm1718, %v1370, 0
        %v1751 = vsel %vm1719, %v1379, 0
        %v1752 = vsel %vm1720, %v1388, 0
        %v1753 = vsel %vm1721, %v1401, 0
        %v1754 = vsel %vm1722, %v1410, 0
        %v1755 = vsel %vm1723, %v1419, 0
        %v1756 = vsel %vm1724, %v1428, 0
        %v1757 = vsel %vm1725, %v1437, 0
        %v1758 = vsel %vm1726, %v1446, 0
        %v1759 = vsel %vm1727, %v1455, 0
        %v1760 = vsel %vm1728, %v1464, 0
        %v1761 = vsel %vm1729, %v1477, 0
        %v1762 = vsel %vm1730, %v1486, 0
        %v1763 = vsel %vm1731, %v1495, 0
        %v1764 = vsel %vm1732, %v1504, 0
        %v1765 = vsel %vm1733, %v1513, 0
        %v1766 = vsel %vm1734, %v1522, 0
        %v1767 = vsel %vm1735, %v1531, 0
        %v1768 = vsel %vm1736, %v1540, 0
        %v1769 = vsel %vm1737, %v1553, 0
        %v1770 = vsel %vm1738, %v1562, 0
        %v1771 = vsel %vm1739, %v1571, 0
        %v1772 = vsel %vm1740, %v1580, 0
        %v1773 = vsel %vm1741, %v1589, 0
        %v1774 = vsel %vm1742, %v1598, 0
        %v1775 = vsel %vm1743, %v1607, 0
        %v1776 = vsel %vm1744, %v1616, 0
        %v1777 = vld [vmem:[#allocation2 + $0x24] sm:$0x1]
        %v1778 = vld [vmem:[#allocation2 + $0x58] sm:$0x1]
        %v1779 = vld [vmem:[#allocation2 + $0x8c] sm:$0x1]
        %v1780 = vld [vmem:[#allocation2 + $0xc0] sm:$0x1]
        %vm1781 = vsmask.f32 3328
        %vm1782 = vsmask.f32 7440
        %vm1783 = vmor %vm1781, %vm1782
        %v1784 = vrot.slane %v1319, 4
        %v1785 = vrot.slane %v1322, 5
        %v1786 = vor.u32 %v1784, %v1785
        %v1787 = vrot.slane %v1786, 4
        %v1788 = vrot.slane %v1331, 5
        %v1789 = vsel %vm1783, %v1787, %v1788
        %v1790 = vrot.slane %v1328, 4
        %v1791 = vor.u32 %v1790, %v1788
        %v1792 = vrot.slane %v1791, 4
        %v1793 = vrot.slane %v1340, 5
        %v1794 = vsel %vm1783, %v1792, %v1793
        %v1795 = vrot.slane %v1337, 4
        %v1796 = vor.u32 %v1795, %v1793
        %v1797 = vrot.slane %v1796, 4
        %v1798 = vrot.slane %v1349, 5
        %v1799 = vsel %vm1783, %v1797, %v1798
        %v1800 = vrot.slane %v1346, 4
        %v1801 = vor.u32 %v1800, %v1798
        %v1802 = vrot.slane %v1801, 4
        %v1803 = vrot.slane %v1358, 5
        %v1804 = vsel %vm1783, %v1802, %v1803
        %v1805 = vrot.slane %v1355, 4
        %v1806 = vor.u32 %v1805, %v1803
        %v1807 = vrot.slane %v1806, 4
        %v1808 = vrot.slane %v1367, 5
        %v1809 = vsel %vm1783, %v1807, %v1808
        %v1810 = vrot.slane %v1364, 4
        %v1811 = vor.u32 %v1810, %v1808
        %v1812 = vrot.slane %v1811, 4
        %v1813 = vrot.slane %v1376, 5
        %v1814 = vsel %vm1783, %v1812, %v1813
        %v1815 = vrot.slane %v1373, 4
        %v1816 = vor.u32 %v1815, %v1813
        %v1817 = vrot.slane %v1816, 4
        %v1818 = vrot.slane %v1385, 5
        %v1819 = vsel %vm1783, %v1817, %v1818
        %v1820 = vrot.slane %v1382, 4
        %v1821 = vor.u32 %v1820, %v1818
        %v1822 = vrot.slane %v1821, 4
        %v1824 = vshll.u32 %v1777, 16
        %v1826 = vrot.slane %v1824, 5
        %v1827 = vsel %vm1783, %v1822, %v1826
        %v1828 = vrot.slane %v1395, 4
        %v1829 = vrot.slane %v1398, 5
        %v1830 = vor.u32 %v1828, %v1829
        %v1831 = vrot.slane %v1830, 4
        %v1832 = vrot.slane %v1407, 5
        %v1833 = vsel %vm1783, %v1831, %v1832
        %v1834 = vrot.slane %v1404, 4
        %v1835 = vor.u32 %v1834, %v1832
        %v1836 = vrot.slane %v1835, 4
        %v1837 = vrot.slane %v1416, 5
        %v1838 = vsel %vm1783, %v1836, %v1837
        %v1839 = vrot.slane %v1413, 4
        %v1840 = vor.u32 %v1839, %v1837
        %v1841 = vrot.slane %v1840, 4
        %v1842 = vrot.slane %v1425, 5
        %v1843 = vsel %vm1783, %v1841, %v1842
        %v1844 = vrot.slane %v1422, 4
        %v1845 = vor.u32 %v1844, %v1842
        %v1846 = vrot.slane %v1845, 4
        %v1847 = vrot.slane %v1434, 5
        %v1848 = vsel %vm1783, %v1846, %v1847
        %v1849 = vrot.slane %v1431, 4
        %v1850 = vor.u32 %v1849, %v1847
        %v1851 = vrot.slane %v1850, 4
        %v1852 = vrot.slane %v1443, 5
        %v1853 = vsel %vm1783, %v1851, %v1852
        %v1854 = vrot.slane %v1440, 4
        %v1855 = vor.u32 %v1854, %v1852
        %v1856 = vrot.slane %v1855, 4
        %v1857 = vrot.slane %v1452, 5
        %v1858 = vsel %vm1783, %v1856, %v1857
        %v1859 = vrot.slane %v1449, 4
        %v1860 = vor.u32 %v1859, %v1857
        %v1861 = vrot.slane %v1860, 4
        %v1862 = vrot.slane %v1461, 5
        %v1863 = vsel %vm1783, %v1861, %v1862
        %v1864 = vrot.slane %v1458, 4
        %v1865 = vor.u32 %v1864, %v1862
        %v1866 = vrot.slane %v1865, 4
        %v1868 = vshll.u32 %v1778, 16
        %v1870 = vrot.slane %v1868, 5
        %v1871 = vsel %vm1783, %v1866, %v1870
        %v1872 = vrot.slane %v1471, 4
        %v1873 = vrot.slane %v1474, 5
        %v1874 = vor.u32 %v1872, %v1873
        %v1875 = vrot.slane %v1874, 4
        %v1876 = vrot.slane %v1483, 5
        %v1877 = vsel %vm1783, %v1875, %v1876
        %v1878 = vrot.slane %v1480, 4
        %v1879 = vor.u32 %v1878, %v1876
        %v1880 = vrot.slane %v1879, 4
        %v1881 = vrot.slane %v1492, 5
        %v1882 = vsel %vm1783, %v1880, %v1881
        %v1883 = vrot.slane %v1489, 4
        %v1884 = vor.u32 %v1883, %v1881
        %v1885 = vrot.slane %v1884, 4
        %v1886 = vrot.slane %v1501, 5
        %v1887 = vsel %vm1783, %v1885, %v1886
        %v1888 = vrot.slane %v1498, 4
        %v1889 = vor.u32 %v1888, %v1886
        %v1890 = vrot.slane %v1889, 4
        %v1891 = vrot.slane %v1510, 5
        %v1892 = vsel %vm1783, %v1890, %v1891
        %v1893 = vrot.slane %v1507, 4
        %v1894 = vor.u32 %v1893, %v1891
        %v1895 = vrot.slane %v1894, 4
        %v1896 = vrot.slane %v1519, 5
        %v1897 = vsel %vm1783, %v1895, %v1896
        %v1898 = vrot.slane %v1516, 4
        %v1899 = vor.u32 %v1898, %v1896
        %v1900 = vrot.slane %v1899, 4
        %v1901 = vrot.slane %v1528, 5
        %v1902 = vsel %vm1783, %v1900, %v1901
        %v1903 = vrot.slane %v1525, 4
        %v1904 = vor.u32 %v1903, %v1901
        %v1905 = vrot.slane %v1904, 4
        %v1906 = vrot.slane %v1537, 5
        %v1907 = vsel %vm1783, %v1905, %v1906
        %v1908 = vrot.slane %v1534, 4
        %v1909 = vor.u32 %v1908, %v1906
        %v1910 = vrot.slane %v1909, 4
        %v1912 = vshll.u32 %v1779, 16
        %v1914 = vrot.slane %v1912, 5
        %v1915 = vsel %vm1783, %v1910, %v1914
        %v1916 = vrot.slane %v1547, 4
        %v1917 = vrot.slane %v1550, 5
        %v1918 = vor.u32 %v1916, %v1917
        %v1919 = vrot.slane %v1918, 4
        %v1920 = vrot.slane %v1559, 5
        %v1921 = vsel %vm1783, %v1919, %v1920
        %v1922 = vrot.slane %v1556, 4
        %v1923 = vor.u32 %v1922, %v1920
        %v1924 = vrot.slane %v1923, 4
        %v1925 = vrot.slane %v1568, 5
        %v1926 = vsel %vm1783, %v1924, %v1925
        %v1927 = vrot.slane %v1565, 4
        %v1928 = vor.u32 %v1927, %v1925
        %v1929 = vrot.slane %v1928, 4
        %v1930 = vrot.slane %v1577, 5
        %v1931 = vsel %vm1783, %v1929, %v1930
        %v1932 = vrot.slane %v1574, 4
        %v1933 = vor.u32 %v1932, %v1930
        %v1934 = vrot.slane %v1933, 4
        %v1935 = vrot.slane %v1586, 5
        %v1936 = vsel %vm1783, %v1934, %v1935
        %v1937 = vrot.slane %v1583, 4
        %v1938 = vor.u32 %v1937, %v1935
        %v1939 = vrot.slane %v1938, 4
        %v1940 = vrot.slane %v1595, 5
        %v1941 = vsel %vm1783, %v1939, %v1940
        %v1942 = vrot.slane %v1592, 4
        %v1943 = vor.u32 %v1942, %v1940
        %v1944 = vrot.slane %v1943, 4
        %v1945 = vrot.slane %v1604, 5
        %v1946 = vsel %vm1783, %v1944, %v1945
        %v1947 = vrot.slane %v1601, 4
        %v1948 = vor.u32 %v1947, %v1945
        %v1949 = vrot.slane %v1948, 4
        %v1950 = vrot.slane %v1613, 5
        %v1951 = vsel %vm1783, %v1949, %v1950
        %v1952 = vrot.slane %v1610, 4
        %v1953 = vor.u32 %v1952, %v1950
        %v1954 = vrot.slane %v1953, 4
        %v1956 = vshll.u32 %v1780, 16
        %v1958 = vrot.slane %v1956, 5
        %v1959 = vsel %vm1783, %v1954, %v1958
        %v1992 = vsel %vm1242, 1, 0
        %v1993 = vsel %vm1243, 1, 0
        %v1994 = vsel %vm1244, 1, 0
        %v1995 = vsel %vm1245, 1, 0
        %v1996 = vsel %vm1246, 1, 0
        %v1997 = vsel %vm1247, 1, 0
        %v1998 = vsel %vm1248, 1, 0
        %v1999 = vsel %vm1249, 1, 0
        %v2000 = vsel %vm1250, 1, 0
        %v2001 = vsel %vm1251, 1, 0
        %v2002 = vsel %vm1252, 1, 0
        %v2003 = vsel %vm1253, 1, 0
        %v2004 = vsel %vm1254, 1, 0
        %v2005 = vsel %vm1255, 1, 0
        %v2006 = vsel %vm1256, 1, 0
        %v2007 = vsel %vm1257, 1, 0
        %v2008 = vsel %vm1258, 1, 0
        %v2009 = vsel %vm1259, 1, 0
        %v2010 = vsel %vm1260, 1, 0
        %v2011 = vsel %vm1261, 1, 0
        %v2012 = vsel %vm1262, 1, 0
        %v2013 = vsel %vm1263, 1, 0
        %v2014 = vsel %vm1264, 1, 0
        %v2015 = vsel %vm1265, 1, 0
        %v2016 = vsel %vm1266, 1, 0
        %v2017 = vsel %vm1267, 1, 0
        %v2018 = vsel %vm1268, 1, 0
        %v2019 = vsel %vm1269, 1, 0
        %v2020 = vsel %vm1270, 1, 0
        %v2021 = vsel %vm1271, 1, 0
        %v2022 = vsel %vm1272, 1, 0
        %v2023 = vsel %vm1273, 1, 0
        %vm2024 = vcmp.eq.s32.totalorder %v1992, 1
        %vm2025 = vcmp.eq.s32.totalorder %v1993, 1
        %vm2026 = vcmp.eq.s32.totalorder %v1994, 1
        %vm2027 = vcmp.eq.s32.totalorder %v1995, 1
        %vm2028 = vcmp.eq.s32.totalorder %v1996, 1
        %vm2029 = vcmp.eq.s32.totalorder %v1997, 1
        %vm2030 = vcmp.eq.s32.totalorder %v1998, 1
        %vm2031 = vcmp.eq.s32.totalorder %v1999, 1
        %vm2032 = vcmp.eq.s32.totalorder %v2000, 1
        %vm2033 = vcmp.eq.s32.totalorder %v2001, 1
        %vm2034 = vcmp.eq.s32.totalorder %v2002, 1
        %vm2035 = vcmp.eq.s32.totalorder %v2003, 1
        %vm2036 = vcmp.eq.s32.totalorder %v2004, 1
        %vm2037 = vcmp.eq.s32.totalorder %v2005, 1
        %vm2038 = vcmp.eq.s32.totalorder %v2006, 1
        %vm2039 = vcmp.eq.s32.totalorder %v2007, 1
        %vm2040 = vcmp.eq.s32.totalorder %v2008, 1
        %vm2041 = vcmp.eq.s32.totalorder %v2009, 1
        %vm2042 = vcmp.eq.s32.totalorder %v2010, 1
        %vm2043 = vcmp.eq.s32.totalorder %v2011, 1
        %vm2044 = vcmp.eq.s32.totalorder %v2012, 1
        %vm2045 = vcmp.eq.s32.totalorder %v2013, 1
        %vm2046 = vcmp.eq.s32.totalorder %v2014, 1
        %vm2047 = vcmp.eq.s32.totalorder %v2015, 1
        %vm2048 = vcmp.eq.s32.totalorder %v2016, 1
        %vm2049 = vcmp.eq.s32.totalorder %v2017, 1
        %vm2050 = vcmp.eq.s32.totalorder %v2018, 1
        %vm2051 = vcmp.eq.s32.totalorder %v2019, 1
        %vm2052 = vcmp.eq.s32.totalorder %v2020, 1
        %vm2053 = vcmp.eq.s32.totalorder %v2021, 1
        %vm2054 = vcmp.eq.s32.totalorder %v2022, 1
        %vm2055 = vcmp.eq.s32.totalorder %v2023, 1
        %vm2056 = vmpackc.low %vm2024, %vm2024
        %vm2057 = vmpackc.low %vm2025, %vm2025
        %vm2058 = vmpackc.low %vm2026, %vm2026
        %vm2059 = vmpackc.low %vm2027, %vm2027
        %vm2060 = vmpackc.low %vm2028, %vm2028
        %vm2061 = vmpackc.low %vm2029, %vm2029
        %vm2062 = vmpackc.low %vm2030, %vm2030
        %vm2063 = vmpackc.low %vm2031, %vm2031
        %vm2064 = vmpackc.low %vm2032, %vm2032
        %vm2065 = vmpackc.low %vm2033, %vm2033
        %vm2066 = vmpackc.low %vm2034, %vm2034
        %vm2067 = vmpackc.low %vm2035, %vm2035
        %vm2068 = vmpackc.low %vm2036, %vm2036
        %vm2069 = vmpackc.low %vm2037, %vm2037
        %vm2070 = vmpackc.low %vm2038, %vm2038
        %vm2071 = vmpackc.low %vm2039, %vm2039
        %vm2072 = vmpackc.low %vm2040, %vm2040
        %vm2073 = vmpackc.low %vm2041, %vm2041
        %vm2074 = vmpackc.low %vm2042, %vm2042
        %vm2075 = vmpackc.low %vm2043, %vm2043
        %vm2076 = vmpackc.low %vm2044, %vm2044
        %vm2077 = vmpackc.low %vm2045, %vm2045
        %vm2078 = vmpackc.low %vm2046, %vm2046
        %vm2079 = vmpackc.low %vm2047, %vm2047
        %vm2080 = vmpackc.low %vm2048, %vm2048
        %vm2081 = vmpackc.low %vm2049, %vm2049
        %vm2082 = vmpackc.low %vm2050, %vm2050
        %vm2083 = vmpackc.low %vm2051, %vm2051
        %vm2084 = vmpackc.low %vm2052, %vm2052
        %vm2085 = vmpackc.low %vm2053, %vm2053
        %vm2086 = vmpackc.low %vm2054, %vm2054
        %vm2087 = vmpackc.low %vm2055, %vm2055
        %v2088 = vsel %vm2056, %v1789, 0
        %v2089 = vsel %vm2057, %v1794, 0
        %v2090 = vsel %vm2058, %v1799, 0
        %v2091 = vsel %vm2059, %v1804, 0
        %v2092 = vsel %vm2060, %v1809, 0
        %v2093 = vsel %vm2061, %v1814, 0
        %v2094 = vsel %vm2062, %v1819, 0
        %v2095 = vsel %vm2063, %v1827, 0
        %v2096 = vsel %vm2064, %v1833, 0
        %v2097 = vsel %vm2065, %v1838, 0
        %v2098 = vsel %vm2066, %v1843, 0
        %v2099 = vsel %vm2067, %v1848, 0
        %v2100 = vsel %vm2068, %v1853, 0
        %v2101 = vsel %vm2069, %v1858, 0
        %v2102 = vsel %vm2070, %v1863, 0
        %v2103 = vsel %vm2071, %v1871, 0
        %v2104 = vsel %vm2072, %v1877, 0
        %v2105 = vsel %vm2073, %v1882, 0
        %v2106 = vsel %vm2074, %v1887, 0
        %v2107 = vsel %vm2075, %v1892, 0
        %v2108 = vsel %vm2076, %v1897, 0
        %v2109 = vsel %vm2077, %v1902, 0
        %v2110 = vsel %vm2078, %v1907, 0
        %v2111 = vsel %vm2079, %v1915, 0
        %v2112 = vsel %vm2080, %v1921, 0
        %v2113 = vsel %vm2081, %v1926, 0
        %v2114 = vsel %vm2082, %v1931, 0
        %v2115 = vsel %vm2083, %v1936, 0
        %v2116 = vsel %vm2084, %v1941, 0
        %v2117 = vsel %vm2085, %v1946, 0
        %v2118 = vsel %vm2086, %v1951, 0
        %v2119 = vsel %vm2087, %v1959, 0
        %v2120 = vld [vmem:[#allocation2 + $0x4] sm:$0x8]
        %v2121 = vld [vmem:[#allocation2 + $0x24] sm:$0xf]
        %v2122 = vld [vmem:[#allocation2 + $0x38] sm:$0x8]
        %v2123 = vld [vmem:[#allocation2 + $0x58] sm:$0xf]
        %v2124 = vld [vmem:[#allocation2 + $0x6c] sm:$0x8]
        %v2125 = vld [vmem:[#allocation2 + $0x8c] sm:$0xf]
        %v2126 = vld [vmem:[#allocation2 + $0xa0] sm:$0x8]
        %v2127 = vld [vmem:[#allocation2 + $0xc0] sm:$0xf]
        %v2129 = vshrl.u32 %v2120, 16
        %v2131 = vrot.slane %v2129, 7
        %v2132 = vrot.slane %v2131, 4
        %v2133 = vsel %vm1312, %v2132, %v1333
        %v2134 = vrot.slane %v1384, 4
        %v2136 = vshrl.u32 %v2121, 16
        %v2138 = vrot.slane %v2136, 7
        %v2139 = vshll.u32 %v2121, 16
        %v2141 = vor.u32 %v2138, %v2139
        %v2142 = vsel %vm1312, %v2134, %v2141
        %v2144 = vshrl.u32 %v2122, 16
        %v2146 = vrot.slane %v2144, 7
        %v2147 = vrot.slane %v2146, 4
        %v2148 = vsel %vm1312, %v2147, %v1409
        %v2149 = vrot.slane %v1460, 4
        %v2151 = vshrl.u32 %v2123, 16
        %v2153 = vrot.slane %v2151, 7
        %v2154 = vshll.u32 %v2123, 16
        %v2156 = vor.u32 %v2153, %v2154
        %v2157 = vsel %vm1312, %v2149, %v2156
        %v2159 = vshrl.u32 %v2124, 16
        %v2161 = vrot.slane %v2159, 7
        %v2162 = vrot.slane %v2161, 4
        %v2163 = vsel %vm1312, %v2162, %v1485
        %v2164 = vrot.slane %v1536, 4
        %v2166 = vshrl.u32 %v2125, 16
        %v2168 = vrot.slane %v2166, 7
        %v2169 = vshll.u32 %v2125, 16
        %v2171 = vor.u32 %v2168, %v2169
        %v2172 = vsel %vm1312, %v2164, %v2171
        %v2174 = vshrl.u32 %v2126, 16
        %v2176 = vrot.slane %v2174, 7
        %v2177 = vrot.slane %v2176, 4
        %v2178 = vsel %vm1312, %v2177, %v1561
        %v2179 = vrot.slane %v1612, 4
        %v2181 = vshrl.u32 %v2127, 16
        %v2183 = vrot.slane %v2181, 7
        %v2184 = vshll.u32 %v2127, 16
        %v2186 = vor.u32 %v2183, %v2184
        %v2187 = vsel %vm1312, %v2179, %v2186
        %v2196 = vsel %vm1713, %v2133, 0
        %v2197 = vsel %vm1714, %v1343, 0
        %v2198 = vsel %vm1715, %v1352, 0
        %v2199 = vsel %vm1716, %v1361, 0
        %v2200 = vsel %vm1717, %v1370, 0
        %v2201 = vsel %vm1718, %v1379, 0
        %v2202 = vsel %vm1719, %v1388, 0
        %v2203 = vsel %vm1720, %v2142, 0
        %v2204 = vsel %vm1721, %v2148, 0
        %v2205 = vsel %vm1722, %v1419, 0
        %v2206 = vsel %vm1723, %v1428, 0
        %v2207 = vsel %vm1724, %v1437, 0
        %v2208 = vsel %vm1725, %v1446, 0
        %v2209 = vsel %vm1726, %v1455, 0
        %v2210 = vsel %vm1727, %v1464, 0
        %v2211 = vsel %vm1728, %v2157, 0
        %v2212 = vsel %vm1729, %v2163, 0
        %v2213 = vsel %vm1730, %v1495, 0
        %v2214 = vsel %vm1731, %v1504, 0
        %v2215 = vsel %vm1732, %v1513, 0
        %v2216 = vsel %vm1733, %v1522, 0
        %v2217 = vsel %vm1734, %v1531, 0
        %v2218 = vsel %vm1735, %v1540, 0
        %v2219 = vsel %vm1736, %v2172, 0
        %v2220 = vsel %vm1737, %v2178, 0
        %v2221 = vsel %vm1738, %v1571, 0
        %v2222 = vsel %vm1739, %v1580, 0
        %v2223 = vsel %vm1740, %v1589, 0
        %v2224 = vsel %vm1741, %v1598, 0
        %v2225 = vsel %vm1742, %v1607, 0
        %v2226 = vsel %vm1743, %v1616, 0
        %v2227 = vsel %vm1744, %v2187, 0
        %v2228 = vld [vmem:[#allocation2 + $0x28] sm:$0x1]
        %v2229 = vld [vmem:[#allocation2 + $0x5c] sm:$0x1]
        %v2230 = vld [vmem:[#allocation2 + $0x90] sm:$0x1]
        %v2231 = vld [vmem:[#allocation2 + $0xc4] sm:$0x1]
        %v2232 = vrot.slane %v2139, 5
        %v2233 = vsel %vm1783, %v1822, %v2232
        %v2234 = vrot.slane %v2136, 4
        %v2235 = vor.u32 %v2234, %v2232
        %v2236 = vrot.slane %v2235, 4
        %v2238 = vshll.u32 %v2228, 16
        %v2240 = vrot.slane %v2238, 5
        %v2241 = vsel %vm1783, %v2236, %v2240
        %v2242 = vrot.slane %v2154, 5
        %v2243 = vsel %vm1783, %v1866, %v2242
        %v2244 = vrot.slane %v2151, 4
        %v2245 = vor.u32 %v2244, %v2242
        %v2246 = vrot.slane %v2245, 4
        %v2248 = vshll.u32 %v2229, 16
        %v2250 = vrot.slane %v2248, 5
        %v2251 = vsel %vm1783, %v2246, %v2250
        %v2252 = vrot.slane %v2169, 5
        %v2253 = vsel %vm1783, %v1910, %v2252
        %v2254 = vrot.slane %v2166, 4
        %v2255 = vor.u32 %v2254, %v2252
        %v2256 = vrot.slane %v2255, 4
        %v2258 = vshll.u32 %v2230, 16
        %v2260 = vrot.slane %v2258, 5
        %v2261 = vsel %vm1783, %v2256, %v2260
        %v2262 = vrot.slane %v2184, 5
        %v2263 = vsel %vm1783, %v1954, %v2262
        %v2264 = vrot.slane %v2181, 4
        %v2265 = vor.u32 %v2264, %v2262
        %v2266 = vrot.slane %v2265, 4
        %v2268 = vshll.u32 %v2231, 16
        %v2270 = vrot.slane %v2268, 5
        %v2271 = vsel %vm1783, %v2266, %v2270
        %v2280 = vsel %vm2056, %v1794, 0
        %v2281 = vsel %vm2057, %v1799, 0
        %v2282 = vsel %vm2058, %v1804, 0
        %v2283 = vsel %vm2059, %v1809, 0
        %v2284 = vsel %vm2060, %v1814, 0
        %v2285 = vsel %vm2061, %v1819, 0
        %v2286 = vsel %vm2062, %v2233, 0
        %v2287 = vsel %vm2063, %v2241, 0
        %v2288 = vsel %vm2064, %v1838, 0
        %v2289 = vsel %vm2065, %v1843, 0
        %v2290 = vsel %vm2066, %v1848, 0
        %v2291 = vsel %vm2067, %v1853, 0
        %v2292 = vsel %vm2068, %v1858, 0
        %v2293 = vsel %vm2069, %v1863, 0
        %v2294 = vsel %vm2070, %v2243, 0
        %v2295 = vsel %vm2071, %v2251, 0
        %v2296 = vsel %vm2072, %v1882, 0
        %v2297 = vsel %vm2073, %v1887, 0
        %v2298 = vsel %vm2074, %v1892, 0
        %v2299 = vsel %vm2075, %v1897, 0
        %v2300 = vsel %vm2076, %v1902, 0
        %v2301 = vsel %vm2077, %v1907, 0
        %v2302 = vsel %vm2078, %v2253, 0
        %v2303 = vsel %vm2079, %v2261, 0
        %v2304 = vsel %vm2080, %v1926, 0
        %v2305 = vsel %vm2081, %v1931, 0
        %v2306 = vsel %vm2082, %v1936, 0
        %v2307 = vsel %vm2083, %v1941, 0
        %v2308 = vsel %vm2084, %v1946, 0
        %v2309 = vsel %vm2085, %v1951, 0
        %v2310 = vsel %vm2086, %v2263, 0
        %v2311 = vsel %vm2087, %v2271, 0
        %v2312 = vld [vmem:[#allocation2 + $0x8] sm:$0x8]
        %v2313 = vld [vmem:[#allocation2 + $0x28] sm:$0xf]
        %v2314 = vld [vmem:[#allocation2 + $0x3c] sm:$0x8]
        %v2315 = vld [vmem:[#allocation2 + $0x5c] sm:$0xf]
        %v2316 = vld [vmem:[#allocation2 + $0x70] sm:$0x8]
        %v2317 = vld [vmem:[#allocation2 + $0x90] sm:$0xf]
        %v2318 = vld [vmem:[#allocation2 + $0xa4] sm:$0x8]
        %v2319 = vld [vmem:[#allocation2 + $0xc4] sm:$0xf]
        %v2321 = vshrl.u32 %v2312, 16
        %v2323 = vrot.slane %v2321, 7
        %v2324 = vrot.slane %v2323, 4
        %v2325 = vsel %vm1312, %v2324, %v1342
        %v2326 = vrot.slane %v2138, 4
        %v2328 = vshrl.u32 %v2313, 16
        %v2330 = vrot.slane %v2328, 7
        %v2331 = vshll.u32 %v2313, 16
        %v2333 = vor.u32 %v2330, %v2331
        %v2334 = vsel %vm1312, %v2326, %v2333
        %v2336 = vshrl.u32 %v2314, 16
        %v2338 = vrot.slane %v2336, 7
        %v2339 = vrot.slane %v2338, 4
        %v2340 = vsel %vm1312, %v2339, %v1418
        %v2341 = vrot.slane %v2153, 4
        %v2343 = vshrl.u32 %v2315, 16
        %v2345 = vrot.slane %v2343, 7
        %v2346 = vshll.u32 %v2315, 16
        %v2348 = vor.u32 %v2345, %v2346
        %v2349 = vsel %vm1312, %v2341, %v2348
        %v2351 = vshrl.u32 %v2316, 16
        %v2353 = vrot.slane %v2351, 7
        %v2354 = vrot.slane %v2353, 4
        %v2355 = vsel %vm1312, %v2354, %v1494
        %v2356 = vrot.slane %v2168, 4
        %v2358 = vshrl.u32 %v2317, 16
        %v2360 = vrot.slane %v2358, 7
        %v2361 = vshll.u32 %v2317, 16
        %v2363 = vor.u32 %v2360, %v2361
        %v2364 = vsel %vm1312, %v2356, %v2363
        %v2366 = vshrl.u32 %v2318, 16
        %v2368 = vrot.slane %v2366, 7
        %v2369 = vrot.slane %v2368, 4
        %v2370 = vsel %vm1312, %v2369, %v1570
        %v2371 = vrot.slane %v2183, 4
        %v2373 = vshrl.u32 %v2319, 16
        %v2375 = vrot.slane %v2373, 7
        %v2376 = vshll.u32 %v2319, 16
        %v2378 = vor.u32 %v2375, %v2376
        %v2379 = vsel %vm1312, %v2371, %v2378
        %v2388 = vsel %vm1713, %v2325, 0
        %v2389 = vsel %vm1714, %v1352, 0
        %v2390 = vsel %vm1715, %v1361, 0
        %v2391 = vsel %vm1716, %v1370, 0
        %v2392 = vsel %vm1717, %v1379, 0
        %v2393 = vsel %vm1718, %v1388, 0
        %v2394 = vsel %vm1719, %v2142, 0
        %v2395 = vsel %vm1720, %v2334, 0
        %v2396 = vsel %vm1721, %v2340, 0
        %v2397 = vsel %vm1722, %v1428, 0
        %v2398 = vsel %vm1723, %v1437, 0
        %v2399 = vsel %vm1724, %v1446, 0
        %v2400 = vsel %vm1725, %v1455, 0
        %v2401 = vsel %vm1726, %v1464, 0
        %v2402 = vsel %vm1727, %v2157, 0
        %v2403 = vsel %vm1728, %v2349, 0
        %v2404 = vsel %vm1729, %v2355, 0
        %v2405 = vsel %vm1730, %v1504, 0
        %v2406 = vsel %vm1731, %v1513, 0
        %v2407 = vsel %vm1732, %v1522, 0
        %v2408 = vsel %vm1733, %v1531, 0
        %v2409 = vsel %vm1734, %v1540, 0
        %v2410 = vsel %vm1735, %v2172, 0
        %v2411 = vsel %vm1736, %v2364, 0
        %v2412 = vsel %vm1737, %v2370, 0
        %v2413 = vsel %vm1738, %v1580, 0
        %v2414 = vsel %vm1739, %v1589, 0
        %v2415 = vsel %vm1740, %v1598, 0
        %v2416 = vsel %vm1741, %v1607, 0
        %v2417 = vsel %vm1742, %v1616, 0
        %v2418 = vsel %vm1743, %v2187, 0
        %v2419 = vsel %vm1744, %v2379, 0
        %v2420 = vld [vmem:[#allocation2 + $0x2c] sm:$0x1]
        %v2421 = vld [vmem:[#allocation2 + $0x60] sm:$0x1]
        %v2422 = vld [vmem:[#allocation2 + $0x94] sm:$0x1]
        %v2423 = vld [vmem:[#allocation2 + $0xc8] sm:$0x1]
        %v2424 = vrot.slane %v2331, 5
        %v2425 = vsel %vm1783, %v2236, %v2424
        %v2426 = vrot.slane %v2328, 4
        %v2427 = vor.u32 %v2426, %v2424
        %v2428 = vrot.slane %v2427, 4
        %v2430 = vshll.u32 %v2420, 16
        %v2432 = vrot.slane %v2430, 5
        %v2433 = vsel %vm1783, %v2428, %v2432
        %v2434 = vrot.slane %v2346, 5
        %v2435 = vsel %vm1783, %v2246, %v2434
        %v2436 = vrot.slane %v2343, 4
        %v2437 = vor.u32 %v2436, %v2434
        %v2438 = vrot.slane %v2437, 4
        %v2440 = vshll.u32 %v2421, 16
        %v2442 = vrot.slane %v2440, 5
        %v2443 = vsel %vm1783, %v2438, %v2442
        %v2444 = vrot.slane %v2361, 5
        %v2445 = vsel %vm1783, %v2256, %v2444
        %v2446 = vrot.slane %v2358, 4
        %v2447 = vor.u32 %v2446, %v2444
        %v2448 = vrot.slane %v2447, 4
        %v2450 = vshll.u32 %v2422, 16
        %v2452 = vrot.slane %v2450, 5
        %v2453 = vsel %vm1783, %v2448, %v2452
        %v2454 = vrot.slane %v2376, 5
        %v2455 = vsel %vm1783, %v2266, %v2454
        %v2456 = vrot.slane %v2373, 4
        %v2457 = vor.u32 %v2456, %v2454
        %v2458 = vrot.slane %v2457, 4
        %v2460 = vshll.u32 %v2423, 16
        %v2462 = vrot.slane %v2460, 5
        %v2463 = vsel %vm1783, %v2458, %v2462
        %v2472 = vsel %vm2056, %v1799, 0
        %v2473 = vsel %vm2057, %v1804, 0
        %v2474 = vsel %vm2058, %v1809, 0
        %v2475 = vsel %vm2059, %v1814, 0
        %v2476 = vsel %vm2060, %v1819, 0
        %v2477 = vsel %vm2061, %v2233, 0
        %v2478 = vsel %vm2062, %v2425, 0
        %v2479 = vsel %vm2063, %v2433, 0
        %v2480 = vsel %vm2064, %v1843, 0
        %v2481 = vsel %vm2065, %v1848, 0
        %v2482 = vsel %vm2066, %v1853, 0
        %v2483 = vsel %vm2067, %v1858, 0
        %v2484 = vsel %vm2068, %v1863, 0
        %v2485 = vsel %vm2069, %v2243, 0
        %v2486 = vsel %vm2070, %v2435, 0
        %v2487 = vsel %vm2071, %v2443, 0
        %v2488 = vsel %vm2072, %v1887, 0
        %v2489 = vsel %vm2073, %v1892, 0
        %v2490 = vsel %vm2074, %v1897, 0
        %v2491 = vsel %vm2075, %v1902, 0
        %v2492 = vsel %vm2076, %v1907, 0
        %v2493 = vsel %vm2077, %v2253, 0
        %v2494 = vsel %vm2078, %v2445, 0
        %v2495 = vsel %vm2079, %v2453, 0
        %v2496 = vsel %vm2080, %v1931, 0
        %v2497 = vsel %vm2081, %v1936, 0
        %v2498 = vsel %vm2082, %v1941, 0
        %v2499 = vsel %vm2083, %v1946, 0
        %v2500 = vsel %vm2084, %v1951, 0
        %v2501 = vsel %vm2085, %v2263, 0
        %v2502 = vsel %vm2086, %v2455, 0
        %v2503 = vsel %vm2087, %v2463, 0
        %v2536 = vunpack.c.l.b16 %v1745
        %v2537 = vunpack.c.l.b16 %v1746
        %v2538 = vunpack.c.l.b16 %v1747
        %v2539 = vunpack.c.l.b16 %v1748
        %v2540 = vunpack.c.l.b16 %v1749
        %v2541 = vunpack.c.l.b16 %v1750
        %v2542 = vunpack.c.l.b16 %v1751
        %v2543 = vunpack.c.l.b16 %v1752
        %v2544 = vunpack.c.l.b16 %v1753
        %v2545 = vunpack.c.l.b16 %v1754
        %v2546 = vunpack.c.l.b16 %v1755
        %v2547 = vunpack.c.l.b16 %v1756
        %v2548 = vunpack.c.l.b16 %v1757
        %v2549 = vunpack.c.l.b16 %v1758
        %v2550 = vunpack.c.l.b16 %v1759
        %v2551 = vunpack.c.l.b16 %v1760
        %v2552 = vunpack.c.l.b16 %v1761
        %v2553 = vunpack.c.l.b16 %v1762
        %v2554 = vunpack.c.l.b16 %v1763
        %v2555 = vunpack.c.l.b16 %v1764
        %v2556 = vunpack.c.l.b16 %v1765
        %v2557 = vunpack.c.l.b16 %v1766
        %v2558 = vunpack.c.l.b16 %v1767
        %v2559 = vunpack.c.l.b16 %v1768
        %v2560 = vunpack.c.l.b16 %v1769
        %v2561 = vunpack.c.l.b16 %v1770
        %v2562 = vunpack.c.l.b16 %v1771
        %v2563 = vunpack.c.l.b16 %v1772
        %v2564 = vunpack.c.l.b16 %v1773
        %v2565 = vunpack.c.l.b16 %v1774
        %v2566 = vunpack.c.l.b16 %v1775
        %v2567 = vunpack.c.l.b16 %v1776
        %v2568 = vpack.c.b16 %v2537, %v2536
        %v2569 = vpack.c.b16 %v2539, %v2538
        %v2570 = vpack.c.b16 %v2541, %v2540
        %v2571 = vpack.c.b16 %v2543, %v2542
        %v2572 = vpack.c.b16 %v2545, %v2544
        %v2573 = vpack.c.b16 %v2547, %v2546
        %v2574 = vpack.c.b16 %v2549, %v2548
        %v2575 = vpack.c.b16 %v2551, %v2550
        %v2576 = vpack.c.b16 %v2553, %v2552
        %v2577 = vpack.c.b16 %v2555, %v2554
        %v2578 = vpack.c.b16 %v2557, %v2556
        %v2579 = vpack.c.b16 %v2559, %v2558
        %v2580 = vpack.c.b16 %v2561, %v2560
        %v2581 = vpack.c.b16 %v2563, %v2562
        %v2582 = vpack.c.b16 %v2565, %v2564
        %v2583 = vpack.c.b16 %v2567, %v2566
        %v2616 = vunpack.c.l.b16 %v1275
        %v2617 = vunpack.c.l.b16 %v1276
        %v2618 = vunpack.c.l.b16 %v1277
        %v2619 = vunpack.c.l.b16 %v1278
        %v2620 = vunpack.c.l.b16 %v1279
        %v2621 = vunpack.c.l.b16 %v1280
        %v2622 = vunpack.c.l.b16 %v1281
        %v2623 = vunpack.c.l.b16 %v1282
        %v2624 = vunpack.c.l.b16 %v1284
        %v2625 = vunpack.c.l.b16 %v1285
        %v2626 = vunpack.c.l.b16 %v1286
        %v2627 = vunpack.c.l.b16 %v1287
        %v2628 = vunpack.c.l.b16 %v1288
        %v2629 = vunpack.c.l.b16 %v1289
        %v2630 = vunpack.c.l.b16 %v1290
        %v2631 = vunpack.c.l.b16 %v1291
        %v2632 = vunpack.c.l.b16 %v1293
        %v2633 = vunpack.c.l.b16 %v1294
        %v2634 = vunpack.c.l.b16 %v1295
        %v2635 = vunpack.c.l.b16 %v1296
        %v2636 = vunpack.c.l.b16 %v1297
        %v2637 = vunpack.c.l.b16 %v1298
        %v2638 = vunpack.c.l.b16 %v1299
        %v2639 = vunpack.c.l.b16 %v1300
        %v2640 = vunpack.c.l.b16 %v1302
        %v2641 = vunpack.c.l.b16 %v1303
        %v2642 = vunpack.c.l.b16 %v1304
        %v2643 = vunpack.c.l.b16 %v1305
        %v2644 = vunpack.c.l.b16 %v1306
        %v2645 = vunpack.c.l.b16 %v1307
        %v2646 = vunpack.c.l.b16 %v1308
        %v2647 = vunpack.c.l.b16 %v1309
        %v2648 = vpack.c.b16 %v2617, %v2616
        %v2649 = vpack.c.b16 %v2619, %v2618
        %v2650 = vpack.c.b16 %v2621, %v2620
        %v2651 = vpack.c.b16 %v2623, %v2622
        %v2652 = vpack.c.b16 %v2625, %v2624
        %v2653 = vpack.c.b16 %v2627, %v2626
        %v2654 = vpack.c.b16 %v2629, %v2628
        %v2655 = vpack.c.b16 %v2631, %v2630
        %v2656 = vpack.c.b16 %v2633, %v2632
        %v2657 = vpack.c.b16 %v2635, %v2634
        %v2658 = vpack.c.b16 %v2637, %v2636
        %v2659 = vpack.c.b16 %v2639, %v2638
        %v2660 = vpack.c.b16 %v2641, %v2640
        %v2661 = vpack.c.b16 %v2643, %v2642
        %v2662 = vpack.c.b16 %v2645, %v2644
        %v2663 = vpack.c.b16 %v2647, %v2646
        %2664 = vrot.lane.b32.xlu0 %v2648, 8
        %v2665 = vpop.permute.xlu0 %2664
        %2666 = vrot.lane.b32.xlu0 %v2649, 8
        %v2667 = vpop.permute.xlu0 %2666
        %2668 = vrot.lane.b32.xlu0 %v2650, 8
        %v2669 = vpop.permute.xlu0 %2668
        %2670 = vrot.lane.b32.xlu0 %v2651, 8
        %v2671 = vpop.permute.xlu0 %2670
        %2672 = vrot.lane.b32.xlu0 %v2652, 8
        %v2673 = vpop.permute.xlu0 %2672
        %2674 = vrot.lane.b32.xlu0 %v2653, 8
        %v2675 = vpop.permute.xlu0 %2674
        %2676 = vrot.lane.b32.xlu0 %v2654, 8
        %v2677 = vpop.permute.xlu0 %2676
        %2678 = vrot.lane.b32.xlu0 %v2655, 8
        %v2679 = vpop.permute.xlu0 %2678
        %2680 = vrot.lane.b32.xlu0 %v2656, 8
        %v2681 = vpop.permute.xlu0 %2680
        %2682 = vrot.lane.b32.xlu0 %v2657, 8
        %v2683 = vpop.permute.xlu0 %2682
        %2684 = vrot.lane.b32.xlu0 %v2658, 8
        %v2685 = vpop.permute.xlu0 %2684
        %2686 = vrot.lane.b32.xlu0 %v2659, 8
        %v2687 = vpop.permute.xlu0 %2686
        %2688 = vrot.lane.b32.xlu0 %v2660, 8
        %v2689 = vpop.permute.xlu0 %2688
        %2690 = vrot.lane.b32.xlu0 %v2661, 8
        %v2691 = vpop.permute.xlu0 %2690
        %2692 = vrot.lane.b32.xlu0 %v2662, 8
        %v2693 = vpop.permute.xlu0 %2692
        %2694 = vrot.lane.b32.xlu0 %v2663, 8
        %v2695 = vpop.permute.xlu0 %2694
        %v2728 = vunpack.c.l.b16 %v2088
        %v2729 = vunpack.c.l.b16 %v2089
        %v2730 = vunpack.c.l.b16 %v2090
        %v2731 = vunpack.c.l.b16 %v2091
        %v2732 = vunpack.c.l.b16 %v2092
        %v2733 = vunpack.c.l.b16 %v2093
        %v2734 = vunpack.c.l.b16 %v2094
        %v2735 = vunpack.c.l.b16 %v2095
        %v2736 = vunpack.c.l.b16 %v2096
        %v2737 = vunpack.c.l.b16 %v2097
        %v2738 = vunpack.c.l.b16 %v2098
        %v2739 = vunpack.c.l.b16 %v2099
        %v2740 = vunpack.c.l.b16 %v2100
        %v2741 = vunpack.c.l.b16 %v2101
        %v2742 = vunpack.c.l.b16 %v2102
        %v2743 = vunpack.c.l.b16 %v2103
        %v2744 = vunpack.c.l.b16 %v2104
        %v2745 = vunpack.c.l.b16 %v2105
        %v2746 = vunpack.c.l.b16 %v2106
        %v2747 = vunpack.c.l.b16 %v2107
        %v2748 = vunpack.c.l.b16 %v2108
        %v2749 = vunpack.c.l.b16 %v2109
        %v2750 = vunpack.c.l.b16 %v2110
        %v2751 = vunpack.c.l.b16 %v2111
        %v2752 = vunpack.c.l.b16 %v2112
        %v2753 = vunpack.c.l.b16 %v2113
        %v2754 = vunpack.c.l.b16 %v2114
        %v2755 = vunpack.c.l.b16 %v2115
        %v2756 = vunpack.c.l.b16 %v2116
        %v2757 = vunpack.c.l.b16 %v2117
        %v2758 = vunpack.c.l.b16 %v2118
        %v2759 = vunpack.c.l.b16 %v2119
        %v2760 = vpack.c.b16 %v2729, %v2728
        %v2761 = vpack.c.b16 %v2731, %v2730
        %v2762 = vpack.c.b16 %v2733, %v2732
        %v2763 = vpack.c.b16 %v2735, %v2734
        %v2764 = vpack.c.b16 %v2737, %v2736
        %v2765 = vpack.c.b16 %v2739, %v2738
        %v2766 = vpack.c.b16 %v2741, %v2740
        %v2767 = vpack.c.b16 %v2743, %v2742
        %v2768 = vpack.c.b16 %v2745, %v2744
        %v2769 = vpack.c.b16 %v2747, %v2746
        %v2770 = vpack.c.b16 %v2749, %v2748
        %v2771 = vpack.c.b16 %v2751, %v2750
        %v2772 = vpack.c.b16 %v2753, %v2752
        %v2773 = vpack.c.b16 %v2755, %v2754
        %v2774 = vpack.c.b16 %v2757, %v2756
        %v2775 = vpack.c.b16 %v2759, %v2758
        %2776 = vrot.lane.b32.xlu0 %v2760, 16
        %v2777 = vpop.permute.xlu0 %2776
        %2778 = vrot.lane.b32.xlu0 %v2761, 16
        %v2779 = vpop.permute.xlu0 %2778
        %2780 = vrot.lane.b32.xlu0 %v2762, 16
        %v2781 = vpop.permute.xlu0 %2780
        %2782 = vrot.lane.b32.xlu0 %v2763, 16
        %v2783 = vpop.permute.xlu0 %2782
        %2784 = vrot.lane.b32.xlu0 %v2764, 16
        %v2785 = vpop.permute.xlu0 %2784
        %2786 = vrot.lane.b32.xlu0 %v2765, 16
        %v2787 = vpop.permute.xlu0 %2786
        %2788 = vrot.lane.b32.xlu0 %v2766, 16
        %v2789 = vpop.permute.xlu0 %2788
        %2790 = vrot.lane.b32.xlu0 %v2767, 16
        %v2791 = vpop.permute.xlu0 %2790
        %2792 = vrot.lane.b32.xlu0 %v2768, 16
        %v2793 = vpop.permute.xlu0 %2792
        %2794 = vrot.lane.b32.xlu0 %v2769, 16
        %v2795 = vpop.permute.xlu0 %2794
        %2796 = vrot.lane.b32.xlu0 %v2770, 16
        %v2797 = vpop.permute.xlu0 %2796
        %2798 = vrot.lane.b32.xlu0 %v2771, 16
        %v2799 = vpop.permute.xlu0 %2798
        %2800 = vrot.lane.b32.xlu0 %v2772, 16
        %v2801 = vpop.permute.xlu0 %2800
        %2802 = vrot.lane.b32.xlu0 %v2773, 16
        %v2803 = vpop.permute.xlu0 %2802
        %2804 = vrot.lane.b32.xlu0 %v2774, 16
        %v2805 = vpop.permute.xlu0 %2804
        %2806 = vrot.lane.b32.xlu0 %v2775, 16
        %v2807 = vpop.permute.xlu0 %2806
        %v2840 = vunpack.c.l.b16 %v2196
        %v2841 = vunpack.c.l.b16 %v2197
        %v2842 = vunpack.c.l.b16 %v2198
        %v2843 = vunpack.c.l.b16 %v2199
        %v2844 = vunpack.c.l.b16 %v2200
        %v2845 = vunpack.c.l.b16 %v2201
        %v2846 = vunpack.c.l.b16 %v2202
        %v2847 = vunpack.c.l.b16 %v2203
        %v2848 = vunpack.c.l.b16 %v2204
        %v2849 = vunpack.c.l.b16 %v2205
        %v2850 = vunpack.c.l.b16 %v2206
        %v2851 = vunpack.c.l.b16 %v2207
        %v2852 = vunpack.c.l.b16 %v2208
        %v2853 = vunpack.c.l.b16 %v2209
        %v2854 = vunpack.c.l.b16 %v2210
        %v2855 = vunpack.c.l.b16 %v2211
        %v2856 = vunpack.c.l.b16 %v2212
        %v2857 = vunpack.c.l.b16 %v2213
        %v2858 = vunpack.c.l.b16 %v2214
        %v2859 = vunpack.c.l.b16 %v2215
        %v2860 = vunpack.c.l.b16 %v2216
        %v2861 = vunpack.c.l.b16 %v2217
        %v2862 = vunpack.c.l.b16 %v2218
        %v2863 = vunpack.c.l.b16 %v2219
        %v2864 = vunpack.c.l.b16 %v2220
        %v2865 = vunpack.c.l.b16 %v2221
        %v2866 = vunpack.c.l.b16 %v2222
        %v2867 = vunpack.c.l.b16 %v2223
        %v2868 = vunpack.c.l.b16 %v2224
        %v2869 = vunpack.c.l.b16 %v2225
        %v2870 = vunpack.c.l.b16 %v2226
        %v2871 = vunpack.c.l.b16 %v2227
        %v2872 = vpack.c.b16 %v2841, %v2840
        %v2873 = vpack.c.b16 %v2843, %v2842
        %v2874 = vpack.c.b16 %v2845, %v2844
        %v2875 = vpack.c.b16 %v2847, %v2846
        %v2876 = vpack.c.b16 %v2849, %v2848
        %v2877 = vpack.c.b16 %v2851, %v2850
        %v2878 = vpack.c.b16 %v2853, %v2852
        %v2879 = vpack.c.b16 %v2855, %v2854
        %v2880 = vpack.c.b16 %v2857, %v2856
        %v2881 = vpack.c.b16 %v2859, %v2858
        %v2882 = vpack.c.b16 %v2861, %v2860
        %v2883 = vpack.c.b16 %v2863, %v2862
        %v2884 = vpack.c.b16 %v2865, %v2864
        %v2885 = vpack.c.b16 %v2867, %v2866
        %v2886 = vpack.c.b16 %v2869, %v2868
        %v2887 = vpack.c.b16 %v2871, %v2870
        %2888 = vrot.lane.b32.xlu0 %v2872, 24
        %v2889 = vpop.permute.xlu0 %2888
        %2890 = vrot.lane.b32.xlu0 %v2873, 24
        %v2891 = vpop.permute.xlu0 %2890
        %2892 = vrot.lane.b32.xlu0 %v2874, 24
        %v2893 = vpop.permute.xlu0 %2892
        %2894 = vrot.lane.b32.xlu0 %v2875, 24
        %v2895 = vpop.permute.xlu0 %2894
        %2896 = vrot.lane.b32.xlu0 %v2876, 24
        %v2897 = vpop.permute.xlu0 %2896
        %2898 = vrot.lane.b32.xlu0 %v2877, 24
        %v2899 = vpop.permute.xlu0 %2898
        %2900 = vrot.lane.b32.xlu0 %v2878, 24
        %v2901 = vpop.permute.xlu0 %2900
        %2902 = vrot.lane.b32.xlu0 %v2879, 24
        %v2903 = vpop.permute.xlu0 %2902
        %2904 = vrot.lane.b32.xlu0 %v2880, 24
        %v2905 = vpop.permute.xlu0 %2904
        %2906 = vrot.lane.b32.xlu0 %v2881, 24
        %v2907 = vpop.permute.xlu0 %2906
        %2908 = vrot.lane.b32.xlu0 %v2882, 24
        %v2909 = vpop.permute.xlu0 %2908
        %2910 = vrot.lane.b32.xlu0 %v2883, 24
        %v2911 = vpop.permute.xlu0 %2910
        %2912 = vrot.lane.b32.xlu0 %v2884, 24
        %v2913 = vpop.permute.xlu0 %2912
        %2914 = vrot.lane.b32.xlu0 %v2885, 24
        %v2915 = vpop.permute.xlu0 %2914
        %2916 = vrot.lane.b32.xlu0 %v2886, 24
        %v2917 = vpop.permute.xlu0 %2916
        %2918 = vrot.lane.b32.xlu0 %v2887, 24
        %v2919 = vpop.permute.xlu0 %2918
        %v2924 = vunpack.c.l.b16 %v2121
        %v2925 = vunpack.c.l.b16 %v2123
        %v2926 = vunpack.c.l.b16 %v2125
        %v2927 = vunpack.c.l.b16 %v2127
        %v2928 = vpack.c.b16 %v2618, %v2617
        %v2929 = vpack.c.b16 %v2620, %v2619
        %v2930 = vpack.c.b16 %v2622, %v2621
        %v2931 = vpack.c.b16 %v2924, %v2623
        %v2932 = vpack.c.b16 %v2626, %v2625
        %v2933 = vpack.c.b16 %v2628, %v2627
        %v2934 = vpack.c.b16 %v2630, %v2629
        %v2935 = vpack.c.b16 %v2925, %v2631
        %v2936 = vpack.c.b16 %v2634, %v2633
        %v2937 = vpack.c.b16 %v2636, %v2635
        %v2938 = vpack.c.b16 %v2638, %v2637
        %v2939 = vpack.c.b16 %v2926, %v2639
        %v2940 = vpack.c.b16 %v2642, %v2641
        %v2941 = vpack.c.b16 %v2644, %v2643
        %v2942 = vpack.c.b16 %v2646, %v2645
        %v2943 = vpack.c.b16 %v2927, %v2647
        %2944 = vrot.lane.b32.xlu0 %v2928, 32
        %v2945 = vpop.permute.xlu0 %2944
        %2946 = vrot.lane.b32.xlu0 %v2929, 32
        %v2947 = vpop.permute.xlu0 %2946
        %2948 = vrot.lane.b32.xlu0 %v2930, 32
        %v2949 = vpop.permute.xlu0 %2948
        %2950 = vrot.lane.b32.xlu0 %v2931, 32
        %v2951 = vpop.permute.xlu0 %2950
        %2952 = vrot.lane.b32.xlu0 %v2932, 32
        %v2953 = vpop.permute.xlu0 %2952
        %2954 = vrot.lane.b32.xlu0 %v2933, 32
        %v2955 = vpop.permute.xlu0 %2954
        %2956 = vrot.lane.b32.xlu0 %v2934, 32
        %v2957 = vpop.permute.xlu0 %2956
        %2958 = vrot.lane.b32.xlu0 %v2935, 32
        %v2959 = vpop.permute.xlu0 %2958
        %2960 = vrot.lane.b32.xlu0 %v2936, 32
        %v2961 = vpop.permute.xlu0 %2960
        %2962 = vrot.lane.b32.xlu0 %v2937, 32
        %v2963 = vpop.permute.xlu0 %2962
        %2964 = vrot.lane.b32.xlu0 %v2938, 32
        %v2965 = vpop.permute.xlu0 %2964
        %2966 = vrot.lane.b32.xlu0 %v2939, 32
        %v2967 = vpop.permute.xlu0 %2966
        %2968 = vrot.lane.b32.xlu0 %v2940, 32
        %v2969 = vpop.permute.xlu0 %2968
        %2970 = vrot.lane.b32.xlu0 %v2941, 32
        %v2971 = vpop.permute.xlu0 %2970
        %2972 = vrot.lane.b32.xlu0 %v2942, 32
        %v2973 = vpop.permute.xlu0 %2972
        %2974 = vrot.lane.b32.xlu0 %v2943, 32
        %v2975 = vpop.permute.xlu0 %2974
        %v3008 = vunpack.c.l.b16 %v2280
        %v3009 = vunpack.c.l.b16 %v2281
        %v3010 = vunpack.c.l.b16 %v2282
        %v3011 = vunpack.c.l.b16 %v2283
        %v3012 = vunpack.c.l.b16 %v2284
        %v3013 = vunpack.c.l.b16 %v2285
        %v3014 = vunpack.c.l.b16 %v2286
        %v3015 = vunpack.c.l.b16 %v2287
        %v3016 = vunpack.c.l.b16 %v2288
        %v3017 = vunpack.c.l.b16 %v2289
        %v3018 = vunpack.c.l.b16 %v2290
        %v3019 = vunpack.c.l.b16 %v2291
        %v3020 = vunpack.c.l.b16 %v2292
        %v3021 = vunpack.c.l.b16 %v2293
        %v3022 = vunpack.c.l.b16 %v2294
        %v3023 = vunpack.c.l.b16 %v2295
        %v3024 = vunpack.c.l.b16 %v2296
        %v3025 = vunpack.c.l.b16 %v2297
        %v3026 = vunpack.c.l.b16 %v2298
        %v3027 = vunpack.c.l.b16 %v2299
        %v3028 = vunpack.c.l.b16 %v2300
        %v3029 = vunpack.c.l.b16 %v2301
        %v3030 = vunpack.c.l.b16 %v2302
        %v3031 = vunpack.c.l.b16 %v2303
        %v3032 = vunpack.c.l.b16 %v2304
        %v3033 = vunpack.c.l.b16 %v2305
        %v3034 = vunpack.c.l.b16 %v2306
        %v3035 = vunpack.c.l.b16 %v2307
        %v3036 = vunpack.c.l.b16 %v2308
        %v3037 = vunpack.c.l.b16 %v2309
        %v3038 = vunpack.c.l.b16 %v2310
        %v3039 = vunpack.c.l.b16 %v2311
        %v3040 = vpack.c.b16 %v3009, %v3008
        %v3041 = vpack.c.b16 %v3011, %v3010
        %v3042 = vpack.c.b16 %v3013, %v3012
        %v3043 = vpack.c.b16 %v3015, %v3014
        %v3044 = vpack.c.b16 %v3017, %v3016
        %v3045 = vpack.c.b16 %v3019, %v3018
        %v3046 = vpack.c.b16 %v3021, %v3020
        %v3047 = vpack.c.b16 %v3023, %v3022
        %v3048 = vpack.c.b16 %v3025, %v3024
        %v3049 = vpack.c.b16 %v3027, %v3026
        %v3050 = vpack.c.b16 %v3029, %v3028
        %v3051 = vpack.c.b16 %v3031, %v3030
        %v3052 = vpack.c.b16 %v3033, %v3032
        %v3053 = vpack.c.b16 %v3035, %v3034
        %v3054 = vpack.c.b16 %v3037, %v3036
        %v3055 = vpack.c.b16 %v3039, %v3038
        %3056 = vrot.lane.b32.xlu0 %v3040, 40
        %v3057 = vpop.permute.xlu0 %3056
        %3058 = vrot.lane.b32.xlu0 %v3041, 40
        %v3059 = vpop.permute.xlu0 %3058
        %3060 = vrot.lane.b32.xlu0 %v3042, 40
        %v3061 = vpop.permute.xlu0 %3060
        %3062 = vrot.lane.b32.xlu0 %v3043, 40
        %v3063 = vpop.permute.xlu0 %3062
        %3064 = vrot.lane.b32.xlu0 %v3044, 40
        %v3065 = vpop.permute.xlu0 %3064
        %3066 = vrot.lane.b32.xlu0 %v3045, 40
        %v3067 = vpop.permute.xlu0 %3066
        %3068 = vrot.lane.b32.xlu0 %v3046, 40
        %v3069 = vpop.permute.xlu0 %3068
        %3070 = vrot.lane.b32.xlu0 %v3047, 40
        %v3071 = vpop.permute.xlu0 %3070
        %3072 = vrot.lane.b32.xlu0 %v3048, 40
        %v3073 = vpop.permute.xlu0 %3072
        %3074 = vrot.lane.b32.xlu0 %v3049, 40
        %v3075 = vpop.permute.xlu0 %3074
        %3076 = vrot.lane.b32.xlu0 %v3050, 40
        %v3077 = vpop.permute.xlu0 %3076
        %3078 = vrot.lane.b32.xlu0 %v3051, 40
        %v3079 = vpop.permute.xlu0 %3078
        %3080 = vrot.lane.b32.xlu0 %v3052, 40
        %v3081 = vpop.permute.xlu0 %3080
        %3082 = vrot.lane.b32.xlu0 %v3053, 40
        %v3083 = vpop.permute.xlu0 %3082
        %3084 = vrot.lane.b32.xlu0 %v3054, 40
        %v3085 = vpop.permute.xlu0 %3084
        %3086 = vrot.lane.b32.xlu0 %v3055, 40
        %v3087 = vpop.permute.xlu0 %3086
        %v3120 = vunpack.c.l.b16 %v2388
        %v3121 = vunpack.c.l.b16 %v2389
        %v3122 = vunpack.c.l.b16 %v2390
        %v3123 = vunpack.c.l.b16 %v2391
        %v3124 = vunpack.c.l.b16 %v2392
        %v3125 = vunpack.c.l.b16 %v2393
        %v3126 = vunpack.c.l.b16 %v2394
        %v3127 = vunpack.c.l.b16 %v2395
        %v3128 = vunpack.c.l.b16 %v2396
        %v3129 = vunpack.c.l.b16 %v2397
        %v3130 = vunpack.c.l.b16 %v2398
        %v3131 = vunpack.c.l.b16 %v2399
        %v3132 = vunpack.c.l.b16 %v2400
        %v3133 = vunpack.c.l.b16 %v2401
        %v3134 = vunpack.c.l.b16 %v2402
        %v3135 = vunpack.c.l.b16 %v2403
        %v3136 = vunpack.c.l.b16 %v2404
        %v3137 = vunpack.c.l.b16 %v2405
        %v3138 = vunpack.c.l.b16 %v2406
        %v3139 = vunpack.c.l.b16 %v2407
        %v3140 = vunpack.c.l.b16 %v2408
        %v3141 = vunpack.c.l.b16 %v2409
        %v3142 = vunpack.c.l.b16 %v2410
        %v3143 = vunpack.c.l.b16 %v2411
        %v3144 = vunpack.c.l.b16 %v2412
        %v3145 = vunpack.c.l.b16 %v2413
        %v3146 = vunpack.c.l.b16 %v2414
        %v3147 = vunpack.c.l.b16 %v2415
        %v3148 = vunpack.c.l.b16 %v2416
        %v3149 = vunpack.c.l.b16 %v2417
        %v3150 = vunpack.c.l.b16 %v2418
        %v3151 = vunpack.c.l.b16 %v2419
        %v3152 = vpack.c.b16 %v3121, %v3120
        %v3153 = vpack.c.b16 %v3123, %v3122
        %v3154 = vpack.c.b16 %v3125, %v3124
        %v3155 = vpack.c.b16 %v3127, %v3126
        %v3156 = vpack.c.b16 %v3129, %v3128
        %v3157 = vpack.c.b16 %v3131, %v3130
        %v3158 = vpack.c.b16 %v3133, %v3132
        %v3159 = vpack.c.b16 %v3135, %v3134
        %v3160 = vpack.c.b16 %v3137, %v3136
        %v3161 = vpack.c.b16 %v3139, %v3138
        %v3162 = vpack.c.b16 %v3141, %v3140
        %v3163 = vpack.c.b16 %v3143, %v3142
        %v3164 = vpack.c.b16 %v3145, %v3144
        %v3165 = vpack.c.b16 %v3147, %v3146
        %v3166 = vpack.c.b16 %v3149, %v3148
        %v3167 = vpack.c.b16 %v3151, %v3150
        %3168 = vrot.lane.b32.xlu0 %v3152, 48
        %v3169 = vpop.permute.xlu0 %3168
        %3170 = vrot.lane.b32.xlu0 %v3153, 48
        %v3171 = vpop.permute.xlu0 %3170
        %3172 = vrot.lane.b32.xlu0 %v3154, 48
        %v3173 = vpop.permute.xlu0 %3172
        %3174 = vrot.lane.b32.xlu0 %v3155, 48
        %v3175 = vpop.permute.xlu0 %3174
        %3176 = vrot.lane.b32.xlu0 %v3156, 48
        %v3177 = vpop.permute.xlu0 %3176
        %3178 = vrot.lane.b32.xlu0 %v3157, 48
        %v3179 = vpop.permute.xlu0 %3178
        %3180 = vrot.lane.b32.xlu0 %v3158, 48
        %v3181 = vpop.permute.xlu0 %3180
        %3182 = vrot.lane.b32.xlu0 %v3159, 48
        %v3183 = vpop.permute.xlu0 %3182
        %3184 = vrot.lane.b32.xlu0 %v3160, 48
        %v3185 = vpop.permute.xlu0 %3184
        %3186 = vrot.lane.b32.xlu0 %v3161, 48
        %v3187 = vpop.permute.xlu0 %3186
        %3188 = vrot.lane.b32.xlu0 %v3162, 48
        %v3189 = vpop.permute.xlu0 %3188
        %3190 = vrot.lane.b32.xlu0 %v3163, 48
        %v3191 = vpop.permute.xlu0 %3190
        %3192 = vrot.lane.b32.xlu0 %v3164, 48
        %v3193 = vpop.permute.xlu0 %3192
        %3194 = vrot.lane.b32.xlu0 %v3165, 48
        %v3195 = vpop.permute.xlu0 %3194
        %3196 = vrot.lane.b32.xlu0 %v3166, 48
        %v3197 = vpop.permute.xlu0 %3196
        %3198 = vrot.lane.b32.xlu0 %v3167, 48
        %v3199 = vpop.permute.xlu0 %3198
        %v3204 = vunpack.c.l.b16 %v2313
        %v3205 = vunpack.c.l.b16 %v2315
        %v3206 = vunpack.c.l.b16 %v2317
        %v3207 = vunpack.c.l.b16 %v2319
        %v3208 = vpack.c.b16 %v3204, %v2924
        %v3209 = vpack.c.b16 %v3205, %v2925
        %v3210 = vpack.c.b16 %v3206, %v2926
        %v3211 = vpack.c.b16 %v3207, %v2927
        %3212 = vrot.lane.b32.xlu0 %v2649, 56
        %v3213 = vpop.permute.xlu0 %3212
        %3214 = vrot.lane.b32.xlu0 %v2650, 56
        %v3215 = vpop.permute.xlu0 %3214
        %3216 = vrot.lane.b32.xlu0 %v2651, 56
        %v3217 = vpop.permute.xlu0 %3216
        %3218 = vrot.lane.b32.xlu0 %v3208, 56
        %v3219 = vpop.permute.xlu0 %3218
        %3220 = vrot.lane.b32.xlu0 %v2653, 56
        %v3221 = vpop.permute.xlu0 %3220
        %3222 = vrot.lane.b32.xlu0 %v2654, 56
        %v3223 = vpop.permute.xlu0 %3222
        %3224 = vrot.lane.b32.xlu0 %v2655, 56
        %v3225 = vpop.permute.xlu0 %3224
        %3226 = vrot.lane.b32.xlu0 %v3209, 56
        %v3227 = vpop.permute.xlu0 %3226
        %3228 = vrot.lane.b32.xlu0 %v2657, 56
        %v3229 = vpop.permute.xlu0 %3228
        %3230 = vrot.lane.b32.xlu0 %v2658, 56
        %v3231 = vpop.permute.xlu0 %3230
        %3232 = vrot.lane.b32.xlu0 %v2659, 56
        %v3233 = vpop.permute.xlu0 %3232
        %3234 = vrot.lane.b32.xlu0 %v3210, 56
        %v3235 = vpop.permute.xlu0 %3234
        %3236 = vrot.lane.b32.xlu0 %v2661, 56
        %v3237 = vpop.permute.xlu0 %3236
        %3238 = vrot.lane.b32.xlu0 %v2662, 56
        %v3239 = vpop.permute.xlu0 %3238
        %3240 = vrot.lane.b32.xlu0 %v2663, 56
        %v3241 = vpop.permute.xlu0 %3240
        %3242 = vrot.lane.b32.xlu0 %v3211, 56
        %v3243 = vpop.permute.xlu0 %3242
        %v3276 = vunpack.c.l.b16 %v2472
        %v3277 = vunpack.c.l.b16 %v2473
        %v3278 = vunpack.c.l.b16 %v2474
        %v3279 = vunpack.c.l.b16 %v2475
        %v3280 = vunpack.c.l.b16 %v2476
        %v3281 = vunpack.c.l.b16 %v2477
        %v3282 = vunpack.c.l.b16 %v2478
        %v3283 = vunpack.c.l.b16 %v2479
        %v3284 = vunpack.c.l.b16 %v2480
        %v3285 = vunpack.c.l.b16 %v2481
        %v3286 = vunpack.c.l.b16 %v2482
        %v3287 = vunpack.c.l.b16 %v2483
        %v3288 = vunpack.c.l.b16 %v2484
        %v3289 = vunpack.c.l.b16 %v2485
        %v3290 = vunpack.c.l.b16 %v2486
        %v3291 = vunpack.c.l.b16 %v2487
        %v3292 = vunpack.c.l.b16 %v2488
        %v3293 = vunpack.c.l.b16 %v2489
        %v3294 = vunpack.c.l.b16 %v2490
        %v3295 = vunpack.c.l.b16 %v2491
        %v3296 = vunpack.c.l.b16 %v2492
        %v3297 = vunpack.c.l.b16 %v2493
        %v3298 = vunpack.c.l.b16 %v2494
        %v3299 = vunpack.c.l.b16 %v2495
        %v3300 = vunpack.c.l.b16 %v2496
        %v3301 = vunpack.c.l.b16 %v2497
        %v3302 = vunpack.c.l.b16 %v2498
        %v3303 = vunpack.c.l.b16 %v2499
        %v3304 = vunpack.c.l.b16 %v2500
        %v3305 = vunpack.c.l.b16 %v2501
        %v3306 = vunpack.c.l.b16 %v2502
        %v3307 = vunpack.c.l.b16 %v2503
        %v3308 = vpack.c.b16 %v3277, %v3276
        %v3309 = vpack.c.b16 %v3279, %v3278
        %v3310 = vpack.c.b16 %v3281, %v3280
        %v3311 = vpack.c.b16 %v3283, %v3282
        %v3312 = vpack.c.b16 %v3285, %v3284
        %v3313 = vpack.c.b16 %v3287, %v3286
        %v3314 = vpack.c.b16 %v3289, %v3288
        %v3315 = vpack.c.b16 %v3291, %v3290
        %v3316 = vpack.c.b16 %v3293, %v3292
        %v3317 = vpack.c.b16 %v3295, %v3294
        %v3318 = vpack.c.b16 %v3297, %v3296
        %v3319 = vpack.c.b16 %v3299, %v3298
        %v3320 = vpack.c.b16 %v3301, %v3300
        %v3321 = vpack.c.b16 %v3303, %v3302
        %v3322 = vpack.c.b16 %v3305, %v3304
        %v3323 = vpack.c.b16 %v3307, %v3306
        %3324 = vrot.lane.b32.xlu0 %v3308, 64
        %v3325 = vpop.permute.xlu0 %3324
        %3326 = vrot.lane.b32.xlu0 %v3309, 64
        %v3327 = vpop.permute.xlu0 %3326
        %3328 = vrot.lane.b32.xlu0 %v3310, 64
        %v3329 = vpop.permute.xlu0 %3328
        %3330 = vrot.lane.b32.xlu0 %v3311, 64
        %v3331 = vpop.permute.xlu0 %3330
        %3332 = vrot.lane.b32.xlu0 %v3312, 64
        %v3333 = vpop.permute.xlu0 %3332
        %3334 = vrot.lane.b32.xlu0 %v3313, 64
        %v3335 = vpop.permute.xlu0 %3334
        %3336 = vrot.lane.b32.xlu0 %v3314, 64
        %v3337 = vpop.permute.xlu0 %3336
        %3338 = vrot.lane.b32.xlu0 %v3315, 64
        %v3339 = vpop.permute.xlu0 %3338
        %3340 = vrot.lane.b32.xlu0 %v3316, 64
        %v3341 = vpop.permute.xlu0 %3340
        %3342 = vrot.lane.b32.xlu0 %v3317, 64
        %v3343 = vpop.permute.xlu0 %3342
        %3344 = vrot.lane.b32.xlu0 %v3318, 64
        %v3345 = vpop.permute.xlu0 %3344
        %3346 = vrot.lane.b32.xlu0 %v3319, 64
        %v3347 = vpop.permute.xlu0 %3346
        %3348 = vrot.lane.b32.xlu0 %v3320, 64
        %v3349 = vpop.permute.xlu0 %3348
        %3350 = vrot.lane.b32.xlu0 %v3321, 64
        %v3351 = vpop.permute.xlu0 %3350
        %3352 = vrot.lane.b32.xlu0 %v3322, 64
        %v3353 = vpop.permute.xlu0 %3352
        %3354 = vrot.lane.b32.xlu0 %v3323, 64
        %v3355 = vpop.permute.xlu0 %3354
        %vm3356 = vcmask 64512
        %v3359 = vsel %vm3356, %v2568, %v2665
        %v3362 = vsel %vm3356, %v2569, %v2667
        %v3365 = vsel %vm3356, %v2570, %v2669
        %v3368 = vsel %vm3356, %v2571, %v2671
        %v3371 = vsel %vm3356, %v2572, %v2673
        %v3374 = vsel %vm3356, %v2573, %v2675
        %v3377 = vsel %vm3356, %v2574, %v2677
        %v3380 = vsel %vm3356, %v2575, %v2679
        %v3383 = vsel %vm3356, %v2576, %v2681
        %v3386 = vsel %vm3356, %v2577, %v2683
        %v3389 = vsel %vm3356, %v2578, %v2685
        %v3392 = vsel %vm3356, %v2579, %v2687
        %v3395 = vsel %vm3356, %v2580, %v2689
        %v3398 = vsel %vm3356, %v2581, %v2691
        %v3401 = vsel %vm3356, %v2582, %v2693
        %v3404 = vsel %vm3356, %v2583, %v2695
        %vm3405 = vcmask 130048
        %v3407 = vsel %vm3405, %v3359, %v2777
        %v3409 = vsel %vm3405, %v3362, %v2779
        %v3411 = vsel %vm3405, %v3365, %v2781
        %v3413 = vsel %vm3405, %v3368, %v2783
        %v3415 = vsel %vm3405, %v3371, %v2785
        %v3417 = vsel %vm3405, %v3374, %v2787
        %v3419 = vsel %vm3405, %v3377, %v2789
        %v3421 = vsel %vm3405, %v3380, %v2791
        %v3423 = vsel %vm3405, %v3383, %v2793
        %v3425 = vsel %vm3405, %v3386, %v2795
        %v3427 = vsel %vm3405, %v3389, %v2797
        %v3429 = vsel %vm3405, %v3392, %v2799
        %v3431 = vsel %vm3405, %v3395, %v2801
        %v3433 = vsel %vm3405, %v3398, %v2803
        %v3435 = vsel %vm3405, %v3401, %v2805
        %v3437 = vsel %vm3405, %v3404, %v2807
        %vm3438 = vcmask 195584
        %v3440 = vsel %vm3438, %v3407, %v2889
        %v3442 = vsel %vm3438, %v3409, %v2891
        %v3444 = vsel %vm3438, %v3411, %v2893
        %v3446 = vsel %vm3438, %v3413, %v2895
        %v3448 = vsel %vm3438, %v3415, %v2897
        %v3450 = vsel %vm3438, %v3417, %v2899
        %v3452 = vsel %vm3438, %v3419, %v2901
        %v3454 = vsel %vm3438, %v3421, %v2903
        %v3456 = vsel %vm3438, %v3423, %v2905
        %v3458 = vsel %vm3438, %v3425, %v2907
        %v3460 = vsel %vm3438, %v3427, %v2909
        %v3462 = vsel %vm3438, %v3429, %v2911
        %v3464 = vsel %vm3438, %v3431, %v2913
        %v3466 = vsel %vm3438, %v3433, %v2915
        %v3468 = vsel %vm3438, %v3435, %v2917
        %v3470 = vsel %vm3438, %v3437, %v2919
        %vm3471 = vcmask 261120
        %v3473 = vsel %vm3471, %v3440, %v2945
        %v3475 = vsel %vm3471, %v3442, %v2947
        %v3477 = vsel %vm3471, %v3444, %v2949
        %v3479 = vsel %vm3471, %v3446, %v2951
        %v3481 = vsel %vm3471, %v3448, %v2953
        %v3483 = vsel %vm3471, %v3450, %v2955
        %v3485 = vsel %vm3471, %v3452, %v2957
        %v3487 = vsel %vm3471, %v3454, %v2959
        %v3489 = vsel %vm3471, %v3456, %v2961
        %v3491 = vsel %vm3471, %v3458, %v2963
        %v3493 = vsel %vm3471, %v3460, %v2965
        %v3495 = vsel %vm3471, %v3462, %v2967
        %v3497 = vsel %vm3471, %v3464, %v2969
        %v3499 = vsel %vm3471, %v3466, %v2971
        %v3501 = vsel %vm3471, %v3468, %v2973
        %v3503 = vsel %vm3471, %v3470, %v2975
        %vm3504 = vcmask 326656
        %v3506 = vsel %vm3504, %v3473, %v3057
        %v3508 = vsel %vm3504, %v3475, %v3059
        %v3510 = vsel %vm3504, %v3477, %v3061
        %v3512 = vsel %vm3504, %v3479, %v3063
        %v3514 = vsel %vm3504, %v3481, %v3065
        %v3516 = vsel %vm3504, %v3483, %v3067
        %v3518 = vsel %vm3504, %v3485, %v3069
        %v3520 = vsel %vm3504, %v3487, %v3071
        %v3522 = vsel %vm3504, %v3489, %v3073
        %v3524 = vsel %vm3504, %v3491, %v3075
        %v3526 = vsel %vm3504, %v3493, %v3077
        %v3528 = vsel %vm3504, %v3495, %v3079
        %v3530 = vsel %vm3504, %v3497, %v3081
        %v3532 = vsel %vm3504, %v3499, %v3083
        %v3534 = vsel %vm3504, %v3501, %v3085
        %v3536 = vsel %vm3504, %v3503, %v3087
        %vm3537 = vcmask 392192
        %v3539 = vsel %vm3537, %v3506, %v3169
        %v3541 = vsel %vm3537, %v3508, %v3171
        %v3543 = vsel %vm3537, %v3510, %v3173
        %v3545 = vsel %vm3537, %v3512, %v3175
        %v3547 = vsel %vm3537, %v3514, %v3177
        %v3549 = vsel %vm3537, %v3516, %v3179
        %v3551 = vsel %vm3537, %v3518, %v3181
        %v3553 = vsel %vm3537, %v3520, %v3183
        %v3555 = vsel %vm3537, %v3522, %v3185
        %v3557 = vsel %vm3537, %v3524, %v3187
        %v3559 = vsel %vm3537, %v3526, %v3189
        %v3561 = vsel %vm3537, %v3528, %v3191
        %v3563 = vsel %vm3537, %v3530, %v3193
        %v3565 = vsel %vm3537, %v3532, %v3195
        %v3567 = vsel %vm3537, %v3534, %v3197
        %v3569 = vsel %vm3537, %v3536, %v3199
        %vm3570 = vcmask 457728
        %v3572 = vsel %vm3570, %v3539, %v3213
        %v3574 = vsel %vm3570, %v3541, %v3215
        %v3576 = vsel %vm3570, %v3543, %v3217
        %v3578 = vsel %vm3570, %v3545, %v3219
        %v3580 = vsel %vm3570, %v3547, %v3221
        %v3582 = vsel %vm3570, %v3549, %v3223
        %v3584 = vsel %vm3570, %v3551, %v3225
        %v3586 = vsel %vm3570, %v3553, %v3227
        %v3588 = vsel %vm3570, %v3555, %v3229
        %v3590 = vsel %vm3570, %v3557, %v3231
        %v3592 = vsel %vm3570, %v3559, %v3233
        %v3594 = vsel %vm3570, %v3561, %v3235
        %v3596 = vsel %vm3570, %v3563, %v3237
        %v3598 = vsel %vm3570, %v3565, %v3239
        %v3600 = vsel %vm3570, %v3567, %v3241
        %v3602 = vsel %vm3570, %v3569, %v3243
        %vm3603 = vcmask 523264
        %v3605 = vsel %vm3603, %v3572, %v3325
        %v3607 = vsel %vm3603, %v3574, %v3327
        %v3609 = vsel %vm3603, %v3576, %v3329
        %v3611 = vsel %vm3603, %v3578, %v3331
        %v3613 = vsel %vm3603, %v3580, %v3333
        %v3615 = vsel %vm3603, %v3582, %v3335
        %v3617 = vsel %vm3603, %v3584, %v3337
        %v3619 = vsel %vm3603, %v3586, %v3339
        %v3621 = vsel %vm3603, %v3588, %v3341
        %v3623 = vsel %vm3603, %v3590, %v3343
        %v3625 = vsel %vm3603, %v3592, %v3345
        %v3627 = vsel %vm3603, %v3594, %v3347
        %v3629 = vsel %vm3603, %v3596, %v3349
        %v3631 = vsel %vm3603, %v3598, %v3351
        %v3633 = vsel %vm3603, %v3600, %v3353
        %v3635 = vsel %vm3603, %v3602, %v3355
        %v3636 = vld [vmem:[%s3] sm:$0xf]
        %v3637 = vld [vmem:[%s3 + $0x4] sm:$0xf]
        %v3638 = vld [vmem:[%s3 + $0x8] sm:$0xf]
        %v3639 = vld [vmem:[%s3 + $0xc] sm:$0xf]
        %v3640 = vld [vmem:[%s3 + $0x10] sm:$0xf]
        %v3641 = vld [vmem:[%s3 + $0x14] sm:$0xf]
        %v3642 = vld [vmem:[%s3 + $0x18] sm:$0xf]
        %v3643 = vld [vmem:[%s3 + $0x1c] sm:$0xf]
        %v3644 = vld [vmem:[%s3 + $0x20] sm:$0xf]
        %v3645 = vld [vmem:[%s4] sm:$0x1]
        %v3647 = vlaneseq
        %v3648 = vshrl.u32 %v3647, 7
        %v3649 = vsub.s32 0, %v3648
        %v3650 = vrot.slane %v3645, %v3649
        %v3661 = vunpack.c.l.b16 %v3636
        %v3662 = vunpack.c.l.b16 %v3637
        %v3663 = vunpack.c.l.b16 %v3638
        %v3664 = vunpack.c.l.b16 %v3639
        %v3665 = vunpack.c.l.b16 %v3640
        %v3666 = vunpack.c.l.b16 %v3641
        %v3667 = vunpack.c.l.b16 %v3642
        %v3668 = vunpack.c.l.b16 %v3643
        %v3669 = vunpack.c.l.b16 %v3644
        %v3670 = vpack.c.b16 %v3662, %v3661
        %v3671 = vpack.c.b16 %v3664, %v3663
        %v3672 = vpack.c.b16 %v3666, %v3665
        %v3673 = vpack.c.b16 %v3668, %v3667
        %v3674 = vpack.c.b16 %v3669, %v3669
        %vm3679 = vcmask 588800
        %v3680 = vsel %vm3679, %v3605, 0
        %v3682 = vsel %vm3679, %v3607, 0
        %v3684 = vsel %vm3679, %v3609, 0
        %v3686 = vsel %vm3679, %v3611, 0
        %v3688 = vsel %vm3679, %v3613, 0
        %v3690 = vsel %vm3679, %v3615, 0
        %v3692 = vsel %vm3679, %v3617, 0
        %v3694 = vsel %vm3679, %v3619, 0
        %v3696 = vsel %vm3679, %v3621, 0
        %v3698 = vsel %vm3679, %v3623, 0
        %v3700 = vsel %vm3679, %v3625, 0
        %v3702 = vsel %vm3679, %v3627, 0
        %v3704 = vsel %vm3679, %v3629, 0
        %v3706 = vsel %vm3679, %v3631, 0
        %v3708 = vsel %vm3679, %v3633, 0
        %v3710 = vsel %vm3679, %v3635, 0
        %vm3712 = vcmask 1043456
        %v3714 = vsel %vm3712, %v3674, 0
        %3716 = vmatprep.subr.bf16.mxu0 0
        %3717 = vmatpush1.bf16.msra.mxu0 %v3670
        %3718 = vmatprep.subr.bf16.mxu0 0
        %3719 = vmatpush1.bf16.msra.mxu0 %v3671
        %3720 = vmatprep.subr.bf16.mxu0 0
        %3721 = vmatpush1.bf16.msra.mxu0 %v3672
        %3722 = vmatprep.subr.bf16.mxu0 0
        %3723 = vmatpush1.bf16.msra.mxu0 %v3673
        %3724 = vmatprep.subr.bf16.mxu0 0
        %3725 = vmatpush1.bf16.msra.mxu0 %v3714
        %3726 = vmatprep.subr.bf16.mxu0 0
        %3727 = vmatpush1.bf16.msra.mxu0 0
        %3728 = vmatprep.subr.bf16.mxu0 0
        %3729 = vmatpush1.bf16.msra.mxu0 0
        %3730 = vmatprep.subr.bf16.mxu0 0
        %3731 = vmatpush1.bf16.msra.mxu0 0
        %3732 = vmatprep.subr.bf16.mxu0 0
        %3733 = vmatpush1.bf16.msra.mxu0 0
        %3734 = vmatprep.subr.bf16.mxu0 0
        %3735 = vmatpush1.bf16.msra.mxu0 0
        %3736 = vmatprep.subr.bf16.mxu0 0
        %3737 = vmatpush1.bf16.msra.mxu0 0
        %3738 = vmatprep.subr.bf16.mxu0 0
        %3739 = vmatpush1.bf16.msra.mxu0 0
        %3740 = vmatprep.subr.bf16.mxu0 0
        %3741 = vmatpush1.bf16.msra.mxu0 0
        %3742 = vmatprep.subr.bf16.mxu0 0
        %3743 = vmatpush1.bf16.msra.mxu0 0
        %3744 = vmatprep.subr.bf16.mxu0 0
        %3745 = vmatpush1.bf16.msra.mxu0 0
        %3746 = vmatprep.subr.bf16.mxu0 0
        %3747 = vmatpush1.bf16.msra.mxu0 0
        %3748 = vmatprep.mubr.bf16.mxu0 0
        %3749 = vmatmul.mubr.bf16.gmra.mrb[0].mxu0 %v3680
        %v3750 = vpop.f32.mrb[0].mxu0
        %v3751 = vadd.f32 %v3650, %v3750
        %v3752 = vpop.f32.mrb[0].mxu0
        %v3753 = vpop.f32.mrb[0].mxu0
        %v3754 = vadd.f32 %v3650, %v3753
        %v3755 = vpop.f32.mrb[0].mxu0
        %3756 = vmatprep.mubr.bf16.mxu0 0
        %3757 = vmatmul.mubr.bf16.gmra.mrb[0].mxu0 %v3682
        %v3758 = vpop.f32.mrb[0].mxu0
        %v3759 = vadd.f32 %v3650, %v3758
        %v3760 = vpop.f32.mrb[0].mxu0
        %v3761 = vpop.f32.mrb[0].mxu0
        %v3762 = vadd.f32 %v3650, %v3761
        %v3763 = vpop.f32.mrb[0].mxu0
        %3764 = vmatprep.mubr.bf16.mxu0 0
        %3765 = vmatmul.mubr.bf16.gmra.mrb[0].mxu0 %v3684
        %v3766 = vpop.f32.mrb[0].mxu0
        %v3767 = vadd.f32 %v3650, %v3766
        %v3768 = vpop.f32.mrb[0].mxu0
        %v3769 = vpop.f32.mrb[0].mxu0
        %v3770 = vadd.f32 %v3650, %v3769
        %v3771 = vpop.f32.mrb[0].mxu0
        %3772 = vmatprep.mubr.bf16.mxu0 0
        %3773 = vmatmul.mubr.bf16.gmra.mrb[0].mxu0 %v3686
        %v3774 = vpop.f32.mrb[0].mxu0
        %v3775 = vadd.f32 %v3650, %v3774
        %v3776 = vpop.f32.mrb[0].mxu0
        %v3777 = vpop.f32.mrb[0].mxu0
        %v3778 = vadd.f32 %v3650, %v3777
        %v3779 = vpop.f32.mrb[0].mxu0
        %3780 = vmatprep.mubr.bf16.mxu0 0
        %3781 = vmatmul.mubr.bf16.gmra.mrb[0].mxu0 %v3688
        %v3782 = vpop.f32.mrb[0].mxu0
        %v3783 = vadd.f32 %v3650, %v3782
        %v3784 = vpop.f32.mrb[0].mxu0
        %v3785 = vpop.f32.mrb[0].mxu0
        %v3786 = vadd.f32 %v3650, %v3785
        %v3787 = vpop.f32.mrb[0].mxu0
        %3788 = vmatprep.mubr.bf16.mxu0 0
        %3789 = vmatmul.mubr.bf16.gmra.mrb[0].mxu0 %v3690
        %v3790 = vpop.f32.mrb[0].mxu0
        %v3791 = vadd.f32 %v3650, %v3790
        %v3792 = vpop.f32.mrb[0].mxu0
        %v3793 = vpop.f32.mrb[0].mxu0
        %v3794 = vadd.f32 %v3650, %v3793
        %v3795 = vpop.f32.mrb[0].mxu0
        %3796 = vmatprep.mubr.bf16.mxu0 0
        %3797 = vmatmul.mubr.bf16.gmra.mrb[0].mxu0 %v3692
        %v3798 = vpop.f32.mrb[0].mxu0
        %v3799 = vadd.f32 %v3650, %v3798
        %v3800 = vpop.f32.mrb[0].mxu0
        %v3801 = vpop.f32.mrb[0].mxu0
        %v3802 = vadd.f32 %v3650, %v3801
        %v3803 = vpop.f32.mrb[0].mxu0
        %3804 = vmatprep.mubr.bf16.mxu0 0
        %3805 = vmatmul.mubr.bf16.gmra.mrb[0].mxu0 %v3694
        %v3806 = vpop.f32.mrb[0].mxu0
        %v3807 = vadd.f32 %v3650, %v3806
        %v3808 = vpop.f32.mrb[0].mxu0
        %v3809 = vpop.f32.mrb[0].mxu0
        %v3810 = vadd.f32 %v3650, %v3809
        %v3811 = vpop.f32.mrb[0].mxu0
        %3812 = vmatprep.mubr.bf16.mxu0 0
        %3813 = vmatmul.mubr.bf16.gmra.mrb[0].mxu0 %v3696
        %v3814 = vpop.f32.mrb[0].mxu0
        %v3815 = vadd.f32 %v3650, %v3814
        %v3816 = vpop.f32.mrb[0].mxu0
        %v3817 = vpop.f32.mrb[0].mxu0
        %v3818 = vadd.f32 %v3650, %v3817
        %v3819 = vpop.f32.mrb[0].mxu0
        %3820 = vmatprep.mubr.bf16.mxu0 0
        %3821 = vmatmul.mubr.bf16.gmra.mrb[0].mxu0 %v3698
        %v3822 = vpop.f32.mrb[0].mxu0
        %v3823 = vadd.f32 %v3650, %v3822
        %v3824 = vpop.f32.mrb[0].mxu0
        %v3825 = vpop.f32.mrb[0].mxu0
        %v3826 = vadd.f32 %v3650, %v3825
        %v3827 = vpop.f32.mrb[0].mxu0
        %3828 = vmatprep.mubr.bf16.mxu0 0
        %3829 = vmatmul.mubr.bf16.gmra.mrb[0].mxu0 %v3700
        %v3830 = vpop.f32.mrb[0].mxu0
        %v3831 = vadd.f32 %v3650, %v3830
        %v3832 = vpop.f32.mrb[0].mxu0
        %v3833 = vpop.f32.mrb[0].mxu0
        %v3834 = vadd.f32 %v3650, %v3833
        %v3835 = vpop.f32.mrb[0].mxu0
        %3836 = vmatprep.mubr.bf16.mxu0 0
        %3837 = vmatmul.mubr.bf16.gmra.mrb[0].mxu0 %v3702
        %v3838 = vpop.f32.mrb[0].mxu0
        %v3839 = vadd.f32 %v3650, %v3838
        %v3840 = vpop.f32.mrb[0].mxu0
        %v3841 = vpop.f32.mrb[0].mxu0
        %v3842 = vadd.f32 %v3650, %v3841
        %v3843 = vpop.f32.mrb[0].mxu0
        %3844 = vmatprep.mubr.bf16.mxu0 0
        %3845 = vmatmul.mubr.bf16.gmra.mrb[0].mxu0 %v3704
        %v3846 = vpop.f32.mrb[0].mxu0
        %v3847 = vadd.f32 %v3650, %v3846
        %v3848 = vpop.f32.mrb[0].mxu0
        %v3849 = vpop.f32.mrb[0].mxu0
        %v3850 = vadd.f32 %v3650, %v3849
        %v3851 = vpop.f32.mrb[0].mxu0
        %3852 = vmatprep.mubr.bf16.mxu0 0
        %3853 = vmatmul.mubr.bf16.gmra.mrb[0].mxu0 %v3706
        %v3854 = vpop.f32.mrb[0].mxu0
        %v3855 = vadd.f32 %v3650, %v3854
        %v3856 = vpop.f32.mrb[0].mxu0
        %v3857 = vpop.f32.mrb[0].mxu0
        %v3858 = vadd.f32 %v3650, %v3857
        %v3859 = vpop.f32.mrb[0].mxu0
        %3860 = vmatprep.mubr.bf16.mxu0 0
        %3861 = vmatmul.mubr.bf16.gmra.mrb[0].mxu0 %v3708
        %v3862 = vpop.f32.mrb[0].mxu0
        %v3863 = vadd.f32 %v3650, %v3862
        %v3864 = vpop.f32.mrb[0].mxu0
        %v3865 = vpop.f32.mrb[0].mxu0
        %v3866 = vadd.f32 %v3650, %v3865
        %v3867 = vpop.f32.mrb[0].mxu0
        %3868 = vmatprep.mubr.bf16.mxu0 0
        %3869 = vmatmul.mubr.bf16.gmra.mrb[0].mxu0 %v3710
        %v3870 = vpop.f32.mrb[0].mxu0
        %v3871 = vadd.f32 %v3650, %v3870
        %v3872 = vpop.f32.mrb[0].mxu0
        %v3873 = vpop.f32.mrb[0].mxu0
        %v3874 = vadd.f32 %v3650, %v3873
        %v3875 = vpop.f32.mrb[0].mxu0
        %3876 = vdwg.mxu0
        %v3877 = vmax.f32 %v3751, 0.0
        %v3878 = vmax.f32 %v3754, 0.0
        %v3879 = vmax.f32 %v3759, 0.0
        %v3880 = vmax.f32 %v3762, 0.0
        %v3881 = vmax.f32 %v3767, 0.0
        %v3882 = vmax.f32 %v3770, 0.0
        %v3883 = vmax.f32 %v3775, 0.0
        %v3884 = vmax.f32 %v3778, 0.0
        %v3885 = vmax.f32 %v3783, 0.0
        %v3886 = vmax.f32 %v3786, 0.0
        %v3887 = vmax.f32 %v3791, 0.0
        %v3888 = vmax.f32 %v3794, 0.0
        %v3889 = vmax.f32 %v3799, 0.0
        %v3890 = vmax.f32 %v3802, 0.0
        %v3891 = vmax.f32 %v3807, 0.0
        %v3892 = vmax.f32 %v3810, 0.0
        %v3893 = vmax.f32 %v3815, 0.0
        %v3894 = vmax.f32 %v3818, 0.0
        %v3895 = vmax.f32 %v3823, 0.0
        %v3896 = vmax.f32 %v3826, 0.0
        %v3897 = vmax.f32 %v3831, 0.0
        %v3898 = vmax.f32 %v3834, 0.0
        %v3899 = vmax.f32 %v3839, 0.0
        %v3900 = vmax.f32 %v3842, 0.0
        %v3901 = vmax.f32 %v3847, 0.0
        %v3902 = vmax.f32 %v3850, 0.0
        %v3903 = vmax.f32 %v3855, 0.0
        %v3904 = vmax.f32 %v3858, 0.0
        %v3905 = vmax.f32 %v3863, 0.0
        %v3906 = vmax.f32 %v3866, 0.0
        %v3907 = vmax.f32 %v3871, 0.0
        %v3908 = vmax.f32 %v3874, 0.0
        %v3909 = vpack.c.bf16 %v3878, %v3877
        %v3910 = vpack.c.bf16 %v3880, %v3879
        %v3911 = vpack.c.bf16 %v3882, %v3881
        %v3912 = vpack.c.bf16 %v3884, %v3883
        %v3913 = vpack.c.bf16 %v3886, %v3885
        %v3914 = vpack.c.bf16 %v3888, %v3887
        %v3915 = vpack.c.bf16 %v3890, %v3889
        %v3916 = vpack.c.bf16 %v3892, %v3891
        %v3917 = vpack.c.bf16 %v3894, %v3893
        %v3918 = vpack.c.bf16 %v3896, %v3895
        %v3919 = vpack.c.bf16 %v3898, %v3897
        %v3920 = vpack.c.bf16 %v3900, %v3899
        %v3921 = vpack.c.bf16 %v3902, %v3901
        %v3922 = vpack.c.bf16 %v3904, %v3903
        %v3923 = vpack.c.bf16 %v3906, %v3905
        %v3924 = vpack.c.bf16 %v3908, %v3907
        %v3925 = vld [vmem:[%s5] sm:$0xf]
        %v3926 = vld [vmem:[%s6] sm:$0x1]
        %v3928 = vlaneseq
        %v3929 = vshrl.u32 %v3928, 7
        %v3930 = vsub.s32 0, %v3929
        %v3931 = vrot.slane %v3926, %v3930
        %v3934 = vsel %vm3356, %v3909, 0
        %v3937 = vsel %vm3356, %v3910, 0
        %v3940 = vsel %vm3356, %v3911, 0
        %v3943 = vsel %vm3356, %v3912, 0
        %v3946 = vsel %vm3356, %v3913, 0
        %v3949 = vsel %vm3356, %v3914, 0
        %v3952 = vsel %vm3356, %v3915, 0
        %v3955 = vsel %vm3356, %v3916, 0
        %v3958 = vsel %vm3356, %v3917, 0
        %v3961 = vsel %vm3356, %v3918, 0
        %v3964 = vsel %vm3356, %v3919, 0
        %v3967 = vsel %vm3356, %v3920, 0
        %v3970 = vsel %vm3356, %v3921, 0
        %v3973 = vsel %vm3356, %v3922, 0
        %v3976 = vsel %vm3356, %v3923, 0
        %v3979 = vsel %vm3356, %v3924, 0
        %v3982 = vsel %vm3712, %v3925, 0
        %3984 = vmatprep.subr.bf16.mxu0 0
        %3985 = vmatpush1.bf16.msra.mxu0 %v3982
        %3986 = vmatprep.subr.bf16.mxu0 0
        %3987 = vmatpush1.bf16.msra.mxu0 0
        %3988 = vmatprep.subr.bf16.mxu0 0
        %3989 = vmatpush1.bf16.msra.mxu0 0
        %3990 = vmatprep.subr.bf16.mxu0 0
        %3991 = vmatpush1.bf16.msra.mxu0 0
        %3992 = vmatprep.subr.bf16.mxu0 0
        %3993 = vmatpush1.bf16.msra.mxu0 0
        %3994 = vmatprep.subr.bf16.mxu0 0
        %3995 = vmatpush1.bf16.msra.mxu0 0
        %3996 = vmatprep.subr.bf16.mxu0 0
        %3997 = vmatpush1.bf16.msra.mxu0 0
        %3998 = vmatprep.subr.bf16.mxu0 0
        %3999 = vmatpush1.bf16.msra.mxu0 0
        %4000 = vmatprep.subr.bf16.mxu0 0
        %4001 = vmatpush1.bf16.msra.mxu0 0
        %4002 = vmatprep.subr.bf16.mxu0 0
        %4003 = vmatpush1.bf16.msra.mxu0 0
        %4004 = vmatprep.subr.bf16.mxu0 0
        %4005 = vmatpush1.bf16.msra.mxu0 0
        %4006 = vmatprep.subr.bf16.mxu0 0
        %4007 = vmatpush1.bf16.msra.mxu0 0
        %4008 = vmatprep.subr.bf16.mxu0 0
        %4009 = vmatpush1.bf16.msra.mxu0 0
        %4010 = vmatprep.subr.bf16.mxu0 0
        %4011 = vmatpush1.bf16.msra.mxu0 0
        %4012 = vmatprep.subr.bf16.mxu0 0
        %4013 = vmatpush1.bf16.msra.mxu0 0
        %4014 = vmatprep.subr.bf16.mxu0 0
        %4015 = vmatpush1.bf16.msra.mxu0 0
        %4016 = vmatprep.mubr.bf16.mxu0 0
        %4017 = vmatmul.mubr.bf16.gmra.mrb[0].mxu0 %v3934
        %v4018 = vpop.f32.mrb[0].mxu0
        %v4019 = vadd.f32 %v3931, %v4018
        %v4020 = vpop.f32.mrb[0].mxu0
        %v4021 = vpop.f32.mrb[0].mxu0
        %v4022 = vadd.f32 %v3931, %v4021
        %v4023 = vpop.f32.mrb[0].mxu0
        %4024 = vmatprep.mubr.bf16.mxu0 0
        %4025 = vmatmul.mubr.bf16.gmra.mrb[0].mxu0 %v3937
        %v4026 = vpop.f32.mrb[0].mxu0
        %v4027 = vadd.f32 %v3931, %v4026
        %v4028 = vpop.f32.mrb[0].mxu0
        %v4029 = vpop.f32.mrb[0].mxu0
        %v4030 = vadd.f32 %v3931, %v4029
        %v4031 = vpop.f32.mrb[0].mxu0
        %4032 = vmatprep.mubr.bf16.mxu0 0
        %4033 = vmatmul.mubr.bf16.gmra.mrb[0].mxu0 %v3940
        %v4034 = vpop.f32.mrb[0].mxu0
        %v4035 = vadd.f32 %v3931, %v4034
        %v4036 = vpop.f32.mrb[0].mxu0
        %v4037 = vpop.f32.mrb[0].mxu0
        %v4038 = vadd.f32 %v3931, %v4037
        %v4039 = vpop.f32.mrb[0].mxu0
        %4040 = vmatprep.mubr.bf16.mxu0 0
        %4041 = vmatmul.mubr.bf16.gmra.mrb[0].mxu0 %v3943
        %v4042 = vpop.f32.mrb[0].mxu0
        %v4043 = vadd.f32 %v3931, %v4042
        %v4044 = vpop.f32.mrb[0].mxu0
        %v4045 = vpop.f32.mrb[0].mxu0
        %v4046 = vadd.f32 %v3931, %v4045
        %v4047 = vpop.f32.mrb[0].mxu0
        %4048 = vmatprep.mubr.bf16.mxu0 0
        %4049 = vmatmul.mubr.bf16.gmra.mrb[0].mxu0 %v3946
        %v4050 = vpop.f32.mrb[0].mxu0
        %v4051 = vadd.f32 %v3931, %v4050
        %v4052 = vpop.f32.mrb[0].mxu0
        %v4053 = vpop.f32.mrb[0].mxu0
        %v4054 = vadd.f32 %v3931, %v4053
        %v4055 = vpop.f32.mrb[0].mxu0
        %4056 = vmatprep.mubr.bf16.mxu0 0
        %4057 = vmatmul.mubr.bf16.gmra.mrb[0].mxu0 %v3949
        %v4058 = vpop.f32.mrb[0].mxu0
        %v4059 = vadd.f32 %v3931, %v4058
        %v4060 = vpop.f32.mrb[0].mxu0
        %v4061 = vpop.f32.mrb[0].mxu0
        %v4062 = vadd.f32 %v3931, %v4061
        %v4063 = vpop.f32.mrb[0].mxu0
        %4064 = vmatprep.mubr.bf16.mxu0 0
        %4065 = vmatmul.mubr.bf16.gmra.mrb[0].mxu0 %v3952
        %v4066 = vpop.f32.mrb[0].mxu0
        %v4067 = vadd.f32 %v3931, %v4066
        %v4068 = vpop.f32.mrb[0].mxu0
        %v4069 = vpop.f32.mrb[0].mxu0
        %v4070 = vadd.f32 %v3931, %v4069
        %v4071 = vpop.f32.mrb[0].mxu0
        %4072 = vmatprep.mubr.bf16.mxu0 0
        %4073 = vmatmul.mubr.bf16.gmra.mrb[0].mxu0 %v3955
        %v4074 = vpop.f32.mrb[0].mxu0
        %v4075 = vadd.f32 %v3931, %v4074
        %v4076 = vpop.f32.mrb[0].mxu0
        %v4077 = vpop.f32.mrb[0].mxu0
        %v4078 = vadd.f32 %v3931, %v4077
        %v4079 = vpop.f32.mrb[0].mxu0
        %4080 = vmatprep.mubr.bf16.mxu0 0
        %4081 = vmatmul.mubr.bf16.gmra.mrb[0].mxu0 %v3958
        %v4082 = vpop.f32.mrb[0].mxu0
        %v4083 = vadd.f32 %v3931, %v4082
        %v4084 = vpop.f32.mrb[0].mxu0
        %v4085 = vpop.f32.mrb[0].mxu0
        %v4086 = vadd.f32 %v3931, %v4085
        %v4087 = vpop.f32.mrb[0].mxu0
        %4088 = vmatprep.mubr.bf16.mxu0 0
        %4089 = vmatmul.mubr.bf16.gmra.mrb[0].mxu0 %v3961
        %v4090 = vpop.f32.mrb[0].mxu0
        %v4091 = vadd.f32 %v3931, %v4090
        %v4092 = vpop.f32.mrb[0].mxu0
        %v4093 = vpop.f32.mrb[0].mxu0
        %v4094 = vadd.f32 %v3931, %v4093
        %v4095 = vpop.f32.mrb[0].mxu0
        %4096 = vmatprep.mubr.bf16.mxu0 0
        %4097 = vmatmul.mubr.bf16.gmra.mrb[0].mxu0 %v3964
        %v4098 = vpop.f32.mrb[0].mxu0
        %v4099 = vadd.f32 %v3931, %v4098
        %v4100 = vpop.f32.mrb[0].mxu0
        %v4101 = vpop.f32.mrb[0].mxu0
        %v4102 = vadd.f32 %v3931, %v4101
        %v4103 = vpop.f32.mrb[0].mxu0
        %4104 = vmatprep.mubr.bf16.mxu0 0
        %4105 = vmatmul.mubr.bf16.gmra.mrb[0].mxu0 %v3967
        %v4106 = vpop.f32.mrb[0].mxu0
        %v4107 = vadd.f32 %v3931, %v4106
        %v4108 = vpop.f32.mrb[0].mxu0
        %v4109 = vpop.f32.mrb[0].mxu0
        %v4110 = vadd.f32 %v3931, %v4109
        %v4111 = vpop.f32.mrb[0].mxu0
        %4112 = vmatprep.mubr.bf16.mxu0 0
        %4113 = vmatmul.mubr.bf16.gmra.mrb[0].mxu0 %v3970
        %v4114 = vpop.f32.mrb[0].mxu0
        %v4115 = vadd.f32 %v3931, %v4114
        %v4116 = vpop.f32.mrb[0].mxu0
        %v4117 = vpop.f32.mrb[0].mxu0
        %v4118 = vadd.f32 %v3931, %v4117
        %v4119 = vpop.f32.mrb[0].mxu0
        %4120 = vmatprep.mubr.bf16.mxu0 0
        %4121 = vmatmul.mubr.bf16.gmra.mrb[0].mxu0 %v3973
        %v4122 = vpop.f32.mrb[0].mxu0
        %v4123 = vadd.f32 %v3931, %v4122
        %v4124 = vpop.f32.mrb[0].mxu0
        %v4125 = vpop.f32.mrb[0].mxu0
        %v4126 = vadd.f32 %v3931, %v4125
        %v4127 = vpop.f32.mrb[0].mxu0
        %4128 = vmatprep.mubr.bf16.mxu0 0
        %4129 = vmatmul.mubr.bf16.gmra.mrb[0].mxu0 %v3976
        %v4130 = vpop.f32.mrb[0].mxu0
        %v4131 = vadd.f32 %v3931, %v4130
        %v4132 = vpop.f32.mrb[0].mxu0
        %v4133 = vpop.f32.mrb[0].mxu0
        %v4134 = vadd.f32 %v3931, %v4133
        %v4135 = vpop.f32.mrb[0].mxu0
        %4136 = vmatprep.mubr.bf16.mxu0 0
        %4137 = vmatmul.mubr.bf16.gmra.mrb[0].mxu0 %v3979
        %v4138 = vpop.f32.mrb[0].mxu0
        %v4139 = vadd.f32 %v3931, %v4138
        %v4140 = vpop.f32.mrb[0].mxu0
        %v4141 = vpop.f32.mrb[0].mxu0
        %v4142 = vadd.f32 %v3931, %v4141
        %v4143 = vpop.f32.mrb[0].mxu0
        %4144 = vdwg.mxu0
        %v4145 = vadd.f32 %v4019, %v300
        %v4146 = vadd.f32 %v4022, %v301
        %v4147 = vadd.f32 %v4027, %v302
        %v4148 = vadd.f32 %v4030, %v303
        %v4149 = vadd.f32 %v4035, %v304
        %v4150 = vadd.f32 %v4038, %v305
        %v4151 = vadd.f32 %v4043, %v306
        %v4152 = vadd.f32 %v4046, %v307
        %v4153 = vadd.f32 %v4051, %v308
        %v4154 = vadd.f32 %v4054, %v309
        %v4155 = vadd.f32 %v4059, %v310
        %v4156 = vadd.f32 %v4062, %v311
        %v4157 = vadd.f32 %v4067, %v312
        %v4158 = vadd.f32 %v4070, %v313
        %v4159 = vadd.f32 %v4075, %v314
        %v4160 = vadd.f32 %v4078, %v315
        %v4161 = vadd.f32 %v4083, %v316
        %v4162 = vadd.f32 %v4086, %v317
        %v4163 = vadd.f32 %v4091, %v318
        %v4164 = vadd.f32 %v4094, %v319
        %v4165 = vadd.f32 %v4099, %v320
        %v4166 = vadd.f32 %v4102, %v321
        %v4167 = vadd.f32 %v4107, %v322
        %v4168 = vadd.f32 %v4110, %v323
        %v4169 = vadd.f32 %v4115, %v324
        %v4170 = vadd.f32 %v4118, %v325
        %v4171 = vadd.f32 %v4123, %v326
        %v4172 = vadd.f32 %v4126, %v327
        %v4173 = vadd.f32 %v4131, %v328
        %v4174 = vadd.f32 %v4134, %v329
        %v4175 = vadd.f32 %v4139, %v330
        %v4176 = vadd.f32 %v4142, %v331
        %v4177 = vmax.f32 %v4145, 0.0
        %v4178 = vmax.f32 %v4146, 0.0
        %v4179 = vmax.f32 %v4147, 0.0
        %v4180 = vmax.f32 %v4148, 0.0
        %v4181 = vmax.f32 %v4149, 0.0
        %v4182 = vmax.f32 %v4150, 0.0
        %v4183 = vmax.f32 %v4151, 0.0
        %v4184 = vmax.f32 %v4152, 0.0
        %v4185 = vmax.f32 %v4153, 0.0
        %v4186 = vmax.f32 %v4154, 0.0
        %v4187 = vmax.f32 %v4155, 0.0
        %v4188 = vmax.f32 %v4156, 0.0
        %v4189 = vmax.f32 %v4157, 0.0
        %v4190 = vmax.f32 %v4158, 0.0
        %v4191 = vmax.f32 %v4159, 0.0
        %v4192 = vmax.f32 %v4160, 0.0
        %v4193 = vmax.f32 %v4161, 0.0
        %v4194 = vmax.f32 %v4162, 0.0
        %v4195 = vmax.f32 %v4163, 0.0
        %v4196 = vmax.f32 %v4164, 0.0
        %v4197 = vmax.f32 %v4165, 0.0
        %v4198 = vmax.f32 %v4166, 0.0
        %v4199 = vmax.f32 %v4167, 0.0
        %v4200 = vmax.f32 %v4168, 0.0
        %v4201 = vmax.f32 %v4169, 0.0
        %v4202 = vmax.f32 %v4170, 0.0
        %v4203 = vmax.f32 %v4171, 0.0
        %v4204 = vmax.f32 %v4172, 0.0
        %v4205 = vmax.f32 %v4173, 0.0
        %v4206 = vmax.f32 %v4174, 0.0
        %v4207 = vmax.f32 %v4175, 0.0
        %v4208 = vmax.f32 %v4176, 0.0
        %4209 = vst [vmem:[%s296] sm:$0xff] %v4177
        %4210 = vst [vmem:[%s296 + $0x8] sm:$0xff] %v4178
        %4211 = vst [vmem:[%s296 + $0x10] sm:$0xff] %v4179
        %4212 = vst [vmem:[%s296 + $0x18] sm:$0xff] %v4180
        %4213 = vst [vmem:[%s296 + $0x20] sm:$0xff] %v4181
        %4214 = vst [vmem:[%s296 + $0x28] sm:$0xff] %v4182
        %4215 = vst [vmem:[%s296 + $0x30] sm:$0xff] %v4183
        %4216 = vst [vmem:[%s296 + $0x38] sm:$0xff] %v4184
        %4217 = vst [vmem:[%s296 + $0x40] sm:$0xff] %v4185
        %4218 = vst [vmem:[%s296 + $0x48] sm:$0xff] %v4186
        %4219 = vst [vmem:[%s296 + $0x50] sm:$0xff] %v4187
        %4220 = vst [vmem:[%s296 + $0x58] sm:$0xff] %v4188
        %4221 = vst [vmem:[%s296 + $0x60] sm:$0xff] %v4189
        %4222 = vst [vmem:[%s296 + $0x68] sm:$0xff] %v4190
        %4223 = vst [vmem:[%s296 + $0x70] sm:$0xff] %v4191
        %4224 = vst [vmem:[%s296 + $0x78] sm:$0xff] %v4192
        %4225 = vst [vmem:[%s296 + $0x80] sm:$0xff] %v4193
        %4226 = vst [vmem:[%s296 + $0x88] sm:$0xff] %v4194
        %4227 = vst [vmem:[%s296 + $0x90] sm:$0xff] %v4195
        %4228 = vst [vmem:[%s296 + $0x98] sm:$0xff] %v4196
        %4229 = vst [vmem:[%s296 + $0xa0] sm:$0xff] %v4197
        %4230 = vst [vmem:[%s296 + $0xa8] sm:$0xff] %v4198
        %4231 = vst [vmem:[%s296 + $0xb0] sm:$0xff] %v4199
        %4232 = vst [vmem:[%s296 + $0xb8] sm:$0xff] %v4200
        %4233 = vst [vmem:[%s296 + $0xc0] sm:$0xff] %v4201
        %4234 = vst [vmem:[%s296 + $0xc8] sm:$0xff] %v4202
        %4235 = vst [vmem:[%s296 + $0xd0] sm:$0xff] %v4203
        %4236 = vst [vmem:[%s296 + $0xd8] sm:$0xff] %v4204
        %4237 = vst [vmem:[%s296 + $0xe0] sm:$0xff] %v4205
        %4238 = vst [vmem:[%s296 + $0xe8] sm:$0xff] %v4206
        %4239 = vst [vmem:[%s296 + $0xf0] sm:$0xff] %v4207
        %4240 = vst [vmem:[%s296 + $0xf8] sm:$0xff] %v4208
        %s4241 = sand.u32 %s184, 1
        %s4242 = scalar_lea.sflag [#allocation5], %s4241
        %s4243 = sand.u32 %s184, 1
        %s4244 = smul.addr %s4243, 256
        %s4245 = scalar_lea.vmem [#allocation6], %s4244
        // Predicated region
        $region53: #{tpu_custom_call.1} parent=47 // pred_check
          %p4246 = pneg %p194
        $region54: #{tpu_custom_call.1} parent=47 // pred_check_branch
          %4248 = sbr.rel (%p4246) target = $region56
        $region55: #{tpu_custom_call.1} parent=47 // pred_region
          %s4249 = smul.u32 32, %s24
          %s4251 = ssub.s32 4096, 4096
          %4252 = vsyncadd %s4242, %s4251
          %s4253 = smul.addr %s4249, 128
          %s4254 = scalar_lea.hbm %s7, %s4253
          %s4255 = sshll.u32 %s4245, 4
          %s4256 = int_to_ptr.vmem [resolvable:$true] %s4255
          %4261 = dma.vmem_to_hbm [thread:$0]  %s4256, 4096, %s4254, %s4242, 128, 128, 8
        $region56: #{tpu_custom_call.1} parent=47 // pred_fallthru
          _
      $region48: #{tpu_custom_call.1} parent=5 // pred_fallthru
        _
      %p4262 = scmp.le.s32.totalorder 2, %s19
      // Predicated region
      $region57: #{tpu_custom_call.1} parent=5 // pred_check
        %p4263 = pneg %p4262
      $region58: #{tpu_custom_call.1} parent=5 // pred_check_branch
        %4265 = sbr.rel (%p4263) target = $region60
      $region59: #{tpu_custom_call.1} parent=5 // pred_region
        %s4266 = ssub.s32 %s19, 2
        // Predicated region
        $region61: #{tpu_custom_call.1} parent=59 // pred_check
          %p4267 = pneg %p200
        $region62: #{tpu_custom_call.1} parent=59 // pred_check_branch
          %4269 = sbr.rel (%p4267) target = $region64
        $region63: #{tpu_custom_call.1} parent=59 // pred_region
          %s4270 = sand.u32 %s185, 1
          %s4271 = scalar_lea.sflag [#allocation5], %s4270
          %s4272 = sand.u32 %s185, 1
          %s4273 = smul.addr %s4272, 256
          %s4274 = scalar_lea.vmem [#allocation6], %s4273
          %4275 = dma.done %s4271, 4096
        $region64: #{tpu_custom_call.1} parent=59 // pred_fallthru
          _
      $region60: #{tpu_custom_call.1} parent=5 // pred_fallthru
        _
    $region6: #{tpu_custom_call.1} parent=1 // loop_footer
      %s23 = sadd.s32 1, %s19
    $region7: #{tpu_custom_call.1} parent=1 // loop_footer_branch
      %18 = sbr.rel target = $region3
    $region8: #{tpu_custom_call.1} parent=1 // loop_exit
      _
    %4276 = vsyncpa [#allocation4], 1
    %s4277 = scalar_lea.sflag [#allocation4], 1
    %4278 = vsyncpa %s4277, 1
    %4279 = vsyncpa [#allocation5], 1
    %s4280 = scalar_lea.sflag [#allocation5], 1
    %4281 = vsyncpa %s4280, 1

</llo_original>
